<compile_context>
chip_gen: v7x
topology: tpu7x:2x2x1
jax: 0.10.0
libtpu: 0.0.40
codegen_flags: <defaults>
</compile_context>

<pallas_src>
import functools
import math

import jax
import jax.numpy as jnp
from jax.experimental import pallas as pl
from jax.experimental.pallas import tpu as pltpu

ALPHABET_SIZE = 22
EMBED_DIM = 256
N_BLOCKS = 8
N_HEADS = 8
HEAD_DIM = EMBED_DIM // N_HEADS          # 32
FF_DIM = 128
PENULT_DIM = 512
OUTPUT_UNITS = 174
OUTPUT_PAD = 256                         # lane-dense padded output width
META_DIM = 6 + 2 + 3 + 1                 # 12
LN_EPS = 1e-5


def _ln(x, g, b):
    """Row-wise LayerNorm over last dim (f32 math)."""
    mu = jnp.mean(x, axis=-1, keepdims=True)
    var = jnp.mean(jnp.square(x - mu), axis=-1, keepdims=True)
    return (x - mu) * jax.lax.rsqrt(var + LN_EPS) * g + b


def _full_spec(shape):
    return pl.BlockSpec(tuple(shape), lambda i: (0,) * len(shape))


# ------------------------ the single fused model kernel ---------------------

def _model_kernel(B, S,
                  x_ref, meta_ref, peb_ref, mw_ref, mb_ref, ew_ref,
                  wqkv_ref, bqkv_ref, wo_ref, bo_ref,
                  g1_ref, b1_ref, w1_ref, fb1_ref, w2_ref, fb2_ref,
                  g2_ref, b2_ref,
                  pw_ref, pb_ref, pg_ref, pbt_ref, fw_ref, fob_ref,
                  o_ref):
    D = EMBED_DIM
    Dh = HEAD_DIM
    M = B * S
    scale = 1.0 / math.sqrt(Dh)

    # ---- prologue: metadata FiLM encoder + peptide embedding + pos enc ----
    md = jnp.dot(meta_ref[...], mw_ref[...],
                 preferred_element_type=jnp.float32) + mb_ref[...]       # (B, 2D)
    gamma = md[:, :D][:, None, :]                                        # (B,1,D)
    beta = md[:, D:][:, None, :]
    h = jnp.dot(x_ref[...].reshape(M, ALPHABET_SIZE), ew_ref[...],
                preferred_element_type=jnp.float32)                      # (M, D)
    h = h.reshape(B, S, D) + peb_ref[...][None, :, :]                    # + (PE + emb_b)
    h = (h * gamma + beta).reshape(M, D)

    # ---- 8 transformer blocks; stacked weights are resident in VMEM -------
    def block(bi, x):
        xb = x.astype(jnp.bfloat16)
        # fused Q/K/V projection: one lane-dense (M, 3D) MXU pass
        qkv = jnp.dot(xb, wqkv_ref[bi],
                      preferred_element_type=jnp.float32) + bqkv_ref[bi]  # (M, 3D)

        heads = []
        for hd in range(N_HEADS):
            q = qkv[:, hd * Dh:(hd + 1) * Dh].reshape(B, S, Dh).astype(jnp.bfloat16)
            k = qkv[:, D + hd * Dh:D + (hd + 1) * Dh].reshape(B, S, Dh).astype(jnp.bfloat16)
            v = qkv[:, 2 * D + hd * Dh:2 * D + (hd + 1) * Dh].reshape(B, S, Dh).astype(jnp.bfloat16)
            s = jnp.einsum("bqd,bkd->bqk", q, k,
                           preferred_element_type=jnp.float32) * scale   # (B,S,S) f32
            s = s - jnp.max(s, axis=-1, keepdims=True)
            e = jnp.exp(s)
            p = e / jnp.sum(e, axis=-1, keepdims=True)                   # exact softmax
            ah = jnp.einsum("bqk,bkd->bqd", p.astype(jnp.bfloat16), v,
                            preferred_element_type=jnp.float32)          # (B,S,Dh)
            heads.append(ah.reshape(M, Dh))
        a = jnp.concatenate(heads, axis=-1)                              # (M, D), registers only

        proj = jnp.dot(a.astype(jnp.bfloat16), wo_ref[bi],
                       preferred_element_type=jnp.float32) + bo_ref[bi]
        h1 = _ln(x + proj, g1_ref[bi], b1_ref[bi])                       # post-LN

        # fused FFN: 128-wide intermediate never leaves registers/VMEM
        f = jnp.dot(h1.astype(jnp.bfloat16), w1_ref[bi],
                    preferred_element_type=jnp.float32) + fb1_ref[bi]
        f = jnp.maximum(f, 0.0)
        f2 = jnp.dot(f.astype(jnp.bfloat16), w2_ref[bi],
                     preferred_element_type=jnp.float32) + fb2_ref[bi]
        return _ln(h1 + f2, g2_ref[bi], b2_ref[bi])

    h = jax.lax.fori_loop(0, N_BLOCKS, block, h)

    # ---- epilogue: penult + LN + ReLU + final + sigmoid + mean over seq ---
    h2 = jnp.dot(h.astype(jnp.bfloat16), pw_ref[...],
                 preferred_element_type=jnp.float32) + pb_ref[...]       # (M, 512)
    h2 = jnp.maximum(_ln(h2, pg_ref[...], pbt_ref[...]), 0.0)
    logits = jnp.dot(h2.astype(jnp.bfloat16), fw_ref[...],
                     preferred_element_type=jnp.float32) + fob_ref[...]  # (M, 256)
    probs = jax.nn.sigmoid(logits)
    o_ref[...] = jnp.mean(probs.reshape(B, S, OUTPUT_PAD), axis=1)       # one lane-dense store


# ------------------------------- model glue --------------------------------

def positional_encoding(seq_len, d):
    pos = jnp.arange(seq_len, dtype=jnp.float32)[:, None]
    i = jnp.arange(0, d, 2, dtype=jnp.float32)[None, :]
    angle = pos * jnp.exp(-(jnp.log(10000.0) / d) * i)
    pe = jnp.zeros((seq_len, d), jnp.float32)
    pe = pe.at[:, 0::2].set(jnp.sin(angle))
    pe = pe.at[:, 1::2].set(jnp.cos(angle))
    return pe


def forward(params, x, metadata):
    B, S, _ = x.shape
    # fold the embedding bias into the additive positional-encoding table
    pe_bias = positional_encoding(S, EMBED_DIM) + params["emb_b"]        # (S, D)
    blk = params["blk"]
    inputs = (
        x, metadata, pe_bias,
        params["meta_w"], params["meta_b"], params["emb_w"],
        blk["wqkv"], blk["bqkv"], blk["wo"], blk["bo"],
        blk["ln1_g"], blk["ln1_b"], blk["ff1_w"], blk["ff1_b"],
        blk["ff2_w"], blk["ff2_b"], blk["ln2_g"], blk["ln2_b"],
        params["pen_w"], params["pen_b"], params["pen_ln_g"], params["pen_ln_b"],
        params["fin_w"], params["fin_b"],
    )
    out = pl.pallas_call(
        functools.partial(_model_kernel, B, S),
        out_shape=jax.ShapeDtypeStruct((B, OUTPUT_PAD), jnp.float32),
        grid=(1,),
        in_specs=[_full_spec(a.shape) for a in inputs],
        out_specs=_full_spec((B, OUTPUT_PAD)),
        compiler_params=pltpu.CompilerParams(
            dimension_semantics=("arbitrary",),
            vmem_limit_bytes=32 * 1024 * 1024),
    )(*inputs)
    return out[:, None, :OUTPUT_UNITS]                                   # (B, 1, 174)


def init_params(key):
    keys = jax.random.split(key, 128)
    idx = [0]

    def nxt():
        k = keys[idx[0]]
        idx[0] += 1
        return k

    def lin(din, dout):
        w = jax.random.normal(nxt(), (din, dout), jnp.float32) / math.sqrt(din)
        b = jax.random.normal(nxt(), (dout,), jnp.float32) * 0.01
        return w, b

    params = {}
    mw, mb = lin(META_DIM, 2 * EMBED_DIM)
    params["meta_w"], params["meta_b"] = mw, mb.reshape(1, -1)
    ew, eb = lin(ALPHABET_SIZE, EMBED_DIM)
    params["emb_w"], params["emb_b"] = ew, eb.reshape(1, -1)

    wqkv, bqkv, wo, bo = [], [], [], []
    g1, b1, w1, fb1, w2, fb2, g2, b2 = ([] for _ in range(8))
    for _ in range(N_BLOCKS):
        wq, bq = lin(EMBED_DIM, EMBED_DIM)
        wk, bk = lin(EMBED_DIM, EMBED_DIM)
        wv, bv = lin(EMBED_DIM, EMBED_DIM)
        woi, boi = lin(EMBED_DIM, EMBED_DIM)
        f1w, f1b = lin(EMBED_DIM, FF_DIM)
        f2w, f2b = lin(FF_DIM, EMBED_DIM)
        wqkv.append(jnp.concatenate([wq, wk, wv], axis=1))
        bqkv.append(jnp.concatenate([bq, bk, bv]).reshape(1, -1))
        wo.append(woi)
        bo.append(boi.reshape(1, -1))
        g1.append(jnp.ones((1, EMBED_DIM), jnp.float32))
        b1.append(jnp.zeros((1, EMBED_DIM), jnp.float32))
        w1.append(f1w)
        fb1.append(f1b.reshape(1, -1))
        w2.append(f2w)
        fb2.append(f2b.reshape(1, -1))
        g2.append(jnp.ones((1, EMBED_DIM), jnp.float32))
        b2.append(jnp.zeros((1, EMBED_DIM), jnp.float32))

    params["blk"] = {
        "wqkv": jnp.stack(wqkv).astype(jnp.bfloat16),   # (8, 256, 768)
        "bqkv": jnp.stack(bqkv),                        # (8, 1, 768)
        "wo": jnp.stack(wo).astype(jnp.bfloat16),       # (8, 256, 256)
        "bo": jnp.stack(bo),                            # (8, 1, 256)
        "ln1_g": jnp.stack(g1), "ln1_b": jnp.stack(b1),
        "ff1_w": jnp.stack(w1).astype(jnp.bfloat16),    # (8, 256, 128)
        "ff1_b": jnp.stack(fb1),
        "ff2_w": jnp.stack(w2).astype(jnp.bfloat16),    # (8, 128, 256)
        "ff2_b": jnp.stack(fb2),
        "ln2_g": jnp.stack(g2), "ln2_b": jnp.stack(b2),
    }

    pw, pb = lin(EMBED_DIM, PENULT_DIM)
    params["pen_w"], params["pen_b"] = pw.astype(jnp.bfloat16), pb.reshape(1, -1)
    params["pen_ln_g"] = jnp.ones((1, PENULT_DIM), jnp.float32)
    params["pen_ln_b"] = jnp.zeros((1, PENULT_DIM), jnp.float32)

    fw, fb = lin(PENULT_DIM, OUTPUT_UNITS)
    fw_pad = jnp.zeros((PENULT_DIM, OUTPUT_PAD), jnp.float32).at[:, :OUTPUT_UNITS].set(fw)
    fb_pad = jnp.zeros((1, OUTPUT_PAD), jnp.float32).at[0, :OUTPUT_UNITS].set(fb)
    params["fin_w"] = fw_pad.astype(jnp.bfloat16)       # padded to lane-dense 256
    params["fin_b"] = fb_pad
    return params


if __name__ == "__main__":
    key = jax.random.PRNGKey(0)
    kp, kx, km = jax.random.split(key, 3)

    params = init_params(kp)

    B, S = 2, 8
    tokens = jax.random.randint(kx, (B, S), 0, ALPHABET_SIZE)
    x = jax.nn.one_hot(tokens, ALPHABET_SIZE, dtype=jnp.float32)   # (B, S, 22)
    metadata = jax.random.normal(km, (B, META_DIM), jnp.float32)   # (B, 12)

    out = jax.jit(forward)(params, x, metadata)
    out = jax.block_until_ready(out)
    assert out.shape == (B, 1, OUTPUT_UNITS), out.shape
    assert bool(jnp.all(jnp.isfinite(out)))
    print("KERNEL_OK")
</pallas_src>

<mosaic_0001>
module attributes {stable_mosaic.version = 11 : i64} {
  func.func @_model_kernel(%arg0: i32, %arg1: memref<2x8x22xf32, #tpu.memory_space<vmem>>, %arg2: memref<2x12xf32, #tpu.memory_space<vmem>>, %arg3: memref<8x256xf32, #tpu.memory_space<vmem>>, %arg4: memref<12x512xf32, #tpu.memory_space<vmem>>, %arg5: memref<1x512xf32, #tpu.memory_space<vmem>>, %arg6: memref<22x256xf32, #tpu.memory_space<vmem>>, %arg7: memref<8x256x768xbf16, #tpu.memory_space<vmem>>, %arg8: memref<8x1x768xf32, #tpu.memory_space<vmem>>, %arg9: memref<8x256x256xbf16, #tpu.memory_space<vmem>>, %arg10: memref<8x1x256xf32, #tpu.memory_space<vmem>>, %arg11: memref<8x1x256xf32, #tpu.memory_space<vmem>>, %arg12: memref<8x1x256xf32, #tpu.memory_space<vmem>>, %arg13: memref<8x256x128xbf16, #tpu.memory_space<vmem>>, %arg14: memref<8x1x128xf32, #tpu.memory_space<vmem>>, %arg15: memref<8x128x256xbf16, #tpu.memory_space<vmem>>, %arg16: memref<8x1x256xf32, #tpu.memory_space<vmem>>, %arg17: memref<8x1x256xf32, #tpu.memory_space<vmem>>, %arg18: memref<8x1x256xf32, #tpu.memory_space<vmem>>, %arg19: memref<256x512xbf16, #tpu.memory_space<vmem>>, %arg20: memref<1x512xf32, #tpu.memory_space<vmem>>, %arg21: memref<1x512xf32, #tpu.memory_space<vmem>>, %arg22: memref<1x512xf32, #tpu.memory_space<vmem>>, %arg23: memref<512x256xbf16, #tpu.memory_space<vmem>>, %arg24: memref<1x256xf32, #tpu.memory_space<vmem>>, %arg25: memref<2x256xf32, #tpu.memory_space<vmem>>) attributes {dimension_semantics = [#tpu.dimension_semantics<arbitrary>], iteration_bounds = array<i64: 1>, scalar_prefetch = 0 : i64, scratch_operands = 0 : i64, tpu.core_type = #tpu.core_type<tc>, window_params = [{pipeline_mode = #tpu.pipeline_mode<synchronous>, transform_indices = @transform_0, window_bounds = array<i64: 2, 8, 22>}, {pipeline_mode = #tpu.pipeline_mode<synchronous>, transform_indices = @transform_1, window_bounds = array<i64: 2, 12>}, {pipeline_mode = #tpu.pipeline_mode<synchronous>, transform_indices = @transform_2, window_bounds = array<i64: 8, 256>}, {pipeline_mode = #tpu.pipeline_mode<synchronous>, transform_indices = @transform_3, window_bounds = array<i64: 12, 512>}, {pipeline_mode = #tpu.pipeline_mode<synchronous>, transform_indices = @transform_4, window_bounds = array<i64: 1, 512>}, {pipeline_mode = #tpu.pipeline_mode<synchronous>, transform_indices = @transform_5, window_bounds = array<i64: 22, 256>}, {pipeline_mode = #tpu.pipeline_mode<synchronous>, transform_indices = @transform_6, window_bounds = array<i64: 8, 256, 768>}, {pipeline_mode = #tpu.pipeline_mode<synchronous>, transform_indices = @transform_7, window_bounds = array<i64: 8, 1, 768>}, {pipeline_mode = #tpu.pipeline_mode<synchronous>, transform_indices = @transform_8, window_bounds = array<i64: 8, 256, 256>}, {pipeline_mode = #tpu.pipeline_mode<synchronous>, transform_indices = @transform_9, window_bounds = array<i64: 8, 1, 256>}, {pipeline_mode = #tpu.pipeline_mode<synchronous>, transform_indices = @transform_10, window_bounds = array<i64: 8, 1, 256>}, {pipeline_mode = #tpu.pipeline_mode<synchronous>, transform_indices = @transform_11, window_bounds = array<i64: 8, 1, 256>}, {pipeline_mode = #tpu.pipeline_mode<synchronous>, transform_indices = @transform_12, window_bounds = array<i64: 8, 256, 128>}, {pipeline_mode = #tpu.pipeline_mode<synchronous>, transform_indices = @transform_13, window_bounds = array<i64: 8, 1, 128>}, {pipeline_mode = #tpu.pipeline_mode<synchronous>, transform_indices = @transform_14, window_bounds = array<i64: 8, 128, 256>}, {pipeline_mode = #tpu.pipeline_mode<synchronous>, transform_indices = @transform_15, window_bounds = array<i64: 8, 1, 256>}, {pipeline_mode = #tpu.pipeline_mode<synchronous>, transform_indices = @transform_16, window_bounds = array<i64: 8, 1, 256>}, {pipeline_mode = #tpu.pipeline_mode<synchronous>, transform_indices = @transform_17, window_bounds = array<i64: 8, 1, 256>}, {pipeline_mode = #tpu.pipeline_mode<synchronous>, transform_indices = @transform_18, window_bounds = array<i64: 256, 512>}, {pipeline_mode = #tpu.pipeline_mode<synchronous>, transform_indices = @transform_19, window_bounds = array<i64: 1, 512>}, {pipeline_mode = #tpu.pipeline_mode<synchronous>, transform_indices = @transform_20, window_bounds = array<i64: 1, 512>}, {pipeline_mode = #tpu.pipeline_mode<synchronous>, transform_indices = @transform_21, window_bounds = array<i64: 1, 512>}, {pipeline_mode = #tpu.pipeline_mode<synchronous>, transform_indices = @transform_22, window_bounds = array<i64: 512, 256>}, {pipeline_mode = #tpu.pipeline_mode<synchronous>, transform_indices = @transform_23, window_bounds = array<i64: 1, 256>}, {pipeline_mode = #tpu.pipeline_mode<synchronous>, transform_indices = @transform_24, window_bounds = array<i64: 2, 256>}]} {
    %c0 = arith.constant 0 : index
    %c0_0 = arith.constant 0 : index
    %0 = vector.load %arg2[%c0, %c0_0] : memref<2x12xf32, #tpu.memory_space<vmem>>, vector<2x12xf32>
    %c0_1 = arith.constant 0 : index
    %c0_2 = arith.constant 0 : index
    %1 = vector.load %arg4[%c0_1, %c0_2] : memref<12x512xf32, #tpu.memory_space<vmem>>, vector<12x512xf32>
    %cst = arith.constant dense<0.000000e+00> : vector<2x512xf32>
    %2 = tpu.matmul %0, %1, %cst {dimension_numbers = #tpu.dot_dimension_numbers<[1], [0], [0], [1], [0, 0, 1, 1], [], []>} : vector<2x12xf32>, vector<12x512xf32>, vector<2x512xf32> -> vector<2x512xf32>
    %c0_3 = arith.constant 0 : index
    %c0_4 = arith.constant 0 : index
    %3 = vector.load %arg5[%c0_3, %c0_4] : memref<1x512xf32, #tpu.memory_space<vmem>>, vector<1x512xf32>
    %4 = vector.broadcast %3 : vector<1x512xf32> to vector<2x512xf32>
    %5 = arith.addf %2, %4 : vector<2x512xf32>
    %6 = vector.extract_strided_slice %5 {offsets = [0, 0], sizes = [2, 256], strides = [1, 1]} : vector<2x512xf32> to vector<2x256xf32>
    %7 = vector.shape_cast %6 : vector<2x256xf32> to vector<2x1x256xf32>
    %8 = vector.extract_strided_slice %5 {offsets = [0, 256], sizes = [2, 256], strides = [1, 1]} : vector<2x512xf32> to vector<2x256xf32>
    %9 = vector.shape_cast %8 : vector<2x256xf32> to vector<2x1x256xf32>
    %c0_5 = arith.constant 0 : index
    %c0_6 = arith.constant 0 : index
    %c0_7 = arith.constant 0 : index
    %10 = vector.load %arg1[%c0_5, %c0_6, %c0_7] : memref<2x8x22xf32, #tpu.memory_space<vmem>>, vector<2x8x22xf32>
    %11 = vector.shape_cast %10 : vector<2x8x22xf32> to vector<16x22xf32>
    %c0_8 = arith.constant 0 : index
    %c0_9 = arith.constant 0 : index
    %12 = vector.load %arg6[%c0_8, %c0_9] : memref<22x256xf32, #tpu.memory_space<vmem>>, vector<22x256xf32>
    %cst_10 = arith.constant dense<0.000000e+00> : vector<16x256xf32>
    %13 = tpu.matmul %11, %12, %cst_10 {dimension_numbers = #tpu.dot_dimension_numbers<[1], [0], [0], [1], [0, 0, 1, 1], [], []>} : vector<16x22xf32>, vector<22x256xf32>, vector<16x256xf32> -> vector<16x256xf32>
    %14 = vector.shape_cast %13 : vector<16x256xf32> to vector<2x8x256xf32>
    %c0_11 = arith.constant 0 : index
    %c0_12 = arith.constant 0 : index
    %15 = vector.load %arg3[%c0_11, %c0_12] : memref<8x256xf32, #tpu.memory_space<vmem>>, vector<8x256xf32>
    %16 = vector.shape_cast %15 : vector<8x256xf32> to vector<1x8x256xf32>
    %17 = vector.broadcast %16 : vector<1x8x256xf32> to vector<2x8x256xf32>
    %18 = arith.addf %14, %17 : vector<2x8x256xf32>
    %19 = vector.broadcast %7 : vector<2x1x256xf32> to vector<2x8x256xf32>
    %20 = arith.mulf %18, %19 : vector<2x8x256xf32>
    %21 = vector.broadcast %9 : vector<2x1x256xf32> to vector<2x8x256xf32>
    %22 = arith.addf %20, %21 : vector<2x8x256xf32>
    %23 = vector.shape_cast %22 : vector<2x8x256xf32> to vector<16x256xf32>
    %c0_i32 = arith.constant 0 : i32
    %c8_i32 = arith.constant 8 : i32
    %24 = arith.addi %c0_i32, %c8_i32 : i32
    %c1_i32 = arith.constant 1 : i32
    %25 = scf.for %arg26 = %c0_i32 to %24 step %c1_i32 iter_args(%arg27 = %23) -> (vector<16x256xf32>)  : i32 {
      %74 = arith.truncf %arg27 : vector<16x256xf32> to vector<16x256xbf16>
      %75 = arith.index_cast %arg26 : i32 to index
      %c0_39 = arith.constant 0 : index
      %c0_40 = arith.constant 0 : index
      %76 = vector.load %arg7[%75, %c0_39, %c0_40] : memref<8x256x768xbf16, #tpu.memory_space<vmem>>, vector<1x256x768xbf16>
      %77 = vector.shape_cast %76 : vector<1x256x768xbf16> to vector<256x768xbf16>
      %cst_41 = arith.constant dense<0.000000e+00> : vector<16x768xf32>
      %78 = tpu.matmul %74, %77, %cst_41 {dimension_numbers = #tpu.dot_dimension_numbers<[1], [0], [0], [1], [0, 0, 1, 1], [], []>} : vector<16x256xbf16>, vector<256x768xbf16>, vector<16x768xf32> -> vector<16x768xf32>
      %79 = arith.index_cast %arg26 : i32 to index
      %c0_42 = arith.constant 0 : index
      %c0_43 = arith.constant 0 : index
      %80 = vector.load %arg8[%79, %c0_42, %c0_43] : memref<8x1x768xf32, #tpu.memory_space<vmem>>, vector<1x1x768xf32>
      %81 = vector.shape_cast %80 : vector<1x1x768xf32> to vector<1x768xf32>
      %82 = vector.broadcast %81 : vector<1x768xf32> to vector<16x768xf32>
      %83 = arith.addf %78, %82 : vector<16x768xf32>
      %84 = vector.extract_strided_slice %83 {offsets = [0, 0], sizes = [16, 32], strides = [1, 1]} : vector<16x768xf32> to vector<16x32xf32>
      %85 = vector.shape_cast %84 : vector<16x32xf32> to vector<2x8x32xf32>
      %86 = arith.truncf %85 : vector<2x8x32xf32> to vector<2x8x32xbf16>
      %87 = vector.extract_strided_slice %83 {offsets = [0, 256], sizes = [16, 32], strides = [1, 1]} : vector<16x768xf32> to vector<16x32xf32>
      %88 = vector.shape_cast %87 : vector<16x32xf32> to vector<2x8x32xf32>
      %89 = arith.truncf %88 : vector<2x8x32xf32> to vector<2x8x32xbf16>
      %90 = vector.extract_strided_slice %83 {offsets = [0, 512], sizes = [16, 32], strides = [1, 1]} : vector<16x768xf32> to vector<16x32xf32>
      %91 = vector.shape_cast %90 : vector<16x32xf32> to vector<2x8x32xf32>
      %92 = arith.truncf %91 : vector<2x8x32xf32> to vector<2x8x32xbf16>
      "tpu.trace_start"() <{level = 10 : i32, message = "bqd,bkd->bqk"}> : () -> ()
      %cst_44 = arith.constant dense<0.000000e+00> : vector<2x8x8xf32>
      %93 = tpu.matmul %86, %89, %cst_44 {dimension_numbers = #tpu.dot_dimension_numbers<[2], [2], [1], [1], [0, 0, 0, 1, 1, 1], [0], [0]>} : vector<2x8x32xbf16>, vector<2x8x32xbf16>, vector<2x8x8xf32> -> vector<2x8x8xf32>
      "tpu.trace_stop"() : () -> ()
      %cst_45 = arith.constant 0.176776692 : f32
      %94 = vector.broadcast %cst_45 : f32 to vector<2x8x8xf32>
      %95 = arith.mulf %93, %94 : vector<2x8x8xf32>
      %cst_46 = arith.constant dense<0xFF800000> : vector<2x8xf32>
      %96 = vector.multi_reduction <maximumf>, %95, %cst_46 [2] : vector<2x8x8xf32> to vector<2x8xf32>
      %97 = vector.shape_cast %96 : vector<2x8xf32> to vector<2x8x1xf32>
      %98 = vector.broadcast %97 : vector<2x8x1xf32> to vector<2x8x8xf32>
      %99 = arith.subf %95, %98 : vector<2x8x8xf32>
      %100 = math.exp %99 : vector<2x8x8xf32>
      %cst_47 = arith.constant dense<0.000000e+00> : vector<2x8xf32>
      %101 = vector.multi_reduction <add>, %100, %cst_47 [2] : vector<2x8x8xf32> to vector<2x8xf32>
      %102 = vector.shape_cast %101 : vector<2x8xf32> to vector<2x8x1xf32>
      %103 = vector.broadcast %102 : vector<2x8x1xf32> to vector<2x8x8xf32>
      %104 = arith.divf %100, %103 : vector<2x8x8xf32>
      %105 = arith.truncf %104 : vector<2x8x8xf32> to vector<2x8x8xbf16>
      "tpu.trace_start"() <{level = 10 : i32, message = "bqk,bkd->bqd"}> : () -> ()
      %cst_48 = arith.constant dense<0.000000e+00> : vector<2x8x32xf32>
      %106 = tpu.matmul %105, %92, %cst_48 {dimension_numbers = #tpu.dot_dimension_numbers<[2], [1], [1], [2], [0, 0, 0, 1, 1, 2], [0], [0]>} : vector<2x8x8xbf16>, vector<2x8x32xbf16>, vector<2x8x32xf32> -> vector<2x8x32xf32>
      "tpu.trace_stop"() : () -> ()
      %107 = vector.shape_cast %106 : vector<2x8x32xf32> to vector<16x32xf32>
      %108 = vector.extract_strided_slice %83 {offsets = [0, 32], sizes = [16, 32], strides = [1, 1]} : vector<16x768xf32> to vector<16x32xf32>
      %109 = vector.shape_cast %108 : vector<16x32xf32> to vector<2x8x32xf32>
      %110 = arith.truncf %109 : vector<2x8x32xf32> to vector<2x8x32xbf16>
      %111 = vector.extract_strided_slice %83 {offsets = [0, 288], sizes = [16, 32], strides = [1, 1]} : vector<16x768xf32> to vector<16x32xf32>
      %112 = vector.shape_cast %111 : vector<16x32xf32> to vector<2x8x32xf32>
      %113 = arith.truncf %112 : vector<2x8x32xf32> to vector<2x8x32xbf16>
      %114 = vector.extract_strided_slice %83 {offsets = [0, 544], sizes = [16, 32], strides = [1, 1]} : vector<16x768xf32> to vector<16x32xf32>
      %115 = vector.shape_cast %114 : vector<16x32xf32> to vector<2x8x32xf32>
      %116 = arith.truncf %115 : vector<2x8x32xf32> to vector<2x8x32xbf16>
      "tpu.trace_start"() <{level = 10 : i32, message = "bqd,bkd->bqk"}> : () -> ()
      %cst_49 = arith.constant dense<0.000000e+00> : vector<2x8x8xf32>
      %117 = tpu.matmul %110, %113, %cst_49 {dimension_numbers = #tpu.dot_dimension_numbers<[2], [2], [1], [1], [0, 0, 0, 1, 1, 1], [0], [0]>} : vector<2x8x32xbf16>, vector<2x8x32xbf16>, vector<2x8x8xf32> -> vector<2x8x8xf32>
      "tpu.trace_stop"() : () -> ()
      %cst_50 = arith.constant 0.176776692 : f32
      %118 = vector.broadcast %cst_50 : f32 to vector<2x8x8xf32>
      %119 = arith.mulf %117, %118 : vector<2x8x8xf32>
      %cst_51 = arith.constant dense<0xFF800000> : vector<2x8xf32>
      %120 = vector.multi_reduction <maximumf>, %119, %cst_51 [2] : vector<2x8x8xf32> to vector<2x8xf32>
      %121 = vector.shape_cast %120 : vector<2x8xf32> to vector<2x8x1xf32>
      %122 = vector.broadcast %121 : vector<2x8x1xf32> to vector<2x8x8xf32>
      %123 = arith.subf %119, %122 : vector<2x8x8xf32>
      %124 = math.exp %123 : vector<2x8x8xf32>
      %cst_52 = arith.constant dense<0.000000e+00> : vector<2x8xf32>
      %125 = vector.multi_reduction <add>, %124, %cst_52 [2] : vector<2x8x8xf32> to vector<2x8xf32>
      %126 = vector.shape_cast %125 : vector<2x8xf32> to vector<2x8x1xf32>
      %127 = vector.broadcast %126 : vector<2x8x1xf32> to vector<2x8x8xf32>
      %128 = arith.divf %124, %127 : vector<2x8x8xf32>
      %129 = arith.truncf %128 : vector<2x8x8xf32> to vector<2x8x8xbf16>
      "tpu.trace_start"() <{level = 10 : i32, message = "bqk,bkd->bqd"}> : () -> ()
      %cst_53 = arith.constant dense<0.000000e+00> : vector<2x8x32xf32>
      %130 = tpu.matmul %129, %116, %cst_53 {dimension_numbers = #tpu.dot_dimension_numbers<[2], [1], [1], [2], [0, 0, 0, 1, 1, 2], [0], [0]>} : vector<2x8x8xbf16>, vector<2x8x32xbf16>, vector<2x8x32xf32> -> vector<2x8x32xf32>
      "tpu.trace_stop"() : () -> ()
      %131 = vector.shape_cast %130 : vector<2x8x32xf32> to vector<16x32xf32>
      %132 = vector.extract_strided_slice %83 {offsets = [0, 64], sizes = [16, 32], strides = [1, 1]} : vector<16x768xf32> to vector<16x32xf32>
      %133 = vector.shape_cast %132 : vector<16x32xf32> to vector<2x8x32xf32>
      %134 = arith.truncf %133 : vector<2x8x32xf32> to vector<2x8x32xbf16>
      %135 = vector.extract_strided_slice %83 {offsets = [0, 320], sizes = [16, 32], strides = [1, 1]} : vector<16x768xf32> to vector<16x32xf32>
      %136 = vector.shape_cast %135 : vector<16x32xf32> to vector<2x8x32xf32>
      %137 = arith.truncf %136 : vector<2x8x32xf32> to vector<2x8x32xbf16>
      %138 = vector.extract_strided_slice %83 {offsets = [0, 576], sizes = [16, 32], strides = [1, 1]} : vector<16x768xf32> to vector<16x32xf32>
      %139 = vector.shape_cast %138 : vector<16x32xf32> to vector<2x8x32xf32>
      %140 = arith.truncf %139 : vector<2x8x32xf32> to vector<2x8x32xbf16>
      "tpu.trace_start"() <{level = 10 : i32, message = "bqd,bkd->bqk"}> : () -> ()
      %cst_54 = arith.constant dense<0.000000e+00> : vector<2x8x8xf32>
      %141 = tpu.matmul %134, %137, %cst_54 {dimension_numbers = #tpu.dot_dimension_numbers<[2], [2], [1], [1], [0, 0, 0, 1, 1, 1], [0], [0]>} : vector<2x8x32xbf16>, vector<2x8x32xbf16>, vector<2x8x8xf32> -> vector<2x8x8xf32>
      "tpu.trace_stop"() : () -> ()
      %cst_55 = arith.constant 0.176776692 : f32
      %142 = vector.broadcast %cst_55 : f32 to vector<2x8x8xf32>
      %143 = arith.mulf %141, %142 : vector<2x8x8xf32>
      %cst_56 = arith.constant dense<0xFF800000> : vector<2x8xf32>
      %144 = vector.multi_reduction <maximumf>, %143, %cst_56 [2] : vector<2x8x8xf32> to vector<2x8xf32>
      %145 = vector.shape_cast %144 : vector<2x8xf32> to vector<2x8x1xf32>
      %146 = vector.broadcast %145 : vector<2x8x1xf32> to vector<2x8x8xf32>
      %147 = arith.subf %143, %146 : vector<2x8x8xf32>
      %148 = math.exp %147 : vector<2x8x8xf32>
      %cst_57 = arith.constant dense<0.000000e+00> : vector<2x8xf32>
      %149 = vector.multi_reduction <add>, %148, %cst_57 [2] : vector<2x8x8xf32> to vector<2x8xf32>
      %150 = vector.shape_cast %149 : vector<2x8xf32> to vector<2x8x1xf32>
      %151 = vector.broadcast %150 : vector<2x8x1xf32> to vector<2x8x8xf32>
      %152 = arith.divf %148, %151 : vector<2x8x8xf32>
      %153 = arith.truncf %152 : vector<2x8x8xf32> to vector<2x8x8xbf16>
      "tpu.trace_start"() <{level = 10 : i32, message = "bqk,bkd->bqd"}> : () -> ()
      %cst_58 = arith.constant dense<0.000000e+00> : vector<2x8x32xf32>
      %154 = tpu.matmul %153, %140, %cst_58 {dimension_numbers = #tpu.dot_dimension_numbers<[2], [1], [1], [2], [0, 0, 0, 1, 1, 2], [0], [0]>} : vector<2x8x8xbf16>, vector<2x8x32xbf16>, vector<2x8x32xf32> -> vector<2x8x32xf32>
      "tpu.trace_stop"() : () -> ()
      %155 = vector.shape_cast %154 : vector<2x8x32xf32> to vector<16x32xf32>
      %156 = vector.extract_strided_slice %83 {offsets = [0, 96], sizes = [16, 32], strides = [1, 1]} : vector<16x768xf32> to vector<16x32xf32>
      %157 = vector.shape_cast %156 : vector<16x32xf32> to vector<2x8x32xf32>
      %158 = arith.truncf %157 : vector<2x8x32xf32> to vector<2x8x32xbf16>
      %159 = vector.extract_strided_slice %83 {offsets = [0, 352], sizes = [16, 32], strides = [1, 1]} : vector<16x768xf32> to vector<16x32xf32>
      %160 = vector.shape_cast %159 : vector<16x32xf32> to vector<2x8x32xf32>
      %161 = arith.truncf %160 : vector<2x8x32xf32> to vector<2x8x32xbf16>
      %162 = vector.extract_strided_slice %83 {offsets = [0, 608], sizes = [16, 32], strides = [1, 1]} : vector<16x768xf32> to vector<16x32xf32>
      %163 = vector.shape_cast %162 : vector<16x32xf32> to vector<2x8x32xf32>
      %164 = arith.truncf %163 : vector<2x8x32xf32> to vector<2x8x32xbf16>
      "tpu.trace_start"() <{level = 10 : i32, message = "bqd,bkd->bqk"}> : () -> ()
      %cst_59 = arith.constant dense<0.000000e+00> : vector<2x8x8xf32>
      %165 = tpu.matmul %158, %161, %cst_59 {dimension_numbers = #tpu.dot_dimension_numbers<[2], [2], [1], [1], [0, 0, 0, 1, 1, 1], [0], [0]>} : vector<2x8x32xbf16>, vector<2x8x32xbf16>, vector<2x8x8xf32> -> vector<2x8x8xf32>
      "tpu.trace_stop"() : () -> ()
      %cst_60 = arith.constant 0.176776692 : f32
      %166 = vector.broadcast %cst_60 : f32 to vector<2x8x8xf32>
      %167 = arith.mulf %165, %166 : vector<2x8x8xf32>
      %cst_61 = arith.constant dense<0xFF800000> : vector<2x8xf32>
      %168 = vector.multi_reduction <maximumf>, %167, %cst_61 [2] : vector<2x8x8xf32> to vector<2x8xf32>
      %169 = vector.shape_cast %168 : vector<2x8xf32> to vector<2x8x1xf32>
      %170 = vector.broadcast %169 : vector<2x8x1xf32> to vector<2x8x8xf32>
      %171 = arith.subf %167, %170 : vector<2x8x8xf32>
      %172 = math.exp %171 : vector<2x8x8xf32>
      %cst_62 = arith.constant dense<0.000000e+00> : vector<2x8xf32>
      %173 = vector.multi_reduction <add>, %172, %cst_62 [2] : vector<2x8x8xf32> to vector<2x8xf32>
      %174 = vector.shape_cast %173 : vector<2x8xf32> to vector<2x8x1xf32>
      %175 = vector.broadcast %174 : vector<2x8x1xf32> to vector<2x8x8xf32>
      %176 = arith.divf %172, %175 : vector<2x8x8xf32>
      %177 = arith.truncf %176 : vector<2x8x8xf32> to vector<2x8x8xbf16>
      "tpu.trace_start"() <{level = 10 : i32, message = "bqk,bkd->bqd"}> : () -> ()
      %cst_63 = arith.constant dense<0.000000e+00> : vector<2x8x32xf32>
      %178 = tpu.matmul %177, %164, %cst_63 {dimension_numbers = #tpu.dot_dimension_numbers<[2], [1], [1], [2], [0, 0, 0, 1, 1, 2], [0], [0]>} : vector<2x8x8xbf16>, vector<2x8x32xbf16>, vector<2x8x32xf32> -> vector<2x8x32xf32>
      "tpu.trace_stop"() : () -> ()
      %179 = vector.shape_cast %178 : vector<2x8x32xf32> to vector<16x32xf32>
      %180 = vector.extract_strided_slice %83 {offsets = [0, 128], sizes = [16, 32], strides = [1, 1]} : vector<16x768xf32> to vector<16x32xf32>
      %181 = vector.shape_cast %180 : vector<16x32xf32> to vector<2x8x32xf32>
      %182 = arith.truncf %181 : vector<2x8x32xf32> to vector<2x8x32xbf16>
      %183 = vector.extract_strided_slice %83 {offsets = [0, 384], sizes = [16, 32], strides = [1, 1]} : vector<16x768xf32> to vector<16x32xf32>
      %184 = vector.shape_cast %183 : vector<16x32xf32> to vector<2x8x32xf32>
      %185 = arith.truncf %184 : vector<2x8x32xf32> to vector<2x8x32xbf16>
      %186 = vector.extract_strided_slice %83 {offsets = [0, 640], sizes = [16, 32], strides = [1, 1]} : vector<16x768xf32> to vector<16x32xf32>
      %187 = vector.shape_cast %186 : vector<16x32xf32> to vector<2x8x32xf32>
      %188 = arith.truncf %187 : vector<2x8x32xf32> to vector<2x8x32xbf16>
      "tpu.trace_start"() <{level = 10 : i32, message = "bqd,bkd->bqk"}> : () -> ()
      %cst_64 = arith.constant dense<0.000000e+00> : vector<2x8x8xf32>
      %189 = tpu.matmul %182, %185, %cst_64 {dimension_numbers = #tpu.dot_dimension_numbers<[2], [2], [1], [1], [0, 0, 0, 1, 1, 1], [0], [0]>} : vector<2x8x32xbf16>, vector<2x8x32xbf16>, vector<2x8x8xf32> -> vector<2x8x8xf32>
      "tpu.trace_stop"() : () -> ()
      %cst_65 = arith.constant 0.176776692 : f32
      %190 = vector.broadcast %cst_65 : f32 to vector<2x8x8xf32>
      %191 = arith.mulf %189, %190 : vector<2x8x8xf32>
      %cst_66 = arith.constant dense<0xFF800000> : vector<2x8xf32>
      %192 = vector.multi_reduction <maximumf>, %191, %cst_66 [2] : vector<2x8x8xf32> to vector<2x8xf32>
      %193 = vector.shape_cast %192 : vector<2x8xf32> to vector<2x8x1xf32>
      %194 = vector.broadcast %193 : vector<2x8x1xf32> to vector<2x8x8xf32>
      %195 = arith.subf %191, %194 : vector<2x8x8xf32>
      %196 = math.exp %195 : vector<2x8x8xf32>
      %cst_67 = arith.constant dense<0.000000e+00> : vector<2x8xf32>
      %197 = vector.multi_reduction <add>, %196, %cst_67 [2] : vector<2x8x8xf32> to vector<2x8xf32>
      %198 = vector.shape_cast %197 : vector<2x8xf32> to vector<2x8x1xf32>
      %199 = vector.broadcast %198 : vector<2x8x1xf32> to vector<2x8x8xf32>
      %200 = arith.divf %196, %199 : vector<2x8x8xf32>
      %201 = arith.truncf %200 : vector<2x8x8xf32> to vector<2x8x8xbf16>
      "tpu.trace_start"() <{level = 10 : i32, message = "bqk,bkd->bqd"}> : () -> ()
      %cst_68 = arith.constant dense<0.000000e+00> : vector<2x8x32xf32>
      %202 = tpu.matmul %201, %188, %cst_68 {dimension_numbers = #tpu.dot_dimension_numbers<[2], [1], [1], [2], [0, 0, 0, 1, 1, 2], [0], [0]>} : vector<2x8x8xbf16>, vector<2x8x32xbf16>, vector<2x8x32xf32> -> vector<2x8x32xf32>
      "tpu.trace_stop"() : () -> ()
      %203 = vector.shape_cast %202 : vector<2x8x32xf32> to vector<16x32xf32>
      %204 = vector.extract_strided_slice %83 {offsets = [0, 160], sizes = [16, 32], strides = [1, 1]} : vector<16x768xf32> to vector<16x32xf32>
      %205 = vector.shape_cast %204 : vector<16x32xf32> to vector<2x8x32xf32>
      %206 = arith.truncf %205 : vector<2x8x32xf32> to vector<2x8x32xbf16>
      %207 = vector.extract_strided_slice %83 {offsets = [0, 416], sizes = [16, 32], strides = [1, 1]} : vector<16x768xf32> to vector<16x32xf32>
      %208 = vector.shape_cast %207 : vector<16x32xf32> to vector<2x8x32xf32>
      %209 = arith.truncf %208 : vector<2x8x32xf32> to vector<2x8x32xbf16>
      %210 = vector.extract_strided_slice %83 {offsets = [0, 672], sizes = [16, 32], strides = [1, 1]} : vector<16x768xf32> to vector<16x32xf32>
      %211 = vector.shape_cast %210 : vector<16x32xf32> to vector<2x8x32xf32>
      %212 = arith.truncf %211 : vector<2x8x32xf32> to vector<2x8x32xbf16>
      "tpu.trace_start"() <{level = 10 : i32, message = "bqd,bkd->bqk"}> : () -> ()
      %cst_69 = arith.constant dense<0.000000e+00> : vector<2x8x8xf32>
      %213 = tpu.matmul %206, %209, %cst_69 {dimension_numbers = #tpu.dot_dimension_numbers<[2], [2], [1], [1], [0, 0, 0, 1, 1, 1], [0], [0]>} : vector<2x8x32xbf16>, vector<2x8x32xbf16>, vector<2x8x8xf32> -> vector<2x8x8xf32>
      "tpu.trace_stop"() : () -> ()
      %cst_70 = arith.constant 0.176776692 : f32
      %214 = vector.broadcast %cst_70 : f32 to vector<2x8x8xf32>
      %215 = arith.mulf %213, %214 : vector<2x8x8xf32>
      %cst_71 = arith.constant dense<0xFF800000> : vector<2x8xf32>
      %216 = vector.multi_reduction <maximumf>, %215, %cst_71 [2] : vector<2x8x8xf32> to vector<2x8xf32>
      %217 = vector.shape_cast %216 : vector<2x8xf32> to vector<2x8x1xf32>
      %218 = vector.broadcast %217 : vector<2x8x1xf32> to vector<2x8x8xf32>
      %219 = arith.subf %215, %218 : vector<2x8x8xf32>
      %220 = math.exp %219 : vector<2x8x8xf32>
      %cst_72 = arith.constant dense<0.000000e+00> : vector<2x8xf32>
      %221 = vector.multi_reduction <add>, %220, %cst_72 [2] : vector<2x8x8xf32> to vector<2x8xf32>
      %222 = vector.shape_cast %221 : vector<2x8xf32> to vector<2x8x1xf32>
      %223 = vector.broadcast %222 : vector<2x8x1xf32> to vector<2x8x8xf32>
      %224 = arith.divf %220, %223 : vector<2x8x8xf32>
      %225 = arith.truncf %224 : vector<2x8x8xf32> to vector<2x8x8xbf16>
      "tpu.trace_start"() <{level = 10 : i32, message = "bqk,bkd->bqd"}> : () -> ()
      %cst_73 = arith.constant dense<0.000000e+00> : vector<2x8x32xf32>
      %226 = tpu.matmul %225, %212, %cst_73 {dimension_numbers = #tpu.dot_dimension_numbers<[2], [1], [1], [2], [0, 0, 0, 1, 1, 2], [0], [0]>} : vector<2x8x8xbf16>, vector<2x8x32xbf16>, vector<2x8x32xf32> -> vector<2x8x32xf32>
      "tpu.trace_stop"() : () -> ()
      %227 = vector.shape_cast %226 : vector<2x8x32xf32> to vector<16x32xf32>
      %228 = vector.extract_strided_slice %83 {offsets = [0, 192], sizes = [16, 32], strides = [1, 1]} : vector<16x768xf32> to vector<16x32xf32>
      %229 = vector.shape_cast %228 : vector<16x32xf32> to vector<2x8x32xf32>
      %230 = arith.truncf %229 : vector<2x8x32xf32> to vector<2x8x32xbf16>
      %231 = vector.extract_strided_slice %83 {offsets = [0, 448], sizes = [16, 32], strides = [1, 1]} : vector<16x768xf32> to vector<16x32xf32>
      %232 = vector.shape_cast %231 : vector<16x32xf32> to vector<2x8x32xf32>
      %233 = arith.truncf %232 : vector<2x8x32xf32> to vector<2x8x32xbf16>
      %234 = vector.extract_strided_slice %83 {offsets = [0, 704], sizes = [16, 32], strides = [1, 1]} : vector<16x768xf32> to vector<16x32xf32>
      %235 = vector.shape_cast %234 : vector<16x32xf32> to vector<2x8x32xf32>
      %236 = arith.truncf %235 : vector<2x8x32xf32> to vector<2x8x32xbf16>
      "tpu.trace_start"() <{level = 10 : i32, message = "bqd,bkd->bqk"}> : () -> ()
      %cst_74 = arith.constant dense<0.000000e+00> : vector<2x8x8xf32>
      %237 = tpu.matmul %230, %233, %cst_74 {dimension_numbers = #tpu.dot_dimension_numbers<[2], [2], [1], [1], [0, 0, 0, 1, 1, 1], [0], [0]>} : vector<2x8x32xbf16>, vector<2x8x32xbf16>, vector<2x8x8xf32> -> vector<2x8x8xf32>
      "tpu.trace_stop"() : () -> ()
      %cst_75 = arith.constant 0.176776692 : f32
      %238 = vector.broadcast %cst_75 : f32 to vector<2x8x8xf32>
      %239 = arith.mulf %237, %238 : vector<2x8x8xf32>
      %cst_76 = arith.constant dense<0xFF800000> : vector<2x8xf32>
      %240 = vector.multi_reduction <maximumf>, %239, %cst_76 [2] : vector<2x8x8xf32> to vector<2x8xf32>
      %241 = vector.shape_cast %240 : vector<2x8xf32> to vector<2x8x1xf32>
      %242 = vector.broadcast %241 : vector<2x8x1xf32> to vector<2x8x8xf32>
      %243 = arith.subf %239, %242 : vector<2x8x8xf32>
      %244 = math.exp %243 : vector<2x8x8xf32>
      %cst_77 = arith.constant dense<0.000000e+00> : vector<2x8xf32>
      %245 = vector.multi_reduction <add>, %244, %cst_77 [2] : vector<2x8x8xf32> to vector<2x8xf32>
      %246 = vector.shape_cast %245 : vector<2x8xf32> to vector<2x8x1xf32>
      %247 = vector.broadcast %246 : vector<2x8x1xf32> to vector<2x8x8xf32>
      %248 = arith.divf %244, %247 : vector<2x8x8xf32>
      %249 = arith.truncf %248 : vector<2x8x8xf32> to vector<2x8x8xbf16>
      "tpu.trace_start"() <{level = 10 : i32, message = "bqk,bkd->bqd"}> : () -> ()
      %cst_78 = arith.constant dense<0.000000e+00> : vector<2x8x32xf32>
      %250 = tpu.matmul %249, %236, %cst_78 {dimension_numbers = #tpu.dot_dimension_numbers<[2], [1], [1], [2], [0, 0, 0, 1, 1, 2], [0], [0]>} : vector<2x8x8xbf16>, vector<2x8x32xbf16>, vector<2x8x32xf32> -> vector<2x8x32xf32>
      "tpu.trace_stop"() : () -> ()
      %251 = vector.shape_cast %250 : vector<2x8x32xf32> to vector<16x32xf32>
      %252 = vector.extract_strided_slice %83 {offsets = [0, 224], sizes = [16, 32], strides = [1, 1]} : vector<16x768xf32> to vector<16x32xf32>
      %253 = vector.shape_cast %252 : vector<16x32xf32> to vector<2x8x32xf32>
      %254 = arith.truncf %253 : vector<2x8x32xf32> to vector<2x8x32xbf16>
      %255 = vector.extract_strided_slice %83 {offsets = [0, 480], sizes = [16, 32], strides = [1, 1]} : vector<16x768xf32> to vector<16x32xf32>
      %256 = vector.shape_cast %255 : vector<16x32xf32> to vector<2x8x32xf32>
      %257 = arith.truncf %256 : vector<2x8x32xf32> to vector<2x8x32xbf16>
      %258 = vector.extract_strided_slice %83 {offsets = [0, 736], sizes = [16, 32], strides = [1, 1]} : vector<16x768xf32> to vector<16x32xf32>
      %259 = vector.shape_cast %258 : vector<16x32xf32> to vector<2x8x32xf32>
      %260 = arith.truncf %259 : vector<2x8x32xf32> to vector<2x8x32xbf16>
      "tpu.trace_start"() <{level = 10 : i32, message = "bqd,bkd->bqk"}> : () -> ()
      %cst_79 = arith.constant dense<0.000000e+00> : vector<2x8x8xf32>
      %261 = tpu.matmul %254, %257, %cst_79 {dimension_numbers = #tpu.dot_dimension_numbers<[2], [2], [1], [1], [0, 0, 0, 1, 1, 1], [0], [0]>} : vector<2x8x32xbf16>, vector<2x8x32xbf16>, vector<2x8x8xf32> -> vector<2x8x8xf32>
      "tpu.trace_stop"() : () -> ()
      %cst_80 = arith.constant 0.176776692 : f32
      %262 = vector.broadcast %cst_80 : f32 to vector<2x8x8xf32>
      %263 = arith.mulf %261, %262 : vector<2x8x8xf32>
      %cst_81 = arith.constant dense<0xFF800000> : vector<2x8xf32>
      %264 = vector.multi_reduction <maximumf>, %263, %cst_81 [2] : vector<2x8x8xf32> to vector<2x8xf32>
      %265 = vector.shape_cast %264 : vector<2x8xf32> to vector<2x8x1xf32>
      %266 = vector.broadcast %265 : vector<2x8x1xf32> to vector<2x8x8xf32>
      %267 = arith.subf %263, %266 : vector<2x8x8xf32>
      %268 = math.exp %267 : vector<2x8x8xf32>
      %cst_82 = arith.constant dense<0.000000e+00> : vector<2x8xf32>
      %269 = vector.multi_reduction <add>, %268, %cst_82 [2] : vector<2x8x8xf32> to vector<2x8xf32>
      %270 = vector.shape_cast %269 : vector<2x8xf32> to vector<2x8x1xf32>
      %271 = vector.broadcast %270 : vector<2x8x1xf32> to vector<2x8x8xf32>
      %272 = arith.divf %268, %271 : vector<2x8x8xf32>
      %273 = arith.truncf %272 : vector<2x8x8xf32> to vector<2x8x8xbf16>
      "tpu.trace_start"() <{level = 10 : i32, message = "bqk,bkd->bqd"}> : () -> ()
      %cst_83 = arith.constant dense<0.000000e+00> : vector<2x8x32xf32>
      %274 = tpu.matmul %273, %260, %cst_83 {dimension_numbers = #tpu.dot_dimension_numbers<[2], [1], [1], [2], [0, 0, 0, 1, 1, 2], [0], [0]>} : vector<2x8x8xbf16>, vector<2x8x32xbf16>, vector<2x8x32xf32> -> vector<2x8x32xf32>
      "tpu.trace_stop"() : () -> ()
      %275 = vector.shape_cast %274 : vector<2x8x32xf32> to vector<16x32xf32>
      %276 = tpu.concatenate %107, %131, %155, %179, %203, %227, %251, %275 in 1 : vector<16x32xf32>, vector<16x32xf32>, vector<16x32xf32>, vector<16x32xf32>, vector<16x32xf32>, vector<16x32xf32>, vector<16x32xf32>, vector<16x32xf32> -> vector<16x256xf32>
      %277 = arith.truncf %276 : vector<16x256xf32> to vector<16x256xbf16>
      %278 = arith.index_cast %arg26 : i32 to index
      %c0_84 = arith.constant 0 : index
      %c0_85 = arith.constant 0 : index
      %279 = vector.load %arg9[%278, %c0_84, %c0_85] : memref<8x256x256xbf16, #tpu.memory_space<vmem>>, vector<1x256x256xbf16>
      %280 = vector.shape_cast %279 : vector<1x256x256xbf16> to vector<256x256xbf16>
      %cst_86 = arith.constant dense<0.000000e+00> : vector<16x256xf32>
      %281 = tpu.matmul %277, %280, %cst_86 {dimension_numbers = #tpu.dot_dimension_numbers<[1], [0], [0], [1], [0, 0, 1, 1], [], []>} : vector<16x256xbf16>, vector<256x256xbf16>, vector<16x256xf32> -> vector<16x256xf32>
      %282 = arith.index_cast %arg26 : i32 to index
      %c0_87 = arith.constant 0 : index
      %c0_88 = arith.constant 0 : index
      %283 = vector.load %arg10[%282, %c0_87, %c0_88] : memref<8x1x256xf32, #tpu.memory_space<vmem>>, vector<1x1x256xf32>
      %284 = vector.shape_cast %283 : vector<1x1x256xf32> to vector<1x256xf32>
      %285 = vector.broadcast %284 : vector<1x256xf32> to vector<16x256xf32>
      %286 = arith.addf %281, %285 : vector<16x256xf32>
      %287 = arith.addf %arg27, %286 : vector<16x256xf32>
      %288 = arith.index_cast %arg26 : i32 to index
      %c0_89 = arith.constant 0 : index
      %c0_90 = arith.constant 0 : index
      %289 = vector.load %arg11[%288, %c0_89, %c0_90] : memref<8x1x256xf32, #tpu.memory_space<vmem>>, vector<1x1x256xf32>
      %290 = vector.shape_cast %289 : vector<1x1x256xf32> to vector<1x256xf32>
      %291 = arith.index_cast %arg26 : i32 to index
      %c0_91 = arith.constant 0 : index
      %c0_92 = arith.constant 0 : index
      %292 = vector.load %arg12[%291, %c0_91, %c0_92] : memref<8x1x256xf32, #tpu.memory_space<vmem>>, vector<1x1x256xf32>
      %293 = vector.shape_cast %292 : vector<1x1x256xf32> to vector<1x256xf32>
      %cst_93 = arith.constant dense<0.000000e+00> : vector<16xf32>
      %294 = vector.multi_reduction <add>, %287, %cst_93 [1] : vector<16x256xf32> to vector<16xf32>
      %295 = vector.shape_cast %294 : vector<16xf32> to vector<16x1xf32>
      %cst_94 = arith.constant 2.560000e+02 : f32
      %296 = vector.broadcast %cst_94 : f32 to vector<16x1xf32>
      %297 = arith.divf %295, %296 : vector<16x1xf32>
      %298 = vector.broadcast %297 : vector<16x1xf32> to vector<16x256xf32>
      %299 = arith.subf %287, %298 : vector<16x256xf32>
      %300 = arith.mulf %299, %299 : vector<16x256xf32>
      %cst_95 = arith.constant dense<0.000000e+00> : vector<16xf32>
      %301 = vector.multi_reduction <add>, %300, %cst_95 [1] : vector<16x256xf32> to vector<16xf32>
      %302 = vector.shape_cast %301 : vector<16xf32> to vector<16x1xf32>
      %cst_96 = arith.constant 2.560000e+02 : f32
      %303 = vector.broadcast %cst_96 : f32 to vector<16x1xf32>
      %304 = arith.divf %302, %303 : vector<16x1xf32>
      %305 = vector.broadcast %297 : vector<16x1xf32> to vector<16x256xf32>
      %306 = arith.subf %287, %305 : vector<16x256xf32>
      %cst_97 = arith.constant 9.99999974E-6 : f32
      %307 = vector.broadcast %cst_97 : f32 to vector<16x1xf32>
      %308 = arith.addf %304, %307 : vector<16x1xf32>
      %309 = math.rsqrt %308 : vector<16x1xf32>
      %310 = vector.broadcast %309 : vector<16x1xf32> to vector<16x256xf32>
      %311 = arith.mulf %306, %310 : vector<16x256xf32>
      %312 = vector.broadcast %290 : vector<1x256xf32> to vector<16x256xf32>
      %313 = arith.mulf %311, %312 : vector<16x256xf32>
      %314 = vector.broadcast %293 : vector<1x256xf32> to vector<16x256xf32>
      %315 = arith.addf %313, %314 : vector<16x256xf32>
      %316 = arith.truncf %315 : vector<16x256xf32> to vector<16x256xbf16>
      %317 = arith.index_cast %arg26 : i32 to index
      %c0_98 = arith.constant 0 : index
      %c0_99 = arith.constant 0 : index
      %318 = vector.load %arg13[%317, %c0_98, %c0_99] : memref<8x256x128xbf16, #tpu.memory_space<vmem>>, vector<1x256x128xbf16>
      %319 = vector.shape_cast %318 : vector<1x256x128xbf16> to vector<256x128xbf16>
      %cst_100 = arith.constant dense<0.000000e+00> : vector<16x128xf32>
      %320 = tpu.matmul %316, %319, %cst_100 {dimension_numbers = #tpu.dot_dimension_numbers<[1], [0], [0], [1], [0, 0, 1, 1], [], []>} : vector<16x256xbf16>, vector<256x128xbf16>, vector<16x128xf32> -> vector<16x128xf32>
      %321 = arith.index_cast %arg26 : i32 to index
      %c0_101 = arith.constant 0 : index
      %c0_102 = arith.constant 0 : index
      %322 = vector.load %arg14[%321, %c0_101, %c0_102] : memref<8x1x128xf32, #tpu.memory_space<vmem>>, vector<1x1x128xf32>
      %323 = vector.shape_cast %322 : vector<1x1x128xf32> to vector<1x128xf32>
      %324 = vector.broadcast %323 : vector<1x128xf32> to vector<16x128xf32>
      %325 = arith.addf %320, %324 : vector<16x128xf32>
      %cst_103 = arith.constant 0.000000e+00 : f32
      %326 = vector.broadcast %cst_103 : f32 to vector<16x128xf32>
      %327 = arith.maximumf %325, %326 : vector<16x128xf32>
      %328 = arith.truncf %327 : vector<16x128xf32> to vector<16x128xbf16>
      %329 = arith.index_cast %arg26 : i32 to index
      %c0_104 = arith.constant 0 : index
      %c0_105 = arith.constant 0 : index
      %330 = vector.load %arg15[%329, %c0_104, %c0_105] : memref<8x128x256xbf16, #tpu.memory_space<vmem>>, vector<1x128x256xbf16>
      %331 = vector.shape_cast %330 : vector<1x128x256xbf16> to vector<128x256xbf16>
      %cst_106 = arith.constant dense<0.000000e+00> : vector<16x256xf32>
      %332 = tpu.matmul %328, %331, %cst_106 {dimension_numbers = #tpu.dot_dimension_numbers<[1], [0], [0], [1], [0, 0, 1, 1], [], []>} : vector<16x128xbf16>, vector<128x256xbf16>, vector<16x256xf32> -> vector<16x256xf32>
      %333 = arith.index_cast %arg26 : i32 to index
      %c0_107 = arith.constant 0 : index
      %c0_108 = arith.constant 0 : index
      %334 = vector.load %arg16[%333, %c0_107, %c0_108] : memref<8x1x256xf32, #tpu.memory_space<vmem>>, vector<1x1x256xf32>
      %335 = vector.shape_cast %334 : vector<1x1x256xf32> to vector<1x256xf32>
      %336 = vector.broadcast %335 : vector<1x256xf32> to vector<16x256xf32>
      %337 = arith.addf %332, %336 : vector<16x256xf32>
      %338 = arith.addf %315, %337 : vector<16x256xf32>
      %339 = arith.index_cast %arg26 : i32 to index
      %c0_109 = arith.constant 0 : index
      %c0_110 = arith.constant 0 : index
      %340 = vector.load %arg17[%339, %c0_109, %c0_110] : memref<8x1x256xf32, #tpu.memory_space<vmem>>, vector<1x1x256xf32>
      %341 = vector.shape_cast %340 : vector<1x1x256xf32> to vector<1x256xf32>
      %342 = arith.index_cast %arg26 : i32 to index
      %c0_111 = arith.constant 0 : index
      %c0_112 = arith.constant 0 : index
      %343 = vector.load %arg18[%342, %c0_111, %c0_112] : memref<8x1x256xf32, #tpu.memory_space<vmem>>, vector<1x1x256xf32>
      %344 = vector.shape_cast %343 : vector<1x1x256xf32> to vector<1x256xf32>
      %cst_113 = arith.constant dense<0.000000e+00> : vector<16xf32>
      %345 = vector.multi_reduction <add>, %338, %cst_113 [1] : vector<16x256xf32> to vector<16xf32>
      %346 = vector.shape_cast %345 : vector<16xf32> to vector<16x1xf32>
      %cst_114 = arith.constant 2.560000e+02 : f32
      %347 = vector.broadcast %cst_114 : f32 to vector<16x1xf32>
      %348 = arith.divf %346, %347 : vector<16x1xf32>
      %349 = vector.broadcast %348 : vector<16x1xf32> to vector<16x256xf32>
      %350 = arith.subf %338, %349 : vector<16x256xf32>
      %351 = arith.mulf %350, %350 : vector<16x256xf32>
      %cst_115 = arith.constant dense<0.000000e+00> : vector<16xf32>
      %352 = vector.multi_reduction <add>, %351, %cst_115 [1] : vector<16x256xf32> to vector<16xf32>
      %353 = vector.shape_cast %352 : vector<16xf32> to vector<16x1xf32>
      %cst_116 = arith.constant 2.560000e+02 : f32
      %354 = vector.broadcast %cst_116 : f32 to vector<16x1xf32>
      %355 = arith.divf %353, %354 : vector<16x1xf32>
      %356 = vector.broadcast %348 : vector<16x1xf32> to vector<16x256xf32>
      %357 = arith.subf %338, %356 : vector<16x256xf32>
      %cst_117 = arith.constant 9.99999974E-6 : f32
      %358 = vector.broadcast %cst_117 : f32 to vector<16x1xf32>
      %359 = arith.addf %355, %358 : vector<16x1xf32>
      %360 = math.rsqrt %359 : vector<16x1xf32>
      %361 = vector.broadcast %360 : vector<16x1xf32> to vector<16x256xf32>
      %362 = arith.mulf %357, %361 : vector<16x256xf32>
      %363 = vector.broadcast %341 : vector<1x256xf32> to vector<16x256xf32>
      %364 = arith.mulf %362, %363 : vector<16x256xf32>
      %365 = vector.broadcast %344 : vector<1x256xf32> to vector<16x256xf32>
      %366 = arith.addf %364, %365 : vector<16x256xf32>
      scf.yield %366 : vector<16x256xf32>
    }
    %c8_i32_13 = arith.constant 8 : i32
    %26 = arith.truncf %25 : vector<16x256xf32> to vector<16x256xbf16>
    %c0_14 = arith.constant 0 : index
    %c0_15 = arith.constant 0 : index
    %27 = vector.load %arg19[%c0_14, %c0_15] : memref<256x512xbf16, #tpu.memory_space<vmem>>, vector<256x512xbf16>
    %cst_16 = arith.constant dense<0.000000e+00> : vector<16x512xf32>
    %28 = tpu.matmul %26, %27, %cst_16 {dimension_numbers = #tpu.dot_dimension_numbers<[1], [0], [0], [1], [0, 0, 1, 1], [], []>} : vector<16x256xbf16>, vector<256x512xbf16>, vector<16x512xf32> -> vector<16x512xf32>
    %c0_17 = arith.constant 0 : index
    %c0_18 = arith.constant 0 : index
    %29 = vector.load %arg20[%c0_17, %c0_18] : memref<1x512xf32, #tpu.memory_space<vmem>>, vector<1x512xf32>
    %30 = vector.broadcast %29 : vector<1x512xf32> to vector<16x512xf32>
    %31 = arith.addf %28, %30 : vector<16x512xf32>
    %c0_19 = arith.constant 0 : index
    %c0_20 = arith.constant 0 : index
    %32 = vector.load %arg21[%c0_19, %c0_20] : memref<1x512xf32, #tpu.memory_space<vmem>>, vector<1x512xf32>
    %c0_21 = arith.constant 0 : index
    %c0_22 = arith.constant 0 : index
    %33 = vector.load %arg22[%c0_21, %c0_22] : memref<1x512xf32, #tpu.memory_space<vmem>>, vector<1x512xf32>
    %cst_23 = arith.constant dense<0.000000e+00> : vector<16xf32>
    %34 = vector.multi_reduction <add>, %31, %cst_23 [1] : vector<16x512xf32> to vector<16xf32>
    %35 = vector.shape_cast %34 : vector<16xf32> to vector<16x1xf32>
    %cst_24 = arith.constant 5.120000e+02 : f32
    %36 = vector.broadcast %cst_24 : f32 to vector<16x1xf32>
    %37 = arith.divf %35, %36 : vector<16x1xf32>
    %38 = vector.broadcast %37 : vector<16x1xf32> to vector<16x512xf32>
    %39 = arith.subf %31, %38 : vector<16x512xf32>
    %40 = arith.mulf %39, %39 : vector<16x512xf32>
    %cst_25 = arith.constant dense<0.000000e+00> : vector<16xf32>
    %41 = vector.multi_reduction <add>, %40, %cst_25 [1] : vector<16x512xf32> to vector<16xf32>
    %42 = vector.shape_cast %41 : vector<16xf32> to vector<16x1xf32>
    %cst_26 = arith.constant 5.120000e+02 : f32
    %43 = vector.broadcast %cst_26 : f32 to vector<16x1xf32>
    %44 = arith.divf %42, %43 : vector<16x1xf32>
    %45 = vector.broadcast %37 : vector<16x1xf32> to vector<16x512xf32>
    %46 = arith.subf %31, %45 : vector<16x512xf32>
    %cst_27 = arith.constant 9.99999974E-6 : f32
    %47 = vector.broadcast %cst_27 : f32 to vector<16x1xf32>
    %48 = arith.addf %44, %47 : vector<16x1xf32>
    %49 = math.rsqrt %48 : vector<16x1xf32>
    %50 = vector.broadcast %49 : vector<16x1xf32> to vector<16x512xf32>
    %51 = arith.mulf %46, %50 : vector<16x512xf32>
    %52 = vector.broadcast %32 : vector<1x512xf32> to vector<16x512xf32>
    %53 = arith.mulf %51, %52 : vector<16x512xf32>
    %54 = vector.broadcast %33 : vector<1x512xf32> to vector<16x512xf32>
    %55 = arith.addf %53, %54 : vector<16x512xf32>
    %cst_28 = arith.constant 0.000000e+00 : f32
    %56 = vector.broadcast %cst_28 : f32 to vector<16x512xf32>
    %57 = arith.maximumf %55, %56 : vector<16x512xf32>
    %58 = arith.truncf %57 : vector<16x512xf32> to vector<16x512xbf16>
    %c0_29 = arith.constant 0 : index
    %c0_30 = arith.constant 0 : index
    %59 = vector.load %arg23[%c0_29, %c0_30] : memref<512x256xbf16, #tpu.memory_space<vmem>>, vector<512x256xbf16>
    %cst_31 = arith.constant dense<0.000000e+00> : vector<16x256xf32>
    %60 = tpu.matmul %58, %59, %cst_31 {dimension_numbers = #tpu.dot_dimension_numbers<[1], [0], [0], [1], [0, 0, 1, 1], [], []>} : vector<16x512xbf16>, vector<512x256xbf16>, vector<16x256xf32> -> vector<16x256xf32>
    %c0_32 = arith.constant 0 : index
    %c0_33 = arith.constant 0 : index
    %61 = vector.load %arg24[%c0_32, %c0_33] : memref<1x256xf32, #tpu.memory_space<vmem>>, vector<1x256xf32>
    %62 = vector.broadcast %61 : vector<1x256xf32> to vector<16x256xf32>
    %63 = arith.addf %60, %62 : vector<16x256xf32>
    %64 = arith.negf %63 : vector<16x256xf32>
    %65 = math.exp %64 : vector<16x256xf32>
    %cst_34 = arith.constant 1.000000e+00 : f32
    %66 = vector.broadcast %cst_34 : f32 to vector<16x256xf32>
    %67 = arith.addf %66, %65 : vector<16x256xf32>
    %68 = arith.divf %66, %67 : vector<16x256xf32>
    %69 = vector.shape_cast %68 : vector<16x256xf32> to vector<2x8x256xf32>
    %cst_35 = arith.constant dense<0.000000e+00> : vector<2x256xf32>
    %70 = vector.multi_reduction <add>, %69, %cst_35 [1] : vector<2x8x256xf32> to vector<2x256xf32>
    %cst_36 = arith.constant 8.000000e+00 : f32
    %71 = vector.broadcast %cst_36 : f32 to vector<2x256xf32>
    %72 = arith.divf %70, %71 : vector<2x256xf32>
    %c0_37 = arith.constant 0 : index
    %c0_38 = arith.constant 0 : index
    %73 = vector.load %arg25[%c0_37, %c0_38] : memref<2x256xf32, #tpu.memory_space<vmem>>, vector<2x256xf32>
    tpu.vector_store %arg25[%c0_37, %c0_38], %72 {strides = array<i32>} : memref<2x256xf32, #tpu.memory_space<vmem>>, vector<2x256xf32>,
    return
  }
  func.func @transform_0(%arg0: i32) -> (i32, i32, i32) {
    %c0_i32 = arith.constant 0 : i32
    %c0_i32_0 = arith.constant 0 : i32
    %c0_i32_1 = arith.constant 0 : i32
    %c0_i32_2 = arith.constant 0 : i32
    return %c0_i32, %c0_i32_0, %c0_i32_1 : i32, i32, i32
  }
  func.func @transform_1(%arg0: i32) -> (i32, i32) {
    %c0_i32 = arith.constant 0 : i32
    %c0_i32_0 = arith.constant 0 : i32
    %c0_i32_1 = arith.constant 0 : i32
    return %c0_i32, %c0_i32_0 : i32, i32
  }
  func.func @transform_2(%arg0: i32) -> (i32, i32) {
    %c0_i32 = arith.constant 0 : i32
    %c0_i32_0 = arith.constant 0 : i32
    %c0_i32_1 = arith.constant 0 : i32
    return %c0_i32, %c0_i32_0 : i32, i32
  }
  func.func @transform_3(%arg0: i32) -> (i32, i32) {
    %c0_i32 = arith.constant 0 : i32
    %c0_i32_0 = arith.constant 0 : i32
    %c0_i32_1 = arith.constant 0 : i32
    return %c0_i32, %c0_i32_0 : i32, i32
  }
  func.func @transform_4(%arg0: i32) -> (i32, i32) {
    %c0_i32 = arith.constant 0 : i32
    %c0_i32_0 = arith.constant 0 : i32
    %c0_i32_1 = arith.constant 0 : i32
    return %c0_i32, %c0_i32_0 : i32, i32
  }
  func.func @transform_5(%arg0: i32) -> (i32, i32) {
    %c0_i32 = arith.constant 0 : i32
    %c0_i32_0 = arith.constant 0 : i32
    %c0_i32_1 = arith.constant 0 : i32
    return %c0_i32, %c0_i32_0 : i32, i32
  }
  func.func @transform_6(%arg0: i32) -> (i32, i32, i32) {
    %c0_i32 = arith.constant 0 : i32
    %c0_i32_0 = arith.constant 0 : i32
    %c0_i32_1 = arith.constant 0 : i32
    %c0_i32_2 = arith.constant 0 : i32
    return %c0_i32, %c0_i32_0, %c0_i32_1 : i32, i32, i32
  }
  func.func @transform_7(%arg0: i32) -> (i32, i32, i32) {
    %c0_i32 = arith.constant 0 : i32
    %c0_i32_0 = arith.constant 0 : i32
    %c0_i32_1 = arith.constant 0 : i32
    %c0_i32_2 = arith.constant 0 : i32
    return %c0_i32, %c0_i32_0, %c0_i32_1 : i32, i32, i32
  }
  func.func @transform_8(%arg0: i32) -> (i32, i32, i32) {
    %c0_i32 = arith.constant 0 : i32
    %c0_i32_0 = arith.constant 0 : i32
    %c0_i32_1 = arith.constant 0 : i32
    %c0_i32_2 = arith.constant 0 : i32
    return %c0_i32, %c0_i32_0, %c0_i32_1 : i32, i32, i32
  }
  func.func @transform_9(%arg0: i32) -> (i32, i32, i32) {
    %c0_i32 = arith.constant 0 : i32
    %c0_i32_0 = arith.constant 0 : i32
    %c0_i32_1 = arith.constant 0 : i32
    %c0_i32_2 = arith.constant 0 : i32
    return %c0_i32, %c0_i32_0, %c0_i32_1 : i32, i32, i32
  }
  func.func @transform_10(%arg0: i32) -> (i32, i32, i32) {
    %c0_i32 = arith.constant 0 : i32
    %c0_i32_0 = arith.constant 0 : i32
    %c0_i32_1 = arith.constant 0 : i32
    %c0_i32_2 = arith.constant 0 : i32
    return %c0_i32, %c0_i32_0, %c0_i32_1 : i32, i32, i32
  }
  func.func @transform_11(%arg0: i32) -> (i32, i32, i32) {
    %c0_i32 = arith.constant 0 : i32
    %c0_i32_0 = arith.constant 0 : i32
    %c0_i32_1 = arith.constant 0 : i32
    %c0_i32_2 = arith.constant 0 : i32
    return %c0_i32, %c0_i32_0, %c0_i32_1 : i32, i32, i32
  }
  func.func @transform_12(%arg0: i32) -> (i32, i32, i32) {
    %c0_i32 = arith.constant 0 : i32
    %c0_i32_0 = arith.constant 0 : i32
    %c0_i32_1 = arith.constant 0 : i32
    %c0_i32_2 = arith.constant 0 : i32
    return %c0_i32, %c0_i32_0, %c0_i32_1 : i32, i32, i32
  }
  func.func @transform_13(%arg0: i32) -> (i32, i32, i32) {
    %c0_i32 = arith.constant 0 : i32
    %c0_i32_0 = arith.constant 0 : i32
    %c0_i32_1 = arith.constant 0 : i32
    %c0_i32_2 = arith.constant 0 : i32
    return %c0_i32, %c0_i32_0, %c0_i32_1 : i32, i32, i32
  }
  func.func @transform_14(%arg0: i32) -> (i32, i32, i32) {
    %c0_i32 = arith.constant 0 : i32
    %c0_i32_0 = arith.constant 0 : i32
    %c0_i32_1 = arith.constant 0 : i32
    %c0_i32_2 = arith.constant 0 : i32
    return %c0_i32, %c0_i32_0, %c0_i32_1 : i32, i32, i32
  }
  func.func @transform_15(%arg0: i32) -> (i32, i32, i32) {
    %c0_i32 = arith.constant 0 : i32
    %c0_i32_0 = arith.constant 0 : i32
    %c0_i32_1 = arith.constant 0 : i32
    %c0_i32_2 = arith.constant 0 : i32
    return %c0_i32, %c0_i32_0, %c0_i32_1 : i32, i32, i32
  }
  func.func @transform_16(%arg0: i32) -> (i32, i32, i32) {
    %c0_i32 = arith.constant 0 : i32
    %c0_i32_0 = arith.constant 0 : i32
    %c0_i32_1 = arith.constant 0 : i32
    %c0_i32_2 = arith.constant 0 : i32
    return %c0_i32, %c0_i32_0, %c0_i32_1 : i32, i32, i32
  }
  func.func @transform_17(%arg0: i32) -> (i32, i32, i32) {
    %c0_i32 = arith.constant 0 : i32
    %c0_i32_0 = arith.constant 0 : i32
    %c0_i32_1 = arith.constant 0 : i32
    %c0_i32_2 = arith.constant 0 : i32
    return %c0_i32, %c0_i32_0, %c0_i32_1 : i32, i32, i32
  }
  func.func @transform_18(%arg0: i32) -> (i32, i32) {
    %c0_i32 = arith.constant 0 : i32
    %c0_i32_0 = arith.constant 0 : i32
    %c0_i32_1 = arith.constant 0 : i32
    return %c0_i32, %c0_i32_0 : i32, i32
  }
  func.func @transform_19(%arg0: i32) -> (i32, i32) {
    %c0_i32 = arith.constant 0 : i32
    %c0_i32_0 = arith.constant 0 : i32
    %c0_i32_1 = arith.constant 0 : i32
    return %c0_i32, %c0_i32_0 : i32, i32
  }
  func.func @transform_20(%arg0: i32) -> (i32, i32) {
    %c0_i32 = arith.constant 0 : i32
    %c0_i32_0 = arith.constant 0 : i32
    %c0_i32_1 = arith.constant 0 : i32
    return %c0_i32, %c0_i32_0 : i32, i32
  }
  func.func @transform_21(%arg0: i32) -> (i32, i32) {
    %c0_i32 = arith.constant 0 : i32
    %c0_i32_0 = arith.constant 0 : i32
    %c0_i32_1 = arith.constant 0 : i32
    return %c0_i32, %c0_i32_0 : i32, i32
  }
  func.func @transform_22(%arg0: i32) -> (i32, i32) {
    %c0_i32 = arith.constant 0 : i32
    %c0_i32_0 = arith.constant 0 : i32
    %c0_i32_1 = arith.constant 0 : i32
    return %c0_i32, %c0_i32_0 : i32, i32
  }
  func.func @transform_23(%arg0: i32) -> (i32, i32) {
    %c0_i32 = arith.constant 0 : i32
    %c0_i32_0 = arith.constant 0 : i32
    %c0_i32_1 = arith.constant 0 : i32
    return %c0_i32, %c0_i32_0 : i32, i32
  }
  func.func @transform_24(%arg0: i32) -> (i32, i32) {
    %c0_i32 = arith.constant 0 : i32
    %c0_i32_0 = arith.constant 0 : i32
    %c0_i32_1 = arith.constant 0 : i32
    return %c0_i32, %c0_i32_0 : i32, i32
  }
}

</mosaic_0001>

<llo_original>
// kernel: forward.1
$region0: #{forward.1}
  #allocation0 [shape = 'u32[]', space=smem, size = 0x4, offset = 0x4, fixed_abs, tag = 'smem constant byte address 0x4 - core index']
  #allocation1 [shape = 'u32[144,128]{1,0:T(1,128)}', space=vmem, size = 0x12000, scoped, tag = 'internal scratch']
  %s0 = inlined_call_operand.hbm [shape: f32[2,8,22], index: 0, kind: input, shape index: {}]
  %s1 = inlined_call_operand.hbm [shape: f32[2,12], index: 1, kind: input, shape index: {}]
  %s2 = inlined_call_operand.vmem [shape: f32[8,256], index: 2, kind: input, shape index: {}]
  %s3 = inlined_call_operand.hbm [shape: f32[12,512], index: 3, kind: input, shape index: {}]
  %s4 = inlined_call_operand.hbm [shape: f32[1,512], index: 4, kind: input, shape index: {}]
  %s5 = inlined_call_operand.hbm [shape: f32[22,256], index: 5, kind: input, shape index: {}]
  %s6 = inlined_call_operand.hbm [shape: bf16[8,256,768], index: 6, kind: input, shape index: {}]
  %s7 = inlined_call_operand.hbm [shape: f32[8,1,768], index: 7, kind: input, shape index: {}]
  %s8 = inlined_call_operand.hbm [shape: bf16[8,256,256], index: 8, kind: input, shape index: {}]
  %s9 = inlined_call_operand.hbm [shape: f32[8,1,256], index: 9, kind: input, shape index: {}]
  %s10 = inlined_call_operand.hbm [shape: f32[8,1,256], index: 10, kind: input, shape index: {}]
  %s11 = inlined_call_operand.hbm [shape: f32[8,1,256], index: 11, kind: input, shape index: {}]
  %s12 = inlined_call_operand.hbm [shape: bf16[8,256,128], index: 12, kind: input, shape index: {}]
  %s13 = inlined_call_operand.hbm [shape: f32[8,1,128], index: 13, kind: input, shape index: {}]
  %s14 = inlined_call_operand.hbm [shape: bf16[8,128,256], index: 14, kind: input, shape index: {}]
  %s15 = inlined_call_operand.hbm [shape: f32[8,1,256], index: 15, kind: input, shape index: {}]
  %s16 = inlined_call_operand.hbm [shape: f32[8,1,256], index: 16, kind: input, shape index: {}]
  %s17 = inlined_call_operand.hbm [shape: f32[8,1,256], index: 17, kind: input, shape index: {}]
  %s18 = inlined_call_operand.hbm [shape: bf16[256,512], index: 18, kind: input, shape index: {}]
  %s19 = inlined_call_operand.hbm [shape: f32[1,512], index: 19, kind: input, shape index: {}]
  %s20 = inlined_call_operand.hbm [shape: f32[1,512], index: 20, kind: input, shape index: {}]
  %s21 = inlined_call_operand.hbm [shape: f32[1,512], index: 21, kind: input, shape index: {}]
  %s22 = inlined_call_operand.hbm [shape: bf16[512,256], index: 22, kind: input, shape index: {}]
  %s23 = inlined_call_operand.hbm [shape: f32[1,256], index: 23, kind: input, shape index: {}]
  %s24 = inlined_call_operand.vmem [shape: f32[2,256], index: 24, kind: output, shape index: {}]
  %s25 = sld [smem:[#allocation0]]
  $region205: #{forward.1} parent=0
    _
  %s27 = ssub.s32 1, %s25
  %s28 = scalar_select 0, %s27, %s25
  $region1: #{forward.1} parent=0
    #allocation2 [shape = 'u8[8192]{0}', space=vmem, size = 0x2000, scoped, tag = 'input window, operand 0, single buffered']
    #allocation3 [shape = 's32[1]{0}', space=sflag, size = 0x4, scoped, tag = 'scoped memory for forward.1']
    #allocation4 [shape = 'u8[1024]{0}', space=vmem, size = 0x400, scoped, tag = 'input window, operand 1, single buffered']
    #allocation5 [shape = 's32[1]{0}', space=sflag, size = 0x4, scoped, tag = 'scoped memory for forward.1']
    #allocation6 [shape = 'u8[32768]{0}', space=vmem, size = 0x8000, scoped, tag = 'input window, operand 3, single buffered']
    #allocation7 [shape = 'u8[2048]{0}', space=vmem, size = 0x800, scoped, tag = 'input window, operand 4, single buffered']
    #allocation8 [shape = 's32[1]{0}', space=sflag, size = 0x4, scoped, tag = 'scoped memory for forward.1']
    #allocation9 [shape = 'u8[24576]{0}', space=vmem, size = 0x6000, scoped, tag = 'input window, operand 5, single buffered']
    #allocation10 [shape = 'u8[3145728]{0}', space=vmem, size = 0x300000, scoped, tag = 'input window, operand 6, single buffered']
    #allocation11 [shape = 's32[1]{0}', space=sflag, size = 0x4, scoped, tag = 'scoped memory for forward.1']
    #allocation12 [shape = 'u8[24576]{0}', space=vmem, size = 0x6000, scoped, tag = 'input window, operand 7, single buffered']
    #allocation13 [shape = 'u8[1048576]{0}', space=vmem, size = 0x100000, scoped, tag = 'input window, operand 8, single buffered']
    #allocation14 [shape = 's32[1]{0}', space=sflag, size = 0x4, scoped, tag = 'scoped memory for forward.1']
    #allocation15 [shape = 'u8[8192]{0}', space=vmem, size = 0x2000, scoped, tag = 'input window, operand 9, single buffered']
    #allocation16 [shape = 'u8[8192]{0}', space=vmem, size = 0x2000, scoped, tag = 'input window, operand 10, single buffered']
    #allocation17 [shape = 's32[1]{0}', space=sflag, size = 0x4, scoped, tag = 'scoped memory for forward.1']
    #allocation18 [shape = 'u8[8192]{0}', space=vmem, size = 0x2000, scoped, tag = 'input window, operand 11, single buffered']
    #allocation19 [shape = 'u8[524288]{0}', space=vmem, size = 0x80000, scoped, tag = 'input window, operand 12, single buffered']
    #allocation20 [shape = 's32[1]{0}', space=sflag, size = 0x4, scoped, tag = 'scoped memory for forward.1']
    #allocation21 [shape = 'u8[4096]{0}', space=vmem, size = 0x1000, scoped, tag = 'input window, operand 13, single buffered']
    #allocation22 [shape = 'u8[524288]{0}', space=vmem, size = 0x80000, scoped, tag = 'input window, operand 14, single buffered']
    #allocation23 [shape = 's32[1]{0}', space=sflag, size = 0x4, scoped, tag = 'scoped memory for forward.1']
    #allocation24 [shape = 'u8[8192]{0}', space=vmem, size = 0x2000, scoped, tag = 'input window, operand 15, single buffered']
    #allocation25 [shape = 'u8[8192]{0}', space=vmem, size = 0x2000, scoped, tag = 'input window, operand 16, single buffered']
    #allocation26 [shape = 's32[1]{0}', space=sflag, size = 0x4, scoped, tag = 'scoped memory for forward.1']
    #allocation27 [shape = 'u8[8192]{0}', space=vmem, size = 0x2000, scoped, tag = 'input window, operand 17, single buffered']
    #allocation28 [shape = 'u8[262144]{0}', space=vmem, size = 0x40000, scoped, tag = 'input window, operand 18, single buffered']
    #allocation29 [shape = 's32[1]{0}', space=sflag, size = 0x4, scoped, tag = 'scoped memory for forward.1']
    #allocation30 [shape = 'u8[2048]{0}', space=vmem, size = 0x800, scoped, tag = 'input window, operand 19, single buffered']
    #allocation31 [shape = 'u8[2048]{0}', space=vmem, size = 0x800, scoped, tag = 'input window, operand 20, single buffered']
    #allocation32 [shape = 's32[1]{0}', space=sflag, size = 0x4, scoped, tag = 'scoped memory for forward.1']
    #allocation33 [shape = 'u8[2048]{0}', space=vmem, size = 0x800, scoped, tag = 'input window, operand 21, single buffered']
    #allocation34 [shape = 'u8[262144]{0}', space=vmem, size = 0x40000, scoped, tag = 'input window, operand 22, single buffered']
    #allocation35 [shape = 's32[1]{0}', space=sflag, size = 0x4, scoped, tag = 'scoped memory for forward.1']
    #allocation36 [shape = 'u8[1024]{0}', space=vmem, size = 0x400, scoped, tag = 'input window, operand 23, single buffered']
    %29 = vsyncpa [#allocation3], 0
    %30 = vsyncpa [#allocation5], 0
    %31 = vsyncpa [#allocation8], 0
    %32 = vsyncpa [#allocation11], 0
    %33 = vsyncpa [#allocation14], 0
    %34 = vsyncpa [#allocation17], 0
    %35 = vsyncpa [#allocation20], 0
    %36 = vsyncpa [#allocation23], 0
    %37 = vsyncpa [#allocation26], 0
    %38 = vsyncpa [#allocation29], 0
    %39 = vsyncpa [#allocation32], 0
    %40 = vsyncpa [#allocation35], 0
    // Predicated region
    $region2: #{forward.1} parent=1 // pred_check
      _
    $region3: #{forward.1} parent=1 // pred_check_branch
      %42 = sbr.rel (0) target = $region5
    $region4: #{forward.1} parent=1 // pred_region
      %s44 = ssub.s32 256, 256
      %45 = vsyncadd [#allocation3], %s44
      %s46 = sshll.u32 [#allocation2], 4
      %s47 = int_to_ptr.vmem [resolvable:$true] %s46
      %52 = dma.hbm_to_vmem [thread:$0]  %s0, 256, %s47, [#allocation3], 128, 128, 8
    $region5: #{forward.1} parent=1 // pred_fallthru
      _
    // Predicated region
    $region6: #{forward.1} parent=1 // pred_check
      _
    $region7: #{forward.1} parent=1 // pred_check_branch
      %54 = sbr.rel (0) target = $region9
    $region8: #{forward.1} parent=1 // pred_region
      %s56 = ssub.s32 32, 32
      %57 = vsyncadd [#allocation5], %s56
      %s59 = sshll.u32 [#allocation4], 4
      %s60 = int_to_ptr.vmem [resolvable:$true] %s59
      %62 = dma.hbm_to_vmem [thread:$0]  %s1, 32, %s60, [#allocation5]
    $region9: #{forward.1} parent=1 // pred_fallthru
      _
    // Predicated region
    $region10: #{forward.1} parent=1 // pred_check
      _
    $region11: #{forward.1} parent=1 // pred_check_branch
      %64 = sbr.rel (0) target = $region13
    $region12: #{forward.1} parent=1 // pred_region
      _
    $region13: #{forward.1} parent=1 // pred_fallthru
      _
    // Predicated region
    $region14: #{forward.1} parent=1 // pred_check
      _
    $region15: #{forward.1} parent=1 // pred_check_branch
      %66 = sbr.rel (0) target = $region17
    $region16: #{forward.1} parent=1 // pred_region
      %s68 = ssub.s32 1024, 1024
      %69 = vsyncadd [#allocation5], %s68
      %s70 = sshll.u32 [#allocation6], 4
      %s71 = int_to_ptr.vmem [resolvable:$true] %s70
      %76 = dma.hbm_to_vmem [thread:$0]  %s3, 1024, %s71, [#allocation5], 512, 512, 32
    $region17: #{forward.1} parent=1 // pred_fallthru
      _
    // Predicated region
    $region18: #{forward.1} parent=1 // pred_check
      _
    $region19: #{forward.1} parent=1 // pred_check_branch
      %78 = sbr.rel (0) target = $region21
    $region20: #{forward.1} parent=1 // pred_region
      %s80 = ssub.s32 64, 64
      %81 = vsyncadd [#allocation8], %s80
      %s83 = sshll.u32 [#allocation7], 4
      %s84 = int_to_ptr.vmem [resolvable:$true] %s83
      %86 = dma.hbm_to_vmem [thread:$0]  %s4, 64, %s84, [#allocation8]
    $region21: #{forward.1} parent=1 // pred_fallthru
      _
    // Predicated region
    $region22: #{forward.1} parent=1 // pred_check
      _
    $region23: #{forward.1} parent=1 // pred_check_branch
      %88 = sbr.rel (0) target = $region25
    $region24: #{forward.1} parent=1 // pred_region
      %s90 = ssub.s32 768, 768
      %91 = vsyncadd [#allocation8], %s90
      %s92 = sshll.u32 [#allocation9], 4
      %s93 = int_to_ptr.vmem [resolvable:$true] %s92
      %98 = dma.hbm_to_vmem [thread:$0]  %s5, 768, %s93, [#allocation8], 256, 256, 16
    $region25: #{forward.1} parent=1 // pred_fallthru
      _
    // Predicated region
    $region26: #{forward.1} parent=1 // pred_check
      _
    $region27: #{forward.1} parent=1 // pred_check_branch
      %100 = sbr.rel (0) target = $region29
    $region28: #{forward.1} parent=1 // pred_region
      %s102 = ssub.s32 98304, 98304
      %103 = vsyncadd [#allocation11], %s102
      %s104 = sshll.u32 [#allocation10], 4
      %s105 = int_to_ptr.vmem [resolvable:$true] %s104
      %110 = dma.hbm_to_vmem [thread:$0]  %s6, 98304, %s105, [#allocation11], 384, 384, 24
    $region29: #{forward.1} parent=1 // pred_fallthru
      _
    // Predicated region
    $region30: #{forward.1} parent=1 // pred_check
      _
    $region31: #{forward.1} parent=1 // pred_check_branch
      %112 = sbr.rel (0) target = $region33
    $region32: #{forward.1} parent=1 // pred_region
      %s114 = ssub.s32 768, 768
      %115 = vsyncadd [#allocation11], %s114
      %s116 = sshll.u32 [#allocation12], 4
      %s117 = int_to_ptr.vmem [resolvable:$true] %s116
      %122 = dma.hbm_to_vmem [thread:$0]  %s7, 768, %s117, [#allocation11], 96, 96, 6
    $region33: #{forward.1} parent=1 // pred_fallthru
      _
    // Predicated region
    $region34: #{forward.1} parent=1 // pred_check
      _
    $region35: #{forward.1} parent=1 // pred_check_branch
      %124 = sbr.rel (0) target = $region37
    $region36: #{forward.1} parent=1 // pred_region
      %s126 = ssub.s32 32768, 32768
      %127 = vsyncadd [#allocation14], %s126
      %s128 = sshll.u32 [#allocation13], 4
      %s129 = int_to_ptr.vmem [resolvable:$true] %s128
      %134 = dma.hbm_to_vmem [thread:$0]  %s8, 32768, %s129, [#allocation14], 128, 128, 8
    $region37: #{forward.1} parent=1 // pred_fallthru
      _
    // Predicated region
    $region38: #{forward.1} parent=1 // pred_check
      _
    $region39: #{forward.1} parent=1 // pred_check_branch
      %136 = sbr.rel (0) target = $region41
    $region40: #{forward.1} parent=1 // pred_region
      %s138 = ssub.s32 256, 256
      %139 = vsyncadd [#allocation14], %s138
      %s140 = sshll.u32 [#allocation15], 4
      %s141 = int_to_ptr.vmem [resolvable:$true] %s140
      %146 = dma.hbm_to_vmem [thread:$0]  %s9, 256, %s141, [#allocation14], 32, 32, 2
    $region41: #{forward.1} parent=1 // pred_fallthru
      _
    // Predicated region
    $region42: #{forward.1} parent=1 // pred_check
      _
    $region43: #{forward.1} parent=1 // pred_check_branch
      %148 = sbr.rel (0) target = $region45
    $region44: #{forward.1} parent=1 // pred_region
      %s150 = ssub.s32 256, 256
      %151 = vsyncadd [#allocation17], %s150
      %s152 = sshll.u32 [#allocation16], 4
      %s153 = int_to_ptr.vmem [resolvable:$true] %s152
      %158 = dma.hbm_to_vmem [thread:$0]  %s10, 256, %s153, [#allocation17], 32, 32, 2
    $region45: #{forward.1} parent=1 // pred_fallthru
      _
    // Predicated region
    $region46: #{forward.1} parent=1 // pred_check
      _
    $region47: #{forward.1} parent=1 // pred_check_branch
      %160 = sbr.rel (0) target = $region49
    $region48: #{forward.1} parent=1 // pred_region
      %s162 = ssub.s32 256, 256
      %163 = vsyncadd [#allocation17], %s162
      %s164 = sshll.u32 [#allocation18], 4
      %s165 = int_to_ptr.vmem [resolvable:$true] %s164
      %170 = dma.hbm_to_vmem [thread:$0]  %s11, 256, %s165, [#allocation17], 32, 32, 2
    $region49: #{forward.1} parent=1 // pred_fallthru
      _
    // Predicated region
    $region50: #{forward.1} parent=1 // pred_check
      _
    $region51: #{forward.1} parent=1 // pred_check_branch
      %172 = sbr.rel (0) target = $region53
    $region52: #{forward.1} parent=1 // pred_region
      %s174 = ssub.s32 16384, 16384
      %175 = vsyncadd [#allocation20], %s174
      %s176 = sshll.u32 [#allocation19], 4
      %s177 = int_to_ptr.vmem [resolvable:$true] %s176
      %182 = dma.hbm_to_vmem [thread:$0]  %s12, 16384, %s177, [#allocation20], 64, 64, 4
    $region53: #{forward.1} parent=1 // pred_fallthru
      _
    // Predicated region
    $region54: #{forward.1} parent=1 // pred_check
      _
    $region55: #{forward.1} parent=1 // pred_check_branch
      %184 = sbr.rel (0) target = $region57
    $region56: #{forward.1} parent=1 // pred_region
      %s186 = ssub.s32 128, 128
      %187 = vsyncadd [#allocation20], %s186
      %s188 = sshll.u32 [#allocation21], 4
      %s189 = int_to_ptr.vmem [resolvable:$true] %s188
      %194 = dma.hbm_to_vmem [thread:$0]  %s13, 128, %s189, [#allocation20], 16, 16, 1
    $region57: #{forward.1} parent=1 // pred_fallthru
      _
    // Predicated region
    $region58: #{forward.1} parent=1 // pred_check
      _
    $region59: #{forward.1} parent=1 // pred_check_branch
      %196 = sbr.rel (0) target = $region61
    $region60: #{forward.1} parent=1 // pred_region
      %s198 = ssub.s32 16384, 16384
      %199 = vsyncadd [#allocation23], %s198
      %s200 = sshll.u32 [#allocation22], 4
      %s201 = int_to_ptr.vmem [resolvable:$true] %s200
      %206 = dma.hbm_to_vmem [thread:$0]  %s14, 16384, %s201, [#allocation23], 128, 128, 8
    $region61: #{forward.1} parent=1 // pred_fallthru
      _
    // Predicated region
    $region62: #{forward.1} parent=1 // pred_check
      _
    $region63: #{forward.1} parent=1 // pred_check_branch
      %208 = sbr.rel (0) target = $region65
    $region64: #{forward.1} parent=1 // pred_region
      %s210 = ssub.s32 256, 256
      %211 = vsyncadd [#allocation23], %s210
      %s212 = sshll.u32 [#allocation24], 4
      %s213 = int_to_ptr.vmem [resolvable:$true] %s212
      %218 = dma.hbm_to_vmem [thread:$0]  %s15, 256, %s213, [#allocation23], 32, 32, 2
    $region65: #{forward.1} parent=1 // pred_fallthru
      _
    // Predicated region
    $region66: #{forward.1} parent=1 // pred_check
      _
    $region67: #{forward.1} parent=1 // pred_check_branch
      %220 = sbr.rel (0) target = $region69
    $region68: #{forward.1} parent=1 // pred_region
      %s222 = ssub.s32 256, 256
      %223 = vsyncadd [#allocation26], %s222
      %s224 = sshll.u32 [#allocation25], 4
      %s225 = int_to_ptr.vmem [resolvable:$true] %s224
      %230 = dma.hbm_to_vmem [thread:$0]  %s16, 256, %s225, [#allocation26], 32, 32, 2
    $region69: #{forward.1} parent=1 // pred_fallthru
      _
    // Predicated region
    $region70: #{forward.1} parent=1 // pred_check
      _
    $region71: #{forward.1} parent=1 // pred_check_branch
      %232 = sbr.rel (0) target = $region73
    $region72: #{forward.1} parent=1 // pred_region
      %s234 = ssub.s32 256, 256
      %235 = vsyncadd [#allocation26], %s234
      %s236 = sshll.u32 [#allocation27], 4
      %s237 = int_to_ptr.vmem [resolvable:$true] %s236
      %242 = dma.hbm_to_vmem [thread:$0]  %s17, 256, %s237, [#allocation26], 32, 32, 2
    $region73: #{forward.1} parent=1 // pred_fallthru
      _
    // Predicated region
    $region74: #{forward.1} parent=1 // pred_check
      _
    $region75: #{forward.1} parent=1 // pred_check_branch
      %244 = sbr.rel (0) target = $region77
    $region76: #{forward.1} parent=1 // pred_region
      %s246 = ssub.s32 8192, 8192
      %247 = vsyncadd [#allocation29], %s246
      %s248 = sshll.u32 [#allocation28], 4
      %s249 = int_to_ptr.vmem [resolvable:$true] %s248
      %254 = dma.hbm_to_vmem [thread:$0]  %s18, 8192, %s249, [#allocation29], 256, 256, 16
    $region77: #{forward.1} parent=1 // pred_fallthru
      _
    // Predicated region
    $region78: #{forward.1} parent=1 // pred_check
      _
    $region79: #{forward.1} parent=1 // pred_check_branch
      %256 = sbr.rel (0) target = $region81
    $region80: #{forward.1} parent=1 // pred_region
      %s258 = ssub.s32 64, 64
      %259 = vsyncadd [#allocation29], %s258
      %s261 = sshll.u32 [#allocation30], 4
      %s262 = int_to_ptr.vmem [resolvable:$true] %s261
      %264 = dma.hbm_to_vmem [thread:$0]  %s19, 64, %s262, [#allocation29]
    $region81: #{forward.1} parent=1 // pred_fallthru
      _
    // Predicated region
    $region82: #{forward.1} parent=1 // pred_check
      _
    $region83: #{forward.1} parent=1 // pred_check_branch
      %266 = sbr.rel (0) target = $region85
    $region84: #{forward.1} parent=1 // pred_region
      %s268 = ssub.s32 64, 64
      %269 = vsyncadd [#allocation32], %s268
      %s271 = sshll.u32 [#allocation31], 4
      %s272 = int_to_ptr.vmem [resolvable:$true] %s271
      %274 = dma.hbm_to_vmem [thread:$0]  %s20, 64, %s272, [#allocation32]
    $region85: #{forward.1} parent=1 // pred_fallthru
      _
    // Predicated region
    $region86: #{forward.1} parent=1 // pred_check
      _
    $region87: #{forward.1} parent=1 // pred_check_branch
      %276 = sbr.rel (0) target = $region89
    $region88: #{forward.1} parent=1 // pred_region
      %s278 = ssub.s32 64, 64
      %279 = vsyncadd [#allocation32], %s278
      %s281 = sshll.u32 [#allocation33], 4
      %s282 = int_to_ptr.vmem [resolvable:$true] %s281
      %284 = dma.hbm_to_vmem [thread:$0]  %s21, 64, %s282, [#allocation32]
    $region89: #{forward.1} parent=1 // pred_fallthru
      _
    // Predicated region
    $region90: #{forward.1} parent=1 // pred_check
      _
    $region91: #{forward.1} parent=1 // pred_check_branch
      %286 = sbr.rel (0) target = $region93
    $region92: #{forward.1} parent=1 // pred_region
      %s288 = ssub.s32 8192, 8192
      %289 = vsyncadd [#allocation35], %s288
      %s290 = sshll.u32 [#allocation34], 4
      %s291 = int_to_ptr.vmem [resolvable:$true] %s290
      %296 = dma.hbm_to_vmem [thread:$0]  %s22, 8192, %s291, [#allocation35], 128, 128, 8
    $region93: #{forward.1} parent=1 // pred_fallthru
      _
    // Predicated region
    $region94: #{forward.1} parent=1 // pred_check
      _
    $region95: #{forward.1} parent=1 // pred_check_branch
      %298 = sbr.rel (0) target = $region97
    $region96: #{forward.1} parent=1 // pred_region
      %s300 = ssub.s32 32, 32
      %301 = vsyncadd [#allocation35], %s300
      %s303 = sshll.u32 [#allocation36], 4
      %s304 = int_to_ptr.vmem [resolvable:$true] %s303
      %306 = dma.hbm_to_vmem [thread:$0]  %s23, 32, %s304, [#allocation35]
    $region97: #{forward.1} parent=1 // pred_fallthru
      _
    // Predicated region
    $region98: #{forward.1} parent=1 // pred_check
      _
    $region99: #{forward.1} parent=1 // pred_check_branch
      %308 = sbr.rel (0) target = $region101
    $region100: #{forward.1} parent=1 // pred_region
      %309 = dma.done [#allocation3], 256
    $region101: #{forward.1} parent=1 // pred_fallthru
      _
    // Predicated region
    $region102: #{forward.1} parent=1 // pred_check
      _
    $region103: #{forward.1} parent=1 // pred_check_branch
      %311 = sbr.rel (0) target = $region105
    $region104: #{forward.1} parent=1 // pred_region
      %312 = dma.done [#allocation5], 32
    $region105: #{forward.1} parent=1 // pred_fallthru
      _
    // Predicated region
    $region106: #{forward.1} parent=1 // pred_check
      _
    $region107: #{forward.1} parent=1 // pred_check_branch
      %314 = sbr.rel (0) target = $region109
    $region108: #{forward.1} parent=1 // pred_region
      %315 = dma.done [#allocation5], 1024
    $region109: #{forward.1} parent=1 // pred_fallthru
      _
    // Predicated region
    $region110: #{forward.1} parent=1 // pred_check
      _
    $region111: #{forward.1} parent=1 // pred_check_branch
      %317 = sbr.rel (0) target = $region113
    $region112: #{forward.1} parent=1 // pred_region
      %318 = dma.done [#allocation8], 64
    $region113: #{forward.1} parent=1 // pred_fallthru
      _
    // Predicated region
    $region114: #{forward.1} parent=1 // pred_check
      _
    $region115: #{forward.1} parent=1 // pred_check_branch
      %320 = sbr.rel (0) target = $region117
    $region116: #{forward.1} parent=1 // pred_region
      %321 = dma.done [#allocation8], 768
    $region117: #{forward.1} parent=1 // pred_fallthru
      _
    // Predicated region
    $region118: #{forward.1} parent=1 // pred_check
      _
    $region119: #{forward.1} parent=1 // pred_check_branch
      %323 = sbr.rel (0) target = $region121
    $region120: #{forward.1} parent=1 // pred_region
      %324 = dma.done [#allocation11], 98304
    $region121: #{forward.1} parent=1 // pred_fallthru
      _
    // Predicated region
    $region122: #{forward.1} parent=1 // pred_check
      _
    $region123: #{forward.1} parent=1 // pred_check_branch
      %326 = sbr.rel (0) target = $region125
    $region124: #{forward.1} parent=1 // pred_region
      %327 = dma.done [#allocation11], 768
    $region125: #{forward.1} parent=1 // pred_fallthru
      _
    // Predicated region
    $region126: #{forward.1} parent=1 // pred_check
      _
    $region127: #{forward.1} parent=1 // pred_check_branch
      %329 = sbr.rel (0) target = $region129
    $region128: #{forward.1} parent=1 // pred_region
      %330 = dma.done [#allocation14], 32768
    $region129: #{forward.1} parent=1 // pred_fallthru
      _
    // Predicated region
    $region130: #{forward.1} parent=1 // pred_check
      _
    $region131: #{forward.1} parent=1 // pred_check_branch
      %332 = sbr.rel (0) target = $region133
    $region132: #{forward.1} parent=1 // pred_region
      %333 = dma.done [#allocation14], 256
    $region133: #{forward.1} parent=1 // pred_fallthru
      _
    // Predicated region
    $region134: #{forward.1} parent=1 // pred_check
      _
    $region135: #{forward.1} parent=1 // pred_check_branch
      %335 = sbr.rel (0) target = $region137
    $region136: #{forward.1} parent=1 // pred_region
      %336 = dma.done [#allocation17], 256
    $region137: #{forward.1} parent=1 // pred_fallthru
      _
    // Predicated region
    $region138: #{forward.1} parent=1 // pred_check
      _
    $region139: #{forward.1} parent=1 // pred_check_branch
      %338 = sbr.rel (0) target = $region141
    $region140: #{forward.1} parent=1 // pred_region
      %339 = dma.done [#allocation17], 256
    $region141: #{forward.1} parent=1 // pred_fallthru
      _
    // Predicated region
    $region142: #{forward.1} parent=1 // pred_check
      _
    $region143: #{forward.1} parent=1 // pred_check_branch
      %341 = sbr.rel (0) target = $region145
    $region144: #{forward.1} parent=1 // pred_region
      %342 = dma.done [#allocation20], 16384
    $region145: #{forward.1} parent=1 // pred_fallthru
      _
    // Predicated region
    $region146: #{forward.1} parent=1 // pred_check
      _
    $region147: #{forward.1} parent=1 // pred_check_branch
      %344 = sbr.rel (0) target = $region149
    $region148: #{forward.1} parent=1 // pred_region
      %345 = dma.done [#allocation20], 128
    $region149: #{forward.1} parent=1 // pred_fallthru
      _
    // Predicated region
    $region150: #{forward.1} parent=1 // pred_check
      _
    $region151: #{forward.1} parent=1 // pred_check_branch
      %347 = sbr.rel (0) target = $region153
    $region152: #{forward.1} parent=1 // pred_region
      %348 = dma.done [#allocation23], 16384
    $region153: #{forward.1} parent=1 // pred_fallthru
      _
    // Predicated region
    $region154: #{forward.1} parent=1 // pred_check
      _
    $region155: #{forward.1} parent=1 // pred_check_branch
      %350 = sbr.rel (0) target = $region157
    $region156: #{forward.1} parent=1 // pred_region
      %351 = dma.done [#allocation23], 256
    $region157: #{forward.1} parent=1 // pred_fallthru
      _
    // Predicated region
    $region158: #{forward.1} parent=1 // pred_check
      _
    $region159: #{forward.1} parent=1 // pred_check_branch
      %353 = sbr.rel (0) target = $region161
    $region160: #{forward.1} parent=1 // pred_region
      %354 = dma.done [#allocation26], 256
    $region161: #{forward.1} parent=1 // pred_fallthru
      _
    // Predicated region
    $region162: #{forward.1} parent=1 // pred_check
      _
    $region163: #{forward.1} parent=1 // pred_check_branch
      %356 = sbr.rel (0) target = $region165
    $region164: #{forward.1} parent=1 // pred_region
      %357 = dma.done [#allocation26], 256
    $region165: #{forward.1} parent=1 // pred_fallthru
      _
    // Predicated region
    $region166: #{forward.1} parent=1 // pred_check
      _
    $region167: #{forward.1} parent=1 // pred_check_branch
      %359 = sbr.rel (0) target = $region169
    $region168: #{forward.1} parent=1 // pred_region
      %360 = dma.done [#allocation29], 8192
    $region169: #{forward.1} parent=1 // pred_fallthru
      _
    // Predicated region
    $region170: #{forward.1} parent=1 // pred_check
      _
    $region171: #{forward.1} parent=1 // pred_check_branch
      %362 = sbr.rel (0) target = $region173
    $region172: #{forward.1} parent=1 // pred_region
      %363 = dma.done [#allocation29], 64
    $region173: #{forward.1} parent=1 // pred_fallthru
      _
    // Predicated region
    $region174: #{forward.1} parent=1 // pred_check
      _
    $region175: #{forward.1} parent=1 // pred_check_branch
      %365 = sbr.rel (0) target = $region177
    $region176: #{forward.1} parent=1 // pred_region
      %366 = dma.done [#allocation32], 64
    $region177: #{forward.1} parent=1 // pred_fallthru
      _
    // Predicated region
    $region178: #{forward.1} parent=1 // pred_check
      _
    $region179: #{forward.1} parent=1 // pred_check_branch
      %368 = sbr.rel (0) target = $region181
    $region180: #{forward.1} parent=1 // pred_region
      %369 = dma.done [#allocation32], 64
    $region181: #{forward.1} parent=1 // pred_fallthru
      _
    // Predicated region
    $region182: #{forward.1} parent=1 // pred_check
      _
    $region183: #{forward.1} parent=1 // pred_check_branch
      %371 = sbr.rel (0) target = $region185
    $region184: #{forward.1} parent=1 // pred_region
      %372 = dma.done [#allocation35], 8192
    $region185: #{forward.1} parent=1 // pred_fallthru
      _
    // Predicated region
    $region186: #{forward.1} parent=1 // pred_check
      _
    $region187: #{forward.1} parent=1 // pred_check_branch
      %374 = sbr.rel (0) target = $region189
    $region188: #{forward.1} parent=1 // pred_region
      %375 = dma.done [#allocation35], 32
    $region189: #{forward.1} parent=1 // pred_fallthru
      _
    %v377 = vld [vmem:[#allocation4] sm:$0x3]
    %v378 = vld [vmem:[#allocation6] sm:$0xff]
    %v379 = vld [vmem:[#allocation6 + $0x8] sm:$0xff]
    %v380 = vld [vmem:[#allocation6 + $0x10] sm:$0xff]
    %v381 = vld [vmem:[#allocation6 + $0x18] sm:$0xff]
    %v382 = vld [vmem:[#allocation6 + $0x20] sm:$0xf]
    %v383 = vld [vmem:[#allocation6 + $0x28] sm:$0xf]
    %v384 = vld [vmem:[#allocation6 + $0x30] sm:$0xf]
    %v385 = vld [vmem:[#allocation6 + $0x38] sm:$0xf]
    %v386 = vld [vmem:[#allocation7] sm:$0xf]
    %v388 = vlaneseq
    %v389 = vshrl.u32 %v388, 7
    %v390 = vsub.s32 0, %v389
    %v391 = vrot.slane %v386, %v390
    %v392 = vlaneseq
    %v393 = vshrl.u32 %v392, 7
    %v394 = vsub.s32 1, %v393
    %v395 = vrot.slane %v386, %v394
    %v396 = vlaneseq
    %v397 = vshrl.u32 %v396, 7
    %v398 = vsub.s32 2, %v397
    %v399 = vrot.slane %v386, %v398
    %v400 = vlaneseq
    %v401 = vshrl.u32 %v400, 7
    %v402 = vsub.s32 3, %v401
    %v403 = vrot.slane %v386, %v402
    %vm408 = vcmask 97280
    %v410 = vsel %vm408, %v377, 0
    %vm412 = vcmask 1043456
    %v414 = vsel %vm412, %v382, 0
    %v417 = vsel %vm412, %v383, 0
    %v420 = vsel %vm412, %v384, 0
    %v423 = vsel %vm412, %v385, 0
    %425 = vmatprep.subr.mxu0 %v379
    %426 = vmatpush1.msra.mxu0 %v378
    %427 = vmatprep.subr.mxu0 %v417
    %428 = vmatpush1.msra.mxu0 %v414
    %429 = vmatprep.subr.mxu0 0.0
    %430 = vmatpush1.msra.mxu0 0.0
    %431 = vmatprep.subr.mxu0 0.0
    %432 = vmatpush1.msra.mxu0 0.0
    %433 = vmatprep.subr.mxu0 0.0
    %434 = vmatpush1.msra.mxu0 0.0
    %435 = vmatprep.subr.mxu0 0.0
    %436 = vmatpush1.msra.mxu0 0.0
    %437 = vmatprep.subr.mxu0 0.0
    %438 = vmatpush1.msra.mxu0 0.0
    %439 = vmatprep.subr.mxu0 0.0
    %440 = vmatpush1.msra.mxu0 0.0
    %441 = vmatprep.subr.mxu0 0.0
    %442 = vmatpush1.msra.mxu0 0.0
    %443 = vmatprep.subr.mxu0 0.0
    %444 = vmatpush1.msra.mxu0 0.0
    %445 = vmatprep.subr.mxu0 0.0
    %446 = vmatpush1.msra.mxu0 0.0
    %447 = vmatprep.subr.mxu0 0.0
    %448 = vmatpush1.msra.mxu0 0.0
    %449 = vmatprep.subr.mxu0 0.0
    %450 = vmatpush1.msra.mxu0 0.0
    %451 = vmatprep.subr.mxu0 0.0
    %452 = vmatpush1.msra.mxu0 0.0
    %453 = vmatprep.subr.mxu0 0.0
    %454 = vmatpush1.msra.mxu0 0.0
    %455 = vmatprep.subr.mxu0 0.0
    %456 = vmatpush1.msra.mxu0 0.0
    %457 = vmatprep.subr.mxu0 0.0
    %458 = vmatpush1.msra.mxu0 0.0
    %459 = vmatprep.subr.mxu0 0.0
    %460 = vmatpush1.msra.mxu0 0.0
    %461 = vmatprep.subr.mxu0 0.0
    %462 = vmatpush1.msra.mxu0 0.0
    %463 = vmatprep.subr.mxu0 0.0
    %464 = vmatpush1.msra.mxu0 0.0
    %465 = vmatprep.subr.mxu0 0.0
    %466 = vmatpush1.msra.mxu0 0.0
    %467 = vmatprep.subr.mxu0 0.0
    %468 = vmatpush1.msra.mxu0 0.0
    %469 = vmatprep.subr.mxu0 0.0
    %470 = vmatpush1.msra.mxu0 0.0
    %471 = vmatprep.subr.mxu0 0.0
    %472 = vmatpush1.msra.mxu0 0.0
    %473 = vmatprep.subr.mxu0 0.0
    %474 = vmatpush1.msra.mxu0 0.0
    %475 = vmatprep.subr.mxu0 0.0
    %476 = vmatpush1.msra.mxu0 0.0
    %477 = vmatprep.subr.mxu0 0.0
    %478 = vmatpush1.msra.mxu0 0.0
    %479 = vmatprep.subr.mxu0 0.0
    %480 = vmatpush1.msra.mxu0 0.0
    %481 = vmatprep.subr.mxu0 0.0
    %482 = vmatpush1.msra.mxu0 0.0
    %483 = vmatprep.subr.mxu0 0.0
    %484 = vmatpush1.msra.mxu0 0.0
    %485 = vmatprep.subr.mxu0 0.0
    %486 = vmatpush1.msra.mxu0 0.0
    %487 = vmatprep.subr.mxu0 0.0
    %488 = vmatpush1.msra.mxu0 0.0
    %489 = vmatprep.mubr.f32.mxu0 0.0
    %490 = vmatmul.mubr.f32.gmra.mrb[0].mxu0 %v410
    %v491 = vpop.f32.mrb[0].mxu0
    %v492 = vadd.f32 %v391, %v491
    %v493 = vpop.f32.mrb[0].mxu0
    %v494 = vadd.f32 %v395, %v493
    %495 = vdwg.mxu0
    %496 = vmatprep.subr.mxu0 %v381
    %497 = vmatpush1.msra.mxu0 %v380
    %498 = vmatprep.subr.mxu0 %v423
    %499 = vmatpush1.msra.mxu0 %v420
    %500 = vmatprep.subr.mxu0 0.0
    %501 = vmatpush1.msra.mxu0 0.0
    %502 = vmatprep.subr.mxu0 0.0
    %503 = vmatpush1.msra.mxu0 0.0
    %504 = vmatprep.subr.mxu0 0.0
    %505 = vmatpush1.msra.mxu0 0.0
    %506 = vmatprep.subr.mxu0 0.0
    %507 = vmatpush1.msra.mxu0 0.0
    %508 = vmatprep.subr.mxu0 0.0
    %509 = vmatpush1.msra.mxu0 0.0
    %510 = vmatprep.subr.mxu0 0.0
    %511 = vmatpush1.msra.mxu0 0.0
    %512 = vmatprep.subr.mxu0 0.0
    %513 = vmatpush1.msra.mxu0 0.0
    %514 = vmatprep.subr.mxu0 0.0
    %515 = vmatpush1.msra.mxu0 0.0
    %516 = vmatprep.subr.mxu0 0.0
    %517 = vmatpush1.msra.mxu0 0.0
    %518 = vmatprep.subr.mxu0 0.0
    %519 = vmatpush1.msra.mxu0 0.0
    %520 = vmatprep.subr.mxu0 0.0
    %521 = vmatpush1.msra.mxu0 0.0
    %522 = vmatprep.subr.mxu0 0.0
    %523 = vmatpush1.msra.mxu0 0.0
    %524 = vmatprep.subr.mxu0 0.0
    %525 = vmatpush1.msra.mxu0 0.0
    %526 = vmatprep.subr.mxu0 0.0
    %527 = vmatpush1.msra.mxu0 0.0
    %528 = vmatprep.subr.mxu0 0.0
    %529 = vmatpush1.msra.mxu0 0.0
    %530 = vmatprep.subr.mxu0 0.0
    %531 = vmatpush1.msra.mxu0 0.0
    %532 = vmatprep.subr.mxu0 0.0
    %533 = vmatpush1.msra.mxu0 0.0
    %534 = vmatprep.subr.mxu0 0.0
    %535 = vmatpush1.msra.mxu0 0.0
    %536 = vmatprep.subr.mxu0 0.0
    %537 = vmatpush1.msra.mxu0 0.0
    %538 = vmatprep.subr.mxu0 0.0
    %539 = vmatpush1.msra.mxu0 0.0
    %540 = vmatprep.subr.mxu0 0.0
    %541 = vmatpush1.msra.mxu0 0.0
    %542 = vmatprep.subr.mxu0 0.0
    %543 = vmatpush1.msra.mxu0 0.0
    %544 = vmatprep.subr.mxu0 0.0
    %545 = vmatpush1.msra.mxu0 0.0
    %546 = vmatprep.subr.mxu0 0.0
    %547 = vmatpush1.msra.mxu0 0.0
    %548 = vmatprep.subr.mxu0 0.0
    %549 = vmatpush1.msra.mxu0 0.0
    %550 = vmatprep.subr.mxu0 0.0
    %551 = vmatpush1.msra.mxu0 0.0
    %552 = vmatprep.subr.mxu0 0.0
    %553 = vmatpush1.msra.mxu0 0.0
    %554 = vmatprep.subr.mxu0 0.0
    %555 = vmatpush1.msra.mxu0 0.0
    %556 = vmatprep.subr.mxu0 0.0
    %557 = vmatpush1.msra.mxu0 0.0
    %558 = vmatprep.subr.mxu0 0.0
    %559 = vmatpush1.msra.mxu0 0.0
    %560 = vmatprep.mubr.f32.mxu0 0.0
    %561 = vmatmul.mubr.f32.gmra.mrb[0].mxu0 %v410
    %v562 = vpop.f32.mrb[0].mxu0
    %v563 = vadd.f32 %v399, %v562
    %v564 = vpop.f32.mrb[0].mxu0
    %v565 = vadd.f32 %v403, %v564
    %566 = vdwg.mxu0
    %v569 = vcombine.low %v492, %v494
    %v571 = vunpack.c.l.s4 1966171168
    %v572 = vunpack.c.0.s8 %v571
    %v573 = vlaneseq
    %v574 = vshrl.u32 %v573, 7
    %v575 = vsub.s32 %v572, %v574
    %v576 = vrot.slane %v569, %v575
    %v577 = vcombine.high %v576, %v576
    %v579 = vunpack.c.l.s4 1966171168
    %v580 = vunpack.c.0.s8 %v579
    %v581 = vlaneseq
    %v582 = vshrl.u32 %v581, 7
    %v583 = vsub.s32 %v580, %v582
    %v584 = vrot.slane %v576, %v583
    %v586 = vunpack.c.l.s4 1966171168
    %v587 = vunpack.c.0.s8 %v586
    %v588 = vlaneseq
    %v589 = vshrl.u32 %v588, 7
    %v590 = vsub.s32 %v587, %v589
    %v591 = vrot.slane %v577, %v590
    %v594 = vcombine.low %v563, %v565
    %v596 = vunpack.c.l.s4 1966171168
    %v597 = vunpack.c.0.s8 %v596
    %v598 = vlaneseq
    %v599 = vshrl.u32 %v598, 7
    %v600 = vsub.s32 %v597, %v599
    %v601 = vrot.slane %v594, %v600
    %v602 = vcombine.high %v601, %v601
    %v604 = vunpack.c.l.s4 1966171168
    %v605 = vunpack.c.0.s8 %v604
    %v606 = vlaneseq
    %v607 = vshrl.u32 %v606, 7
    %v608 = vsub.s32 %v605, %v607
    %v609 = vrot.slane %v601, %v608
    %v611 = vunpack.c.l.s4 1966171168
    %v612 = vunpack.c.0.s8 %v611
    %v613 = vlaneseq
    %v614 = vshrl.u32 %v613, 7
    %v615 = vsub.s32 %v612, %v614
    %v616 = vrot.slane %v602, %v615
    %v617 = vld [vmem:[#allocation2] sm:$0xff]
    %v618 = vld [vmem:[#allocation2 + $0x8] sm:$0xff]
    %v619 = vld [vmem:[#allocation9] sm:$0xff]
    %v620 = vld [vmem:[#allocation9 + $0x8] sm:$0xff]
    %v621 = vld [vmem:[#allocation9 + $0x10] sm:$0xff]
    %v622 = vld [vmem:[#allocation9 + $0x18] sm:$0xff]
    %v623 = vld [vmem:[#allocation9 + $0x20] sm:$0x3f]
    %v624 = vld [vmem:[#allocation9 + $0x28] sm:$0x3f]
    %vm625 = vcmask 179200
    %v627 = vsel %vm625, %v617, 0
    %v630 = vsel %vm625, %v618, 0
    %vm632 = vcmask 1045504
    %v634 = vsel %vm632, %v623, 0
    %v637 = vsel %vm632, %v624, 0
    %639 = vmatprep.subr.mxu0 %v620
    %640 = vmatpush1.msra.mxu0 %v619
    %641 = vmatprep.subr.mxu0 %v622
    %642 = vmatpush1.msra.mxu0 %v621
    %643 = vmatprep.subr.mxu0 %v637
    %644 = vmatpush1.msra.mxu0 %v634
    %645 = vmatprep.subr.mxu0 0.0
    %646 = vmatpush1.msra.mxu0 0.0
    %647 = vmatprep.subr.mxu0 0.0
    %648 = vmatpush1.msra.mxu0 0.0
    %649 = vmatprep.subr.mxu0 0.0
    %650 = vmatpush1.msra.mxu0 0.0
    %651 = vmatprep.subr.mxu0 0.0
    %652 = vmatpush1.msra.mxu0 0.0
    %653 = vmatprep.subr.mxu0 0.0
    %654 = vmatpush1.msra.mxu0 0.0
    %655 = vmatprep.subr.mxu0 0.0
    %656 = vmatpush1.msra.mxu0 0.0
    %657 = vmatprep.subr.mxu0 0.0
    %658 = vmatpush1.msra.mxu0 0.0
    %659 = vmatprep.subr.mxu0 0.0
    %660 = vmatpush1.msra.mxu0 0.0
    %661 = vmatprep.subr.mxu0 0.0
    %662 = vmatpush1.msra.mxu0 0.0
    %663 = vmatprep.subr.mxu0 0.0
    %664 = vmatpush1.msra.mxu0 0.0
    %665 = vmatprep.subr.mxu0 0.0
    %666 = vmatpush1.msra.mxu0 0.0
    %667 = vmatprep.subr.mxu0 0.0
    %668 = vmatpush1.msra.mxu0 0.0
    %669 = vmatprep.subr.mxu0 0.0
    %670 = vmatpush1.msra.mxu0 0.0
    %671 = vmatprep.subr.mxu0 0.0
    %672 = vmatpush1.msra.mxu0 0.0
    %673 = vmatprep.subr.mxu0 0.0
    %674 = vmatpush1.msra.mxu0 0.0
    %675 = vmatprep.subr.mxu0 0.0
    %676 = vmatpush1.msra.mxu0 0.0
    %677 = vmatprep.subr.mxu0 0.0
    %678 = vmatpush1.msra.mxu0 0.0
    %679 = vmatprep.subr.mxu0 0.0
    %680 = vmatpush1.msra.mxu0 0.0
    %681 = vmatprep.subr.mxu0 0.0
    %682 = vmatpush1.msra.mxu0 0.0
    %683 = vmatprep.subr.mxu0 0.0
    %684 = vmatpush1.msra.mxu0 0.0
    %685 = vmatprep.subr.mxu0 0.0
    %686 = vmatpush1.msra.mxu0 0.0
    %687 = vmatprep.subr.mxu0 0.0
    %688 = vmatpush1.msra.mxu0 0.0
    %689 = vmatprep.subr.mxu0 0.0
    %690 = vmatpush1.msra.mxu0 0.0
    %691 = vmatprep.subr.mxu0 0.0
    %692 = vmatpush1.msra.mxu0 0.0
    %693 = vmatprep.subr.mxu0 0.0
    %694 = vmatpush1.msra.mxu0 0.0
    %695 = vmatprep.subr.mxu0 0.0
    %696 = vmatpush1.msra.mxu0 0.0
    %697 = vmatprep.subr.mxu0 0.0
    %698 = vmatpush1.msra.mxu0 0.0
    %699 = vmatprep.subr.mxu0 0.0
    %700 = vmatpush1.msra.mxu0 0.0
    %701 = vmatprep.subr.mxu0 0.0
    %702 = vmatpush1.msra.mxu0 0.0
    %703 = vmatprep.mubr.f32.mxu0 0.0
    %704 = vmatmul.mubr.f32.gmra.mrb[0].mxu0 %v627
    %v705 = vpop.f32.mrb[0].mxu0
    %v706 = vadd.f32 0.0, %v705
    %v707 = vpop.f32.mrb[0].mxu0
    %v708 = vadd.f32 0.0, %v707
    %709 = vmatprep.mubr.f32.mxu0 0.0
    %710 = vmatmul.mubr.f32.gmra.mrb[0].mxu0 %v630
    %v711 = vpop.f32.mrb[0].mxu0
    %v712 = vadd.f32 0.0, %v711
    %v713 = vpop.f32.mrb[0].mxu0
    %v714 = vadd.f32 0.0, %v713
    %715 = vdwg.mxu0
    %v716 = vld [vmem:[%s2] sm:$0xff]
    %v717 = vld [vmem:[%s2 + $0x8] sm:$0xff]
    %v718 = vadd.f32 %v706, %v716
    %v719 = vadd.f32 %v708, %v717
    %v720 = vadd.f32 %v712, %v716
    %v721 = vadd.f32 %v714, %v717
    %v722 = vlaneseq
    %v723 = vshrl.u32 %v722, 7
    %v724 = vsub.s32 0, %v723
    %v725 = vrot.slane %v584, %v724
    %v726 = vlaneseq
    %v727 = vshrl.u32 %v726, 7
    %v728 = vsub.s32 1, %v727
    %v729 = vrot.slane %v584, %v728
    %v730 = vlaneseq
    %v731 = vshrl.u32 %v730, 7
    %v732 = vsub.s32 0, %v731
    %v733 = vrot.slane %v591, %v732
    %v734 = vlaneseq
    %v735 = vshrl.u32 %v734, 7
    %v736 = vsub.s32 1, %v735
    %v737 = vrot.slane %v591, %v736
    %v742 = vmul.f32 %v718, %v725
    %v743 = vmul.f32 %v719, %v729
    %v744 = vmul.f32 %v720, %v733
    %v745 = vmul.f32 %v721, %v737
    %v746 = vlaneseq
    %v747 = vshrl.u32 %v746, 7
    %v748 = vsub.s32 0, %v747
    %v749 = vrot.slane %v609, %v748
    %v750 = vlaneseq
    %v751 = vshrl.u32 %v750, 7
    %v752 = vsub.s32 1, %v751
    %v753 = vrot.slane %v609, %v752
    %v754 = vlaneseq
    %v755 = vshrl.u32 %v754, 7
    %v756 = vsub.s32 0, %v755
    %v757 = vrot.slane %v616, %v756
    %v758 = vlaneseq
    %v759 = vshrl.u32 %v758, 7
    %v760 = vsub.s32 1, %v759
    %v761 = vrot.slane %v616, %v760
    %v766 = vadd.f32 %v742, %v749
    %v767 = vadd.f32 %v743, %v753
    %v768 = vadd.f32 %v744, %v757
    %v769 = vadd.f32 %v745, %v761
    loop: start=0, step=1, limit=8
    $region190: #{forward.1} parent=1 // loop_pre_header
      _
    $region191: #{forward.1} parent=1 // loop_header
      %s771 = sphi 0, %s775
      %p772 = scmp.ge.s32.totalorder %s771, 8
      %v776 = vphi %v766, %v4094
      %v777 = vphi %v767, %v4095
      %v778 = vphi %v768, %v4096
      %v779 = vphi %v769, %v4097
    $region192: #{forward.1} parent=1 // loop_header_branch
      %774 = sbr.rel (%p772) target = $region196
    $region193: #{forward.1} parent=1 // loop_body
      %v780 = vpack.c.bf16 %v778, %v776
      %v781 = vpack.c.bf16 %v779, %v777
      %s782 = smul.u32 %s771, 192
      %s783 = smul.addr %s782, 4
      %s784 = scalar_lea.vmem [#allocation10], %s783
      %v785 = vld [vmem:[%s784] sm:$0xff]
      %v786 = vld [vmem:[%s784 + $0x8] sm:$0xff]
      %v787 = vld [vmem:[%s784 + $0x10] sm:$0xff]
      %v788 = vld [vmem:[%s784 + $0x18] sm:$0xff]
      %v789 = vld [vmem:[%s784 + $0x20] sm:$0xff]
      %v790 = vld [vmem:[%s784 + $0x28] sm:$0xff]
      %v791 = vld [vmem:[%s784 + $0x30] sm:$0xff]
      %v792 = vld [vmem:[%s784 + $0x38] sm:$0xff]
      %v793 = vld [vmem:[%s784 + $0x40] sm:$0xff]
      %v794 = vld [vmem:[%s784 + $0x48] sm:$0xff]
      %v795 = vld [vmem:[%s784 + $0x50] sm:$0xff]
      %v796 = vld [vmem:[%s784 + $0x58] sm:$0xff]
      %v797 = vld [vmem:[%s784 + $0x60] sm:$0xff]
      %v798 = vld [vmem:[%s784 + $0x68] sm:$0xff]
      %v799 = vld [vmem:[%s784 + $0x70] sm:$0xff]
      %v800 = vld [vmem:[%s784 + $0x78] sm:$0xff]
      %v801 = vld [vmem:[%s784 + $0x80] sm:$0xff]
      %v802 = vld [vmem:[%s784 + $0x88] sm:$0xff]
      %v803 = vld [vmem:[%s784 + $0x90] sm:$0xff]
      %v804 = vld [vmem:[%s784 + $0x98] sm:$0xff]
      %v805 = vld [vmem:[%s784 + $0xa0] sm:$0xff]
      %v806 = vld [vmem:[%s784 + $0xa8] sm:$0xff]
      %v807 = vld [vmem:[%s784 + $0xb0] sm:$0xff]
      %v808 = vld [vmem:[%s784 + $0xb8] sm:$0xff]
      %v809 = vld [vmem:[%s784 + $0xc0] sm:$0xff]
      %v810 = vld [vmem:[%s784 + $0xc8] sm:$0xff]
      %v811 = vld [vmem:[%s784 + $0xd0] sm:$0xff]
      %v812 = vld [vmem:[%s784 + $0xd8] sm:$0xff]
      %v813 = vld [vmem:[%s784 + $0xe0] sm:$0xff]
      %v814 = vld [vmem:[%s784 + $0xe8] sm:$0xff]
      %v815 = vld [vmem:[%s784 + $0xf0] sm:$0xff]
      %v816 = vld [vmem:[%s784 + $0xf8] sm:$0xff]
      %v817 = vld [vmem:[%s784 + $0x100] sm:$0xff]
      %v818 = vld [vmem:[%s784 + $0x108] sm:$0xff]
      %v819 = vld [vmem:[%s784 + $0x110] sm:$0xff]
      %v820 = vld [vmem:[%s784 + $0x118] sm:$0xff]
      %v821 = vld [vmem:[%s784 + $0x120] sm:$0xff]
      %v822 = vld [vmem:[%s784 + $0x128] sm:$0xff]
      %v823 = vld [vmem:[%s784 + $0x130] sm:$0xff]
      %v824 = vld [vmem:[%s784 + $0x138] sm:$0xff]
      %v825 = vld [vmem:[%s784 + $0x140] sm:$0xff]
      %v826 = vld [vmem:[%s784 + $0x148] sm:$0xff]
      %v827 = vld [vmem:[%s784 + $0x150] sm:$0xff]
      %v828 = vld [vmem:[%s784 + $0x158] sm:$0xff]
      %v829 = vld [vmem:[%s784 + $0x160] sm:$0xff]
      %v830 = vld [vmem:[%s784 + $0x168] sm:$0xff]
      %v831 = vld [vmem:[%s784 + $0x170] sm:$0xff]
      %v832 = vld [vmem:[%s784 + $0x178] sm:$0xff]
      %v833 = vld [vmem:[%s784 + $0x180] sm:$0xff]
      %v834 = vld [vmem:[%s784 + $0x188] sm:$0xff]
      %v835 = vld [vmem:[%s784 + $0x190] sm:$0xff]
      %v836 = vld [vmem:[%s784 + $0x198] sm:$0xff]
      %v837 = vld [vmem:[%s784 + $0x1a0] sm:$0xff]
      %v838 = vld [vmem:[%s784 + $0x1a8] sm:$0xff]
      %v839 = vld [vmem:[%s784 + $0x1b0] sm:$0xff]
      %v840 = vld [vmem:[%s784 + $0x1b8] sm:$0xff]
      %v841 = vld [vmem:[%s784 + $0x1c0] sm:$0xff]
      %v842 = vld [vmem:[%s784 + $0x1c8] sm:$0xff]
      %v843 = vld [vmem:[%s784 + $0x1d0] sm:$0xff]
      %v844 = vld [vmem:[%s784 + $0x1d8] sm:$0xff]
      %v845 = vld [vmem:[%s784 + $0x1e0] sm:$0xff]
      %v846 = vld [vmem:[%s784 + $0x1e8] sm:$0xff]
      %v847 = vld [vmem:[%s784 + $0x1f0] sm:$0xff]
      %v848 = vld [vmem:[%s784 + $0x1f8] sm:$0xff]
      %v849 = vld [vmem:[%s784 + $0x200] sm:$0xff]
      %v850 = vld [vmem:[%s784 + $0x208] sm:$0xff]
      %v851 = vld [vmem:[%s784 + $0x210] sm:$0xff]
      %v852 = vld [vmem:[%s784 + $0x218] sm:$0xff]
      %v853 = vld [vmem:[%s784 + $0x220] sm:$0xff]
      %v854 = vld [vmem:[%s784 + $0x228] sm:$0xff]
      %v855 = vld [vmem:[%s784 + $0x230] sm:$0xff]
      %v856 = vld [vmem:[%s784 + $0x238] sm:$0xff]
      %v857 = vld [vmem:[%s784 + $0x240] sm:$0xff]
      %v858 = vld [vmem:[%s784 + $0x248] sm:$0xff]
      %v859 = vld [vmem:[%s784 + $0x250] sm:$0xff]
      %v860 = vld [vmem:[%s784 + $0x258] sm:$0xff]
      %v861 = vld [vmem:[%s784 + $0x260] sm:$0xff]
      %v862 = vld [vmem:[%s784 + $0x268] sm:$0xff]
      %v863 = vld [vmem:[%s784 + $0x270] sm:$0xff]
      %v864 = vld [vmem:[%s784 + $0x278] sm:$0xff]
      %v865 = vld [vmem:[%s784 + $0x280] sm:$0xff]
      %v866 = vld [vmem:[%s784 + $0x288] sm:$0xff]
      %v867 = vld [vmem:[%s784 + $0x290] sm:$0xff]
      %v868 = vld [vmem:[%s784 + $0x298] sm:$0xff]
      %v869 = vld [vmem:[%s784 + $0x2a0] sm:$0xff]
      %v870 = vld [vmem:[%s784 + $0x2a8] sm:$0xff]
      %v871 = vld [vmem:[%s784 + $0x2b0] sm:$0xff]
      %v872 = vld [vmem:[%s784 + $0x2b8] sm:$0xff]
      %v873 = vld [vmem:[%s784 + $0x2c0] sm:$0xff]
      %v874 = vld [vmem:[%s784 + $0x2c8] sm:$0xff]
      %v875 = vld [vmem:[%s784 + $0x2d0] sm:$0xff]
      %v876 = vld [vmem:[%s784 + $0x2d8] sm:$0xff]
      %v877 = vld [vmem:[%s784 + $0x2e0] sm:$0xff]
      %v878 = vld [vmem:[%s784 + $0x2e8] sm:$0xff]
      %v879 = vld [vmem:[%s784 + $0x2f0] sm:$0xff]
      %v880 = vld [vmem:[%s784 + $0x2f8] sm:$0xff]
      %s881 = smul.u32 %s771, 6
      %s882 = scalar_lea.vmem [#allocation12], %s881
      %v883 = vld [vmem:[%s882] sm:$0x3f]
      %v885 = vlaneseq
      %v886 = vshrl.u32 %v885, 7
      %v887 = vsub.s32 0, %v886
      %v888 = vrot.slane %v883, %v887
      %v889 = vlaneseq
      %v890 = vshrl.u32 %v889, 7
      %v891 = vsub.s32 1, %v890
      %v892 = vrot.slane %v883, %v891
      %v893 = vlaneseq
      %v894 = vshrl.u32 %v893, 7
      %v895 = vsub.s32 2, %v894
      %v896 = vrot.slane %v883, %v895
      %v897 = vlaneseq
      %v898 = vshrl.u32 %v897, 7
      %v899 = vsub.s32 3, %v898
      %v900 = vrot.slane %v883, %v899
      %v901 = vlaneseq
      %v902 = vshrl.u32 %v901, 7
      %v903 = vsub.s32 4, %v902
      %v904 = vrot.slane %v883, %v903
      %v905 = vlaneseq
      %v906 = vshrl.u32 %v905, 7
      %v907 = vsub.s32 5, %v906
      %v908 = vrot.slane %v883, %v907
      %v1011 = vunpack.c.l.b16 %v785
      %v1012 = vunpack.c.h.b16 %v785
      %v1013 = vunpack.c.l.b16 %v786
      %v1014 = vunpack.c.h.b16 %v786
      %v1015 = vunpack.c.l.b16 %v787
      %v1016 = vunpack.c.h.b16 %v787
      %v1017 = vunpack.c.l.b16 %v788
      %v1018 = vunpack.c.h.b16 %v788
      %v1019 = vunpack.c.l.b16 %v789
      %v1020 = vunpack.c.h.b16 %v789
      %v1021 = vunpack.c.l.b16 %v790
      %v1022 = vunpack.c.h.b16 %v790
      %v1023 = vunpack.c.l.b16 %v791
      %v1024 = vunpack.c.h.b16 %v791
      %v1025 = vunpack.c.l.b16 %v792
      %v1026 = vunpack.c.h.b16 %v792
      %v1027 = vunpack.c.l.b16 %v793
      %v1028 = vunpack.c.h.b16 %v793
      %v1029 = vunpack.c.l.b16 %v794
      %v1030 = vunpack.c.h.b16 %v794
      %v1031 = vunpack.c.l.b16 %v795
      %v1032 = vunpack.c.h.b16 %v795
      %v1033 = vunpack.c.l.b16 %v796
      %v1034 = vunpack.c.h.b16 %v796
      %v1035 = vunpack.c.l.b16 %v797
      %v1036 = vunpack.c.h.b16 %v797
      %v1037 = vunpack.c.l.b16 %v798
      %v1038 = vunpack.c.h.b16 %v798
      %v1039 = vunpack.c.l.b16 %v799
      %v1040 = vunpack.c.h.b16 %v799
      %v1041 = vunpack.c.l.b16 %v800
      %v1042 = vunpack.c.h.b16 %v800
      %v1043 = vunpack.c.l.b16 %v801
      %v1044 = vunpack.c.h.b16 %v801
      %v1045 = vunpack.c.l.b16 %v802
      %v1046 = vunpack.c.h.b16 %v802
      %v1047 = vunpack.c.l.b16 %v803
      %v1048 = vunpack.c.h.b16 %v803
      %v1049 = vunpack.c.l.b16 %v804
      %v1050 = vunpack.c.h.b16 %v804
      %v1051 = vunpack.c.l.b16 %v805
      %v1052 = vunpack.c.h.b16 %v805
      %v1053 = vunpack.c.l.b16 %v806
      %v1054 = vunpack.c.h.b16 %v806
      %v1055 = vunpack.c.l.b16 %v807
      %v1056 = vunpack.c.h.b16 %v807
      %v1057 = vunpack.c.l.b16 %v808
      %v1058 = vunpack.c.h.b16 %v808
      %v1059 = vunpack.c.l.b16 %v809
      %v1060 = vunpack.c.h.b16 %v809
      %v1061 = vunpack.c.l.b16 %v810
      %v1062 = vunpack.c.h.b16 %v810
      %v1063 = vunpack.c.l.b16 %v811
      %v1064 = vunpack.c.h.b16 %v811
      %v1065 = vunpack.c.l.b16 %v812
      %v1066 = vunpack.c.h.b16 %v812
      %v1067 = vunpack.c.l.b16 %v813
      %v1068 = vunpack.c.h.b16 %v813
      %v1069 = vunpack.c.l.b16 %v814
      %v1070 = vunpack.c.h.b16 %v814
      %v1071 = vunpack.c.l.b16 %v815
      %v1072 = vunpack.c.h.b16 %v815
      %v1073 = vunpack.c.l.b16 %v816
      %v1074 = vunpack.c.h.b16 %v816
      %v1075 = vunpack.c.l.b16 %v817
      %v1076 = vunpack.c.h.b16 %v817
      %v1077 = vunpack.c.l.b16 %v818
      %v1078 = vunpack.c.h.b16 %v818
      %v1079 = vunpack.c.l.b16 %v819
      %v1080 = vunpack.c.h.b16 %v819
      %v1081 = vunpack.c.l.b16 %v820
      %v1082 = vunpack.c.h.b16 %v820
      %v1083 = vunpack.c.l.b16 %v821
      %v1084 = vunpack.c.h.b16 %v821
      %v1085 = vunpack.c.l.b16 %v822
      %v1086 = vunpack.c.h.b16 %v822
      %v1087 = vunpack.c.l.b16 %v823
      %v1088 = vunpack.c.h.b16 %v823
      %v1089 = vunpack.c.l.b16 %v824
      %v1090 = vunpack.c.h.b16 %v824
      %v1091 = vunpack.c.l.b16 %v825
      %v1092 = vunpack.c.h.b16 %v825
      %v1093 = vunpack.c.l.b16 %v826
      %v1094 = vunpack.c.h.b16 %v826
      %v1095 = vunpack.c.l.b16 %v827
      %v1096 = vunpack.c.h.b16 %v827
      %v1097 = vunpack.c.l.b16 %v828
      %v1098 = vunpack.c.h.b16 %v828
      %v1099 = vunpack.c.l.b16 %v829
      %v1100 = vunpack.c.h.b16 %v829
      %v1101 = vunpack.c.l.b16 %v830
      %v1102 = vunpack.c.h.b16 %v830
      %v1103 = vunpack.c.l.b16 %v831
      %v1104 = vunpack.c.h.b16 %v831
      %v1105 = vunpack.c.l.b16 %v832
      %v1106 = vunpack.c.h.b16 %v832
      %v1107 = vunpack.c.l.b16 %v833
      %v1108 = vunpack.c.h.b16 %v833
      %v1109 = vunpack.c.l.b16 %v834
      %v1110 = vunpack.c.h.b16 %v834
      %v1111 = vunpack.c.l.b16 %v835
      %v1112 = vunpack.c.h.b16 %v835
      %v1113 = vunpack.c.l.b16 %v836
      %v1114 = vunpack.c.h.b16 %v836
      %v1115 = vunpack.c.l.b16 %v837
      %v1116 = vunpack.c.h.b16 %v837
      %v1117 = vunpack.c.l.b16 %v838
      %v1118 = vunpack.c.h.b16 %v838
      %v1119 = vunpack.c.l.b16 %v839
      %v1120 = vunpack.c.h.b16 %v839
      %v1121 = vunpack.c.l.b16 %v840
      %v1122 = vunpack.c.h.b16 %v840
      %v1123 = vunpack.c.l.b16 %v841
      %v1124 = vunpack.c.h.b16 %v841
      %v1125 = vunpack.c.l.b16 %v842
      %v1126 = vunpack.c.h.b16 %v842
      %v1127 = vunpack.c.l.b16 %v843
      %v1128 = vunpack.c.h.b16 %v843
      %v1129 = vunpack.c.l.b16 %v844
      %v1130 = vunpack.c.h.b16 %v844
      %v1131 = vunpack.c.l.b16 %v845
      %v1132 = vunpack.c.h.b16 %v845
      %v1133 = vunpack.c.l.b16 %v846
      %v1134 = vunpack.c.h.b16 %v846
      %v1135 = vunpack.c.l.b16 %v847
      %v1136 = vunpack.c.h.b16 %v847
      %v1137 = vunpack.c.l.b16 %v848
      %v1138 = vunpack.c.h.b16 %v848
      %v1139 = vunpack.c.l.b16 %v849
      %v1140 = vunpack.c.h.b16 %v849
      %v1141 = vunpack.c.l.b16 %v850
      %v1142 = vunpack.c.h.b16 %v850
      %v1143 = vunpack.c.l.b16 %v851
      %v1144 = vunpack.c.h.b16 %v851
      %v1145 = vunpack.c.l.b16 %v852
      %v1146 = vunpack.c.h.b16 %v852
      %v1147 = vunpack.c.l.b16 %v853
      %v1148 = vunpack.c.h.b16 %v853
      %v1149 = vunpack.c.l.b16 %v854
      %v1150 = vunpack.c.h.b16 %v854
      %v1151 = vunpack.c.l.b16 %v855
      %v1152 = vunpack.c.h.b16 %v855
      %v1153 = vunpack.c.l.b16 %v856
      %v1154 = vunpack.c.h.b16 %v856
      %v1155 = vunpack.c.l.b16 %v857
      %v1156 = vunpack.c.h.b16 %v857
      %v1157 = vunpack.c.l.b16 %v858
      %v1158 = vunpack.c.h.b16 %v858
      %v1159 = vunpack.c.l.b16 %v859
      %v1160 = vunpack.c.h.b16 %v859
      %v1161 = vunpack.c.l.b16 %v860
      %v1162 = vunpack.c.h.b16 %v860
      %v1163 = vunpack.c.l.b16 %v861
      %v1164 = vunpack.c.h.b16 %v861
      %v1165 = vunpack.c.l.b16 %v862
      %v1166 = vunpack.c.h.b16 %v862
      %v1167 = vunpack.c.l.b16 %v863
      %v1168 = vunpack.c.h.b16 %v863
      %v1169 = vunpack.c.l.b16 %v864
      %v1170 = vunpack.c.h.b16 %v864
      %v1171 = vunpack.c.l.b16 %v865
      %v1172 = vunpack.c.h.b16 %v865
      %v1173 = vunpack.c.l.b16 %v866
      %v1174 = vunpack.c.h.b16 %v866
      %v1175 = vunpack.c.l.b16 %v867
      %v1176 = vunpack.c.h.b16 %v867
      %v1177 = vunpack.c.l.b16 %v868
      %v1178 = vunpack.c.h.b16 %v868
      %v1179 = vunpack.c.l.b16 %v869
      %v1180 = vunpack.c.h.b16 %v869
      %v1181 = vunpack.c.l.b16 %v870
      %v1182 = vunpack.c.h.b16 %v870
      %v1183 = vunpack.c.l.b16 %v871
      %v1184 = vunpack.c.h.b16 %v871
      %v1185 = vunpack.c.l.b16 %v872
      %v1186 = vunpack.c.h.b16 %v872
      %v1187 = vunpack.c.l.b16 %v873
      %v1188 = vunpack.c.h.b16 %v873
      %v1189 = vunpack.c.l.b16 %v874
      %v1190 = vunpack.c.h.b16 %v874
      %v1191 = vunpack.c.l.b16 %v875
      %v1192 = vunpack.c.h.b16 %v875
      %v1193 = vunpack.c.l.b16 %v876
      %v1194 = vunpack.c.h.b16 %v876
      %v1195 = vunpack.c.l.b16 %v877
      %v1196 = vunpack.c.h.b16 %v877
      %v1197 = vunpack.c.l.b16 %v878
      %v1198 = vunpack.c.h.b16 %v878
      %v1199 = vunpack.c.l.b16 %v879
      %v1200 = vunpack.c.h.b16 %v879
      %v1201 = vunpack.c.l.b16 %v880
      %v1202 = vunpack.c.h.b16 %v880
      %v1203 = vpack.c.b16 %v1017, %v1011
      %v1204 = vpack.c.b16 %v1018, %v1012
      %v1205 = vpack.c.b16 %v1019, %v1013
      %v1206 = vpack.c.b16 %v1020, %v1014
      %v1207 = vpack.c.b16 %v1021, %v1015
      %v1208 = vpack.c.b16 %v1022, %v1016
      %v1209 = vpack.c.b16 %v1029, %v1023
      %v1210 = vpack.c.b16 %v1030, %v1024
      %v1211 = vpack.c.b16 %v1031, %v1025
      %v1212 = vpack.c.b16 %v1032, %v1026
      %v1213 = vpack.c.b16 %v1033, %v1027
      %v1214 = vpack.c.b16 %v1034, %v1028
      %v1215 = vpack.c.b16 %v1041, %v1035
      %v1216 = vpack.c.b16 %v1042, %v1036
      %v1217 = vpack.c.b16 %v1043, %v1037
      %v1218 = vpack.c.b16 %v1044, %v1038
      %v1219 = vpack.c.b16 %v1045, %v1039
      %v1220 = vpack.c.b16 %v1046, %v1040
      %v1221 = vpack.c.b16 %v1053, %v1047
      %v1222 = vpack.c.b16 %v1054, %v1048
      %v1223 = vpack.c.b16 %v1055, %v1049
      %v1224 = vpack.c.b16 %v1056, %v1050
      %v1225 = vpack.c.b16 %v1057, %v1051
      %v1226 = vpack.c.b16 %v1058, %v1052
      %v1227 = vpack.c.b16 %v1065, %v1059
      %v1228 = vpack.c.b16 %v1066, %v1060
      %v1229 = vpack.c.b16 %v1067, %v1061
      %v1230 = vpack.c.b16 %v1068, %v1062
      %v1231 = vpack.c.b16 %v1069, %v1063
      %v1232 = vpack.c.b16 %v1070, %v1064
      %v1233 = vpack.c.b16 %v1077, %v1071
      %v1234 = vpack.c.b16 %v1078, %v1072
      %v1235 = vpack.c.b16 %v1079, %v1073
      %v1236 = vpack.c.b16 %v1080, %v1074
      %v1237 = vpack.c.b16 %v1081, %v1075
      %v1238 = vpack.c.b16 %v1082, %v1076
      %v1239 = vpack.c.b16 %v1089, %v1083
      %v1240 = vpack.c.b16 %v1090, %v1084
      %v1241 = vpack.c.b16 %v1091, %v1085
      %v1242 = vpack.c.b16 %v1092, %v1086
      %v1243 = vpack.c.b16 %v1093, %v1087
      %v1244 = vpack.c.b16 %v1094, %v1088
      %v1245 = vpack.c.b16 %v1101, %v1095
      %v1246 = vpack.c.b16 %v1102, %v1096
      %v1247 = vpack.c.b16 %v1103, %v1097
      %v1248 = vpack.c.b16 %v1104, %v1098
      %v1249 = vpack.c.b16 %v1105, %v1099
      %v1250 = vpack.c.b16 %v1106, %v1100
      %v1251 = vpack.c.b16 %v1113, %v1107
      %v1252 = vpack.c.b16 %v1114, %v1108
      %v1253 = vpack.c.b16 %v1115, %v1109
      %v1254 = vpack.c.b16 %v1116, %v1110
      %v1255 = vpack.c.b16 %v1117, %v1111
      %v1256 = vpack.c.b16 %v1118, %v1112
      %v1257 = vpack.c.b16 %v1125, %v1119
      %v1258 = vpack.c.b16 %v1126, %v1120
      %v1259 = vpack.c.b16 %v1127, %v1121
      %v1260 = vpack.c.b16 %v1128, %v1122
      %v1261 = vpack.c.b16 %v1129, %v1123
      %v1262 = vpack.c.b16 %v1130, %v1124
      %v1263 = vpack.c.b16 %v1137, %v1131
      %v1264 = vpack.c.b16 %v1138, %v1132
      %v1265 = vpack.c.b16 %v1139, %v1133
      %v1266 = vpack.c.b16 %v1140, %v1134
      %v1267 = vpack.c.b16 %v1141, %v1135
      %v1268 = vpack.c.b16 %v1142, %v1136
      %v1269 = vpack.c.b16 %v1149, %v1143
      %v1270 = vpack.c.b16 %v1150, %v1144
      %v1271 = vpack.c.b16 %v1151, %v1145
      %v1272 = vpack.c.b16 %v1152, %v1146
      %v1273 = vpack.c.b16 %v1153, %v1147
      %v1274 = vpack.c.b16 %v1154, %v1148
      %v1275 = vpack.c.b16 %v1161, %v1155
      %v1276 = vpack.c.b16 %v1162, %v1156
      %v1277 = vpack.c.b16 %v1163, %v1157
      %v1278 = vpack.c.b16 %v1164, %v1158
      %v1279 = vpack.c.b16 %v1165, %v1159
      %v1280 = vpack.c.b16 %v1166, %v1160
      %v1281 = vpack.c.b16 %v1173, %v1167
      %v1282 = vpack.c.b16 %v1174, %v1168
      %v1283 = vpack.c.b16 %v1175, %v1169
      %v1284 = vpack.c.b16 %v1176, %v1170
      %v1285 = vpack.c.b16 %v1177, %v1171
      %v1286 = vpack.c.b16 %v1178, %v1172
      %v1287 = vpack.c.b16 %v1185, %v1179
      %v1288 = vpack.c.b16 %v1186, %v1180
      %v1289 = vpack.c.b16 %v1187, %v1181
      %v1290 = vpack.c.b16 %v1188, %v1182
      %v1291 = vpack.c.b16 %v1189, %v1183
      %v1292 = vpack.c.b16 %v1190, %v1184
      %v1293 = vpack.c.b16 %v1197, %v1191
      %v1294 = vpack.c.b16 %v1198, %v1192
      %v1295 = vpack.c.b16 %v1199, %v1193
      %v1296 = vpack.c.b16 %v1200, %v1194
      %v1297 = vpack.c.b16 %v1201, %v1195
      %v1298 = vpack.c.b16 %v1202, %v1196
      %1395 = vmatprep.subr.bf16.mxu0 %v1204
      %1396 = vmatpush1.bf16.msra.mxu0 %v1203
      %1397 = vmatprep.subr.bf16.mxu0 %v1210
      %1398 = vmatpush1.bf16.msra.mxu0 %v1209
      %1399 = vmatprep.subr.bf16.mxu0 %v1216
      %1400 = vmatpush1.bf16.msra.mxu0 %v1215
      %1401 = vmatprep.subr.bf16.mxu0 %v1222
      %1402 = vmatpush1.bf16.msra.mxu0 %v1221
      %1403 = vmatprep.subr.bf16.mxu0 %v1228
      %1404 = vmatpush1.bf16.msra.mxu0 %v1227
      %1405 = vmatprep.subr.bf16.mxu0 %v1234
      %1406 = vmatpush1.bf16.msra.mxu0 %v1233
      %1407 = vmatprep.subr.bf16.mxu0 %v1240
      %1408 = vmatpush1.bf16.msra.mxu0 %v1239
      %1409 = vmatprep.subr.bf16.mxu0 %v1246
      %1410 = vmatpush1.bf16.msra.mxu0 %v1245
      %1411 = vmatprep.subr.bf16.mxu0 %v1252
      %1412 = vmatpush1.bf16.msra.mxu0 %v1251
      %1413 = vmatprep.subr.bf16.mxu0 %v1258
      %1414 = vmatpush1.bf16.msra.mxu0 %v1257
      %1415 = vmatprep.subr.bf16.mxu0 %v1264
      %1416 = vmatpush1.bf16.msra.mxu0 %v1263
      %1417 = vmatprep.subr.bf16.mxu0 %v1270
      %1418 = vmatpush1.bf16.msra.mxu0 %v1269
      %1419 = vmatprep.subr.bf16.mxu0 %v1276
      %1420 = vmatpush1.bf16.msra.mxu0 %v1275
      %1421 = vmatprep.subr.bf16.mxu0 %v1282
      %1422 = vmatpush1.bf16.msra.mxu0 %v1281
      %1423 = vmatprep.subr.bf16.mxu0 %v1288
      %1424 = vmatpush1.bf16.msra.mxu0 %v1287
      %1425 = vmatprep.subr.bf16.mxu0 %v1294
      %1426 = vmatpush1.bf16.msra.mxu0 %v1293
      %1427 = vmatprep.mubr.bf16.mxu0 %v781
      %1428 = vmatmul.mubr.bf16.gmra.mrb[0].mxu0 %v780
      %v1429 = vpop.f32.mrb[0].mxu0
      %v1430 = vadd.f32 %v888, %v1429
      %v1431 = vpop.f32.mrb[0].mxu0
      %v1432 = vadd.f32 %v892, %v1431
      %v1433 = vpop.f32.mrb[0].mxu0
      %v1434 = vadd.f32 %v888, %v1433
      %v1435 = vpop.f32.mrb[0].mxu0
      %v1436 = vadd.f32 %v892, %v1435
      %1437 = vdwg.mxu0
      %1438 = vmatprep.subr.bf16.mxu0 %v1206
      %1439 = vmatpush1.bf16.msra.mxu0 %v1205
      %1440 = vmatprep.subr.bf16.mxu0 %v1212
      %1441 = vmatpush1.bf16.msra.mxu0 %v1211
      %1442 = vmatprep.subr.bf16.mxu0 %v1218
      %1443 = vmatpush1.bf16.msra.mxu0 %v1217
      %1444 = vmatprep.subr.bf16.mxu0 %v1224
      %1445 = vmatpush1.bf16.msra.mxu0 %v1223
      %1446 = vmatprep.subr.bf16.mxu0 %v1230
      %1447 = vmatpush1.bf16.msra.mxu0 %v1229
      %1448 = vmatprep.subr.bf16.mxu0 %v1236
      %1449 = vmatpush1.bf16.msra.mxu0 %v1235
      %1450 = vmatprep.subr.bf16.mxu0 %v1242
      %1451 = vmatpush1.bf16.msra.mxu0 %v1241
      %1452 = vmatprep.subr.bf16.mxu0 %v1248
      %1453 = vmatpush1.bf16.msra.mxu0 %v1247
      %1454 = vmatprep.subr.bf16.mxu0 %v1254
      %1455 = vmatpush1.bf16.msra.mxu0 %v1253
      %1456 = vmatprep.subr.bf16.mxu0 %v1260
      %1457 = vmatpush1.bf16.msra.mxu0 %v1259
      %1458 = vmatprep.subr.bf16.mxu0 %v1266
      %1459 = vmatpush1.bf16.msra.mxu0 %v1265
      %1460 = vmatprep.subr.bf16.mxu0 %v1272
      %1461 = vmatpush1.bf16.msra.mxu0 %v1271
      %1462 = vmatprep.subr.bf16.mxu0 %v1278
      %1463 = vmatpush1.bf16.msra.mxu0 %v1277
      %1464 = vmatprep.subr.bf16.mxu0 %v1284
      %1465 = vmatpush1.bf16.msra.mxu0 %v1283
      %1466 = vmatprep.subr.bf16.mxu0 %v1290
      %1467 = vmatpush1.bf16.msra.mxu0 %v1289
      %1468 = vmatprep.subr.bf16.mxu0 %v1296
      %1469 = vmatpush1.bf16.msra.mxu0 %v1295
      %1470 = vmatprep.mubr.bf16.mxu0 %v781
      %1471 = vmatmul.mubr.bf16.gmra.mrb[0].mxu0 %v780
      %v1472 = vpop.f32.mrb[0].mxu0
      %v1473 = vadd.f32 %v896, %v1472
      %v1474 = vpop.f32.mrb[0].mxu0
      %v1475 = vadd.f32 %v900, %v1474
      %v1476 = vpop.f32.mrb[0].mxu0
      %v1477 = vadd.f32 %v896, %v1476
      %v1478 = vpop.f32.mrb[0].mxu0
      %v1479 = vadd.f32 %v900, %v1478
      %1480 = vdwg.mxu0
      %1481 = vmatprep.subr.bf16.mxu0 %v1208
      %1482 = vmatpush1.bf16.msra.mxu0 %v1207
      %1483 = vmatprep.subr.bf16.mxu0 %v1214
      %1484 = vmatpush1.bf16.msra.mxu0 %v1213
      %1485 = vmatprep.subr.bf16.mxu0 %v1220
      %1486 = vmatpush1.bf16.msra.mxu0 %v1219
      %1487 = vmatprep.subr.bf16.mxu0 %v1226
      %1488 = vmatpush1.bf16.msra.mxu0 %v1225
      %1489 = vmatprep.subr.bf16.mxu0 %v1232
      %1490 = vmatpush1.bf16.msra.mxu0 %v1231
      %1491 = vmatprep.subr.bf16.mxu0 %v1238
      %1492 = vmatpush1.bf16.msra.mxu0 %v1237
      %1493 = vmatprep.subr.bf16.mxu0 %v1244
      %1494 = vmatpush1.bf16.msra.mxu0 %v1243
      %1495 = vmatprep.subr.bf16.mxu0 %v1250
      %1496 = vmatpush1.bf16.msra.mxu0 %v1249
      %1497 = vmatprep.subr.bf16.mxu0 %v1256
      %1498 = vmatpush1.bf16.msra.mxu0 %v1255
      %1499 = vmatprep.subr.bf16.mxu0 %v1262
      %1500 = vmatpush1.bf16.msra.mxu0 %v1261
      %1501 = vmatprep.subr.bf16.mxu0 %v1268
      %1502 = vmatpush1.bf16.msra.mxu0 %v1267
      %1503 = vmatprep.subr.bf16.mxu0 %v1274
      %1504 = vmatpush1.bf16.msra.mxu0 %v1273
      %1505 = vmatprep.subr.bf16.mxu0 %v1280
      %1506 = vmatpush1.bf16.msra.mxu0 %v1279
      %1507 = vmatprep.subr.bf16.mxu0 %v1286
      %1508 = vmatpush1.bf16.msra.mxu0 %v1285
      %1509 = vmatprep.subr.bf16.mxu0 %v1292
      %1510 = vmatpush1.bf16.msra.mxu0 %v1291
      %1511 = vmatprep.subr.bf16.mxu0 %v1298
      %1512 = vmatpush1.bf16.msra.mxu0 %v1297
      %1513 = vmatprep.mubr.bf16.mxu0 %v781
      %1514 = vmatmul.mubr.bf16.gmra.mrb[0].mxu0 %v780
      %v1515 = vpop.f32.mrb[0].mxu0
      %v1516 = vadd.f32 %v904, %v1515
      %v1517 = vpop.f32.mrb[0].mxu0
      %v1518 = vadd.f32 %v908, %v1517
      %v1519 = vpop.f32.mrb[0].mxu0
      %v1520 = vadd.f32 %v904, %v1519
      %v1521 = vpop.f32.mrb[0].mxu0
      %v1522 = vadd.f32 %v908, %v1521
      %1523 = vdwg.mxu0
      %v1524 = vpack.c.bf16 %v1430, %v1430
      %v1525 = vpack.c.bf16 %v1434, %v1434
      %v1526 = vpack.c.bf16 %v1473, %v1473
      %v1527 = vpack.c.bf16 %v1477, %v1477
      %v1528 = vpack.c.bf16 %v1516, %v1516
      %v1529 = vpack.c.bf16 %v1520, %v1520
      %vm1530 = vcmask 261120
      %v1532 = vsel %vm1530, %v1524, 0
      %v1535 = vsel %vm1530, %v1526, 0
      %1537 = vmatprep.subr.bf16.mxu0 0
      %1538 = vmatpush1.bf16.xpose.msra.mxu0 %v1535
      %1539 = vmatprep.subr.bf16.mxu0 0
      %1540 = vmatpush1.bf16.xpose.msra.mxu0 0
      %1541 = vmatprep.subr.bf16.mxu0 0
      %1542 = vmatpush1.bf16.xpose.msra.mxu0 0
      %1543 = vmatprep.subr.bf16.mxu0 0
      %1544 = vmatpush1.bf16.xpose.msra.mxu0 0
      %1545 = vmatprep.subr.bf16.mxu0 0
      %1546 = vmatpush1.bf16.xpose.msra.mxu0 0
      %1547 = vmatprep.subr.bf16.mxu0 0
      %1548 = vmatpush1.bf16.xpose.msra.mxu0 0
      %1549 = vmatprep.subr.bf16.mxu0 0
      %1550 = vmatpush1.bf16.xpose.msra.mxu0 0
      %1551 = vmatprep.subr.bf16.mxu0 0
      %1552 = vmatpush1.bf16.xpose.msra.mxu0 0
      %1553 = vmatprep.subr.bf16.mxu0 0
      %1554 = vmatpush1.bf16.xpose.msra.mxu0 0
      %1555 = vmatprep.subr.bf16.mxu0 0
      %1556 = vmatpush1.bf16.xpose.msra.mxu0 0
      %1557 = vmatprep.subr.bf16.mxu0 0
      %1558 = vmatpush1.bf16.xpose.msra.mxu0 0
      %1559 = vmatprep.subr.bf16.mxu0 0
      %1560 = vmatpush1.bf16.xpose.msra.mxu0 0
      %1561 = vmatprep.subr.bf16.mxu0 0
      %1562 = vmatpush1.bf16.xpose.msra.mxu0 0
      %1563 = vmatprep.subr.bf16.mxu0 0
      %1564 = vmatpush1.bf16.xpose.msra.mxu0 0
      %1565 = vmatprep.subr.bf16.mxu0 0
      %1566 = vmatpush1.bf16.xpose.msra.mxu0 0
      %1567 = vmatprep.subr.bf16.mxu0 0
      %1568 = vmatpush1.bf16.xpose.msra.mxu0 0
      %1569 = vmatprep.mubr.bf16.mxu0 0
      %1570 = vmatmul.mubr.bf16.gmra.mrb[0].mxu0 %v1532
      %v1571 = vpop.f32.mrb[0].mxu0
      %v1572 = vadd.f32 0.0, %v1571
      %v1573 = vpop.f32.mrb[0].mxu0
      %v1574 = vpop.f32.mrb[0].mxu0
      %v1575 = vpop.f32.mrb[0].mxu0
      %1576 = vdwg.mxu0
      %v1578 = vsel %vm1530, %v1525, 0
      %v1581 = vsel %vm1530, %v1527, 0
      %1583 = vmatprep.subr.bf16.mxu0 0
      %1584 = vmatpush1.bf16.xpose.msra.mxu0 %v1581
      %1585 = vmatprep.subr.bf16.mxu0 0
      %1586 = vmatpush1.bf16.xpose.msra.mxu0 0
      %1587 = vmatprep.subr.bf16.mxu0 0
      %1588 = vmatpush1.bf16.xpose.msra.mxu0 0
      %1589 = vmatprep.subr.bf16.mxu0 0
      %1590 = vmatpush1.bf16.xpose.msra.mxu0 0
      %1591 = vmatprep.subr.bf16.mxu0 0
      %1592 = vmatpush1.bf16.xpose.msra.mxu0 0
      %1593 = vmatprep.subr.bf16.mxu0 0
      %1594 = vmatpush1.bf16.xpose.msra.mxu0 0
      %1595 = vmatprep.subr.bf16.mxu0 0
      %1596 = vmatpush1.bf16.xpose.msra.mxu0 0
      %1597 = vmatprep.subr.bf16.mxu0 0
      %1598 = vmatpush1.bf16.xpose.msra.mxu0 0
      %1599 = vmatprep.subr.bf16.mxu0 0
      %1600 = vmatpush1.bf16.xpose.msra.mxu0 0
      %1601 = vmatprep.subr.bf16.mxu0 0
      %1602 = vmatpush1.bf16.xpose.msra.mxu0 0
      %1603 = vmatprep.subr.bf16.mxu0 0
      %1604 = vmatpush1.bf16.xpose.msra.mxu0 0
      %1605 = vmatprep.subr.bf16.mxu0 0
      %1606 = vmatpush1.bf16.xpose.msra.mxu0 0
      %1607 = vmatprep.subr.bf16.mxu0 0
      %1608 = vmatpush1.bf16.xpose.msra.mxu0 0
      %1609 = vmatprep.subr.bf16.mxu0 0
      %1610 = vmatpush1.bf16.xpose.msra.mxu0 0
      %1611 = vmatprep.subr.bf16.mxu0 0
      %1612 = vmatpush1.bf16.xpose.msra.mxu0 0
      %1613 = vmatprep.subr.bf16.mxu0 0
      %1614 = vmatpush1.bf16.xpose.msra.mxu0 0
      %1615 = vmatprep.mubr.bf16.mxu0 0
      %1616 = vmatmul.mubr.bf16.gmra.mrb[0].mxu0 %v1578
      %v1617 = vpop.f32.mrb[0].mxu0
      %v1618 = vadd.f32 0.0, %v1617
      %v1619 = vpop.f32.mrb[0].mxu0
      %v1620 = vpop.f32.mrb[0].mxu0
      %v1621 = vpop.f32.mrb[0].mxu0
      %1622 = vdwg.mxu0
      %v1623 = vmul.f32 %v1572, 0.17677669
      %v1624 = vmul.f32 %v1618, 0.17677669
      %vm1625 = vcmask 64512
      %v1626 = vsel %vm1625, %v1623, -inf
      %1627 = vmax.xlane.f32.xlu0 %v1626
      %v1628 = vpop.xlane.xlu0 %1627
      %v1629 = vsel %vm1625, %v1624, -inf
      %1630 = vmax.xlane.f32.xlu0 %v1629
      %v1631 = vpop.xlane.xlu0 %1630
      %v1632 = vsub.f32 %v1623, %v1628
      %v1633 = vsub.f32 %v1624, %v1631
      %v1634 = vmul.f32 %v1632, 1.442695
      %v1635 = vpow.pop %v1634
      %v1636 = vmul.f32 %v1633, 1.442695
      %v1637 = vpow.pop %v1636
      %v1638 = vsel %vm1625, %v1635, 0.0
      %1639 = vadd.xlane.f32.xlu0 %v1638
      %v1640 = vpop.xlane.xlu0 %1639
      %v1641 = vsel %vm1625, %v1637, 0.0
      %1642 = vadd.xlane.f32.xlu0 %v1641
      %v1643 = vpop.xlane.xlu0 %1642
      %v1644 = vrcp.pop %v1640
      %v1645 = vmul.f32 %v1635, %v1644
      %v1646 = vrcp.pop %v1643
      %v1647 = vmul.f32 %v1637, %v1646
      %v1648 = vpack.c.bf16 %v1645, %v1645
      %v1649 = vpack.c.bf16 %v1647, %v1647
      %v1651 = vsel %vm1625, %v1648, 0
      %v1654 = vsel %vm412, %v1528, 0
      %1656 = vmatprep.subr.bf16.mxu0 0
      %1657 = vmatpush1.bf16.msra.mxu0 %v1654
      %1658 = vmatprep.subr.bf16.mxu0 0
      %1659 = vmatpush1.bf16.msra.mxu0 0
      %1660 = vmatprep.subr.bf16.mxu0 0
      %1661 = vmatpush1.bf16.msra.mxu0 0
      %1662 = vmatprep.subr.bf16.mxu0 0
      %1663 = vmatpush1.bf16.msra.mxu0 0
      %1664 = vmatprep.subr.bf16.mxu0 0
      %1665 = vmatpush1.bf16.msra.mxu0 0
      %1666 = vmatprep.subr.bf16.mxu0 0
      %1667 = vmatpush1.bf16.msra.mxu0 0
      %1668 = vmatprep.subr.bf16.mxu0 0
      %1669 = vmatpush1.bf16.msra.mxu0 0
      %1670 = vmatprep.subr.bf16.mxu0 0
      %1671 = vmatpush1.bf16.msra.mxu0 0
      %1672 = vmatprep.subr.bf16.mxu0 0
      %1673 = vmatpush1.bf16.msra.mxu0 0
      %1674 = vmatprep.subr.bf16.mxu0 0
      %1675 = vmatpush1.bf16.msra.mxu0 0
      %1676 = vmatprep.subr.bf16.mxu0 0
      %1677 = vmatpush1.bf16.msra.mxu0 0
      %1678 = vmatprep.subr.bf16.mxu0 0
      %1679 = vmatpush1.bf16.msra.mxu0 0
      %1680 = vmatprep.subr.bf16.mxu0 0
      %1681 = vmatpush1.bf16.msra.mxu0 0
      %1682 = vmatprep.subr.bf16.mxu0 0
      %1683 = vmatpush1.bf16.msra.mxu0 0
      %1684 = vmatprep.subr.bf16.mxu0 0
      %1685 = vmatpush1.bf16.msra.mxu0 0
      %1686 = vmatprep.subr.bf16.mxu0 0
      %1687 = vmatpush1.bf16.msra.mxu0 0
      %1688 = vmatprep.mubr.bf16.mxu0 0
      %1689 = vmatmul.mubr.bf16.gmra.mrb[0].mxu0 %v1651
      %v1690 = vpop.f32.mrb[0].mxu0
      %v1691 = vadd.f32 0.0, %v1690
      %v1692 = vpop.f32.mrb[0].mxu0
      %v1693 = vpop.f32.mrb[0].mxu0
      %v1694 = vpop.f32.mrb[0].mxu0
      %1695 = vdwg.mxu0
      %v1697 = vsel %vm1625, %v1649, 0
      %v1700 = vsel %vm412, %v1529, 0
      %1702 = vmatprep.subr.bf16.mxu0 0
      %1703 = vmatpush1.bf16.msra.mxu0 %v1700
      %1704 = vmatprep.subr.bf16.mxu0 0
      %1705 = vmatpush1.bf16.msra.mxu0 0
      %1706 = vmatprep.subr.bf16.mxu0 0
      %1707 = vmatpush1.bf16.msra.mxu0 0
      %1708 = vmatprep.subr.bf16.mxu0 0
      %1709 = vmatpush1.bf16.msra.mxu0 0
      %1710 = vmatprep.subr.bf16.mxu0 0
      %1711 = vmatpush1.bf16.msra.mxu0 0
      %1712 = vmatprep.subr.bf16.mxu0 0
      %1713 = vmatpush1.bf16.msra.mxu0 0
      %1714 = vmatprep.subr.bf16.mxu0 0
      %1715 = vmatpush1.bf16.msra.mxu0 0
      %1716 = vmatprep.subr.bf16.mxu0 0
      %1717 = vmatpush1.bf16.msra.mxu0 0
      %1718 = vmatprep.subr.bf16.mxu0 0
      %1719 = vmatpush1.bf16.msra.mxu0 0
      %1720 = vmatprep.subr.bf16.mxu0 0
      %1721 = vmatpush1.bf16.msra.mxu0 0
      %1722 = vmatprep.subr.bf16.mxu0 0
      %1723 = vmatpush1.bf16.msra.mxu0 0
      %1724 = vmatprep.subr.bf16.mxu0 0
      %1725 = vmatpush1.bf16.msra.mxu0 0
      %1726 = vmatprep.subr.bf16.mxu0 0
      %1727 = vmatpush1.bf16.msra.mxu0 0
      %1728 = vmatprep.subr.bf16.mxu0 0
      %1729 = vmatpush1.bf16.msra.mxu0 0
      %1730 = vmatprep.subr.bf16.mxu0 0
      %1731 = vmatpush1.bf16.msra.mxu0 0
      %1732 = vmatprep.subr.bf16.mxu0 0
      %1733 = vmatpush1.bf16.msra.mxu0 0
      %1734 = vmatprep.mubr.bf16.mxu0 0
      %1735 = vmatmul.mubr.bf16.gmra.mrb[0].mxu0 %v1697
      %v1736 = vpop.f32.mrb[0].mxu0
      %v1737 = vadd.f32 0.0, %v1736
      %v1738 = vpop.f32.mrb[0].mxu0
      %v1739 = vpop.f32.mrb[0].mxu0
      %v1740 = vpop.f32.mrb[0].mxu0
      %1741 = vdwg.mxu0
      %1743 = vrot.lane.b32.xlu0 %v1524, 96
      %v1744 = vpop.permute.xlu0 %1743
      %1746 = vrot.lane.b32.xlu0 %v1526, 96
      %v1747 = vpop.permute.xlu0 %1746
      %v1749 = vsel %vm1530, %v1744, 0
      %v1752 = vsel %vm1530, %v1747, 0
      %1754 = vmatprep.subr.bf16.mxu0 0
      %1755 = vmatpush1.bf16.xpose.msra.mxu0 %v1752
      %1756 = vmatprep.subr.bf16.mxu0 0
      %1757 = vmatpush1.bf16.xpose.msra.mxu0 0
      %1758 = vmatprep.subr.bf16.mxu0 0
      %1759 = vmatpush1.bf16.xpose.msra.mxu0 0
      %1760 = vmatprep.subr.bf16.mxu0 0
      %1761 = vmatpush1.bf16.xpose.msra.mxu0 0
      %1762 = vmatprep.subr.bf16.mxu0 0
      %1763 = vmatpush1.bf16.xpose.msra.mxu0 0
      %1764 = vmatprep.subr.bf16.mxu0 0
      %1765 = vmatpush1.bf16.xpose.msra.mxu0 0
      %1766 = vmatprep.subr.bf16.mxu0 0
      %1767 = vmatpush1.bf16.xpose.msra.mxu0 0
      %1768 = vmatprep.subr.bf16.mxu0 0
      %1769 = vmatpush1.bf16.xpose.msra.mxu0 0
      %1770 = vmatprep.subr.bf16.mxu0 0
      %1771 = vmatpush1.bf16.xpose.msra.mxu0 0
      %1772 = vmatprep.subr.bf16.mxu0 0
      %1773 = vmatpush1.bf16.xpose.msra.mxu0 0
      %1774 = vmatprep.subr.bf16.mxu0 0
      %1775 = vmatpush1.bf16.xpose.msra.mxu0 0
      %1776 = vmatprep.subr.bf16.mxu0 0
      %1777 = vmatpush1.bf16.xpose.msra.mxu0 0
      %1778 = vmatprep.subr.bf16.mxu0 0
      %1779 = vmatpush1.bf16.xpose.msra.mxu0 0
      %1780 = vmatprep.subr.bf16.mxu0 0
      %1781 = vmatpush1.bf16.xpose.msra.mxu0 0
      %1782 = vmatprep.subr.bf16.mxu0 0
      %1783 = vmatpush1.bf16.xpose.msra.mxu0 0
      %1784 = vmatprep.subr.bf16.mxu0 0
      %1785 = vmatpush1.bf16.xpose.msra.mxu0 0
      %1786 = vmatprep.mubr.bf16.mxu0 0
      %1787 = vmatmul.mubr.bf16.gmra.mrb[0].mxu0 %v1749
      %v1788 = vpop.f32.mrb[0].mxu0
      %v1789 = vadd.f32 0.0, %v1788
      %v1790 = vpop.f32.mrb[0].mxu0
      %v1791 = vpop.f32.mrb[0].mxu0
      %v1792 = vpop.f32.mrb[0].mxu0
      %1793 = vdwg.mxu0
      %1795 = vrot.lane.b32.xlu0 %v1525, 96
      %v1796 = vpop.permute.xlu0 %1795
      %1798 = vrot.lane.b32.xlu0 %v1527, 96
      %v1799 = vpop.permute.xlu0 %1798
      %v1801 = vsel %vm1530, %v1796, 0
      %v1804 = vsel %vm1530, %v1799, 0
      %1806 = vmatprep.subr.bf16.mxu0 0
      %1807 = vmatpush1.bf16.xpose.msra.mxu0 %v1804
      %1808 = vmatprep.subr.bf16.mxu0 0
      %1809 = vmatpush1.bf16.xpose.msra.mxu0 0
      %1810 = vmatprep.subr.bf16.mxu0 0
      %1811 = vmatpush1.bf16.xpose.msra.mxu0 0
      %1812 = vmatprep.subr.bf16.mxu0 0
      %1813 = vmatpush1.bf16.xpose.msra.mxu0 0
      %1814 = vmatprep.subr.bf16.mxu0 0
      %1815 = vmatpush1.bf16.xpose.msra.mxu0 0
      %1816 = vmatprep.subr.bf16.mxu0 0
      %1817 = vmatpush1.bf16.xpose.msra.mxu0 0
      %1818 = vmatprep.subr.bf16.mxu0 0
      %1819 = vmatpush1.bf16.xpose.msra.mxu0 0
      %1820 = vmatprep.subr.bf16.mxu0 0
      %1821 = vmatpush1.bf16.xpose.msra.mxu0 0
      %1822 = vmatprep.subr.bf16.mxu0 0
      %1823 = vmatpush1.bf16.xpose.msra.mxu0 0
      %1824 = vmatprep.subr.bf16.mxu0 0
      %1825 = vmatpush1.bf16.xpose.msra.mxu0 0
      %1826 = vmatprep.subr.bf16.mxu0 0
      %1827 = vmatpush1.bf16.xpose.msra.mxu0 0
      %1828 = vmatprep.subr.bf16.mxu0 0
      %1829 = vmatpush1.bf16.xpose.msra.mxu0 0
      %1830 = vmatprep.subr.bf16.mxu0 0
      %1831 = vmatpush1.bf16.xpose.msra.mxu0 0
      %1832 = vmatprep.subr.bf16.mxu0 0
      %1833 = vmatpush1.bf16.xpose.msra.mxu0 0
      %1834 = vmatprep.subr.bf16.mxu0 0
      %1835 = vmatpush1.bf16.xpose.msra.mxu0 0
      %1836 = vmatprep.subr.bf16.mxu0 0
      %1837 = vmatpush1.bf16.xpose.msra.mxu0 0
      %1838 = vmatprep.mubr.bf16.mxu0 0
      %1839 = vmatmul.mubr.bf16.gmra.mrb[0].mxu0 %v1801
      %v1840 = vpop.f32.mrb[0].mxu0
      %v1841 = vadd.f32 0.0, %v1840
      %v1842 = vpop.f32.mrb[0].mxu0
      %v1843 = vpop.f32.mrb[0].mxu0
      %v1844 = vpop.f32.mrb[0].mxu0
      %1845 = vdwg.mxu0
      %v1846 = vmul.f32 %v1789, 0.17677669
      %v1847 = vmul.f32 %v1841, 0.17677669
      %v1848 = vsel %vm1625, %v1846, -inf
      %1849 = vmax.xlane.f32.xlu0 %v1848
      %v1850 = vpop.xlane.xlu0 %1849
      %v1851 = vsel %vm1625, %v1847, -inf
      %1852 = vmax.xlane.f32.xlu0 %v1851
      %v1853 = vpop.xlane.xlu0 %1852
      %v1854 = vsub.f32 %v1846, %v1850
      %v1855 = vsub.f32 %v1847, %v1853
      %v1856 = vmul.f32 %v1854, 1.442695
      %v1857 = vpow.pop %v1856
      %v1858 = vmul.f32 %v1855, 1.442695
      %v1859 = vpow.pop %v1858
      %v1860 = vsel %vm1625, %v1857, 0.0
      %1861 = vadd.xlane.f32.xlu0 %v1860
      %v1862 = vpop.xlane.xlu0 %1861
      %v1863 = vsel %vm1625, %v1859, 0.0
      %1864 = vadd.xlane.f32.xlu0 %v1863
      %v1865 = vpop.xlane.xlu0 %1864
      %v1866 = vrcp.pop %v1862
      %v1867 = vmul.f32 %v1857, %v1866
      %v1868 = vrcp.pop %v1865
      %v1869 = vmul.f32 %v1859, %v1868
      %v1870 = vpack.c.bf16 %v1867, %v1867
      %v1871 = vpack.c.bf16 %v1869, %v1869
      %1873 = vrot.lane.b32.xlu0 %v1528, 96
      %v1874 = vpop.permute.xlu0 %1873
      %v1876 = vsel %vm1625, %v1870, 0
      %v1879 = vsel %vm412, %v1874, 0
      %1881 = vmatprep.subr.bf16.mxu0 0
      %1882 = vmatpush1.bf16.msra.mxu0 %v1879
      %1883 = vmatprep.subr.bf16.mxu0 0
      %1884 = vmatpush1.bf16.msra.mxu0 0
      %1885 = vmatprep.subr.bf16.mxu0 0
      %1886 = vmatpush1.bf16.msra.mxu0 0
      %1887 = vmatprep.subr.bf16.mxu0 0
      %1888 = vmatpush1.bf16.msra.mxu0 0
      %1889 = vmatprep.subr.bf16.mxu0 0
      %1890 = vmatpush1.bf16.msra.mxu0 0
      %1891 = vmatprep.subr.bf16.mxu0 0
      %1892 = vmatpush1.bf16.msra.mxu0 0
      %1893 = vmatprep.subr.bf16.mxu0 0
      %1894 = vmatpush1.bf16.msra.mxu0 0
      %1895 = vmatprep.subr.bf16.mxu0 0
      %1896 = vmatpush1.bf16.msra.mxu0 0
      %1897 = vmatprep.subr.bf16.mxu0 0
      %1898 = vmatpush1.bf16.msra.mxu0 0
      %1899 = vmatprep.subr.bf16.mxu0 0
      %1900 = vmatpush1.bf16.msra.mxu0 0
      %1901 = vmatprep.subr.bf16.mxu0 0
      %1902 = vmatpush1.bf16.msra.mxu0 0
      %1903 = vmatprep.subr.bf16.mxu0 0
      %1904 = vmatpush1.bf16.msra.mxu0 0
      %1905 = vmatprep.subr.bf16.mxu0 0
      %1906 = vmatpush1.bf16.msra.mxu0 0
      %1907 = vmatprep.subr.bf16.mxu0 0
      %1908 = vmatpush1.bf16.msra.mxu0 0
      %1909 = vmatprep.subr.bf16.mxu0 0
      %1910 = vmatpush1.bf16.msra.mxu0 0
      %1911 = vmatprep.subr.bf16.mxu0 0
      %1912 = vmatpush1.bf16.msra.mxu0 0
      %1913 = vmatprep.mubr.bf16.mxu0 0
      %1914 = vmatmul.mubr.bf16.gmra.mrb[0].mxu0 %v1876
      %v1915 = vpop.f32.mrb[0].mxu0
      %v1916 = vadd.f32 0.0, %v1915
      %v1917 = vpop.f32.mrb[0].mxu0
      %v1918 = vpop.f32.mrb[0].mxu0
      %v1919 = vpop.f32.mrb[0].mxu0
      %1920 = vdwg.mxu0
      %1922 = vrot.lane.b32.xlu0 %v1529, 96
      %v1923 = vpop.permute.xlu0 %1922
      %v1925 = vsel %vm1625, %v1871, 0
      %v1928 = vsel %vm412, %v1923, 0
      %1930 = vmatprep.subr.bf16.mxu0 0
      %1931 = vmatpush1.bf16.msra.mxu0 %v1928
      %1932 = vmatprep.subr.bf16.mxu0 0
      %1933 = vmatpush1.bf16.msra.mxu0 0
      %1934 = vmatprep.subr.bf16.mxu0 0
      %1935 = vmatpush1.bf16.msra.mxu0 0
      %1936 = vmatprep.subr.bf16.mxu0 0
      %1937 = vmatpush1.bf16.msra.mxu0 0
      %1938 = vmatprep.subr.bf16.mxu0 0
      %1939 = vmatpush1.bf16.msra.mxu0 0
      %1940 = vmatprep.subr.bf16.mxu0 0
      %1941 = vmatpush1.bf16.msra.mxu0 0
      %1942 = vmatprep.subr.bf16.mxu0 0
      %1943 = vmatpush1.bf16.msra.mxu0 0
      %1944 = vmatprep.subr.bf16.mxu0 0
      %1945 = vmatpush1.bf16.msra.mxu0 0
      %1946 = vmatprep.subr.bf16.mxu0 0
      %1947 = vmatpush1.bf16.msra.mxu0 0
      %1948 = vmatprep.subr.bf16.mxu0 0
      %1949 = vmatpush1.bf16.msra.mxu0 0
      %1950 = vmatprep.subr.bf16.mxu0 0
      %1951 = vmatpush1.bf16.msra.mxu0 0
      %1952 = vmatprep.subr.bf16.mxu0 0
      %1953 = vmatpush1.bf16.msra.mxu0 0
      %1954 = vmatprep.subr.bf16.mxu0 0
      %1955 = vmatpush1.bf16.msra.mxu0 0
      %1956 = vmatprep.subr.bf16.mxu0 0
      %1957 = vmatpush1.bf16.msra.mxu0 0
      %1958 = vmatprep.subr.bf16.mxu0 0
      %1959 = vmatpush1.bf16.msra.mxu0 0
      %1960 = vmatprep.subr.bf16.mxu0 0
      %1961 = vmatpush1.bf16.msra.mxu0 0
      %1962 = vmatprep.mubr.bf16.mxu0 0
      %1963 = vmatmul.mubr.bf16.gmra.mrb[0].mxu0 %v1925
      %v1964 = vpop.f32.mrb[0].mxu0
      %v1965 = vadd.f32 0.0, %v1964
      %v1966 = vpop.f32.mrb[0].mxu0
      %v1967 = vpop.f32.mrb[0].mxu0
      %v1968 = vpop.f32.mrb[0].mxu0
      %1969 = vdwg.mxu0
      %1970 = vrot.lane.b32.xlu0 %v1524, 64
      %v1971 = vpop.permute.xlu0 %1970
      %1972 = vrot.lane.b32.xlu0 %v1526, 64
      %v1973 = vpop.permute.xlu0 %1972
      %v1975 = vsel %vm1530, %v1971, 0
      %v1978 = vsel %vm1530, %v1973, 0
      %1980 = vmatprep.subr.bf16.mxu0 0
      %1981 = vmatpush1.bf16.xpose.msra.mxu0 %v1978
      %1982 = vmatprep.subr.bf16.mxu0 0
      %1983 = vmatpush1.bf16.xpose.msra.mxu0 0
      %1984 = vmatprep.subr.bf16.mxu0 0
      %1985 = vmatpush1.bf16.xpose.msra.mxu0 0
      %1986 = vmatprep.subr.bf16.mxu0 0
      %1987 = vmatpush1.bf16.xpose.msra.mxu0 0
      %1988 = vmatprep.subr.bf16.mxu0 0
      %1989 = vmatpush1.bf16.xpose.msra.mxu0 0
      %1990 = vmatprep.subr.bf16.mxu0 0
      %1991 = vmatpush1.bf16.xpose.msra.mxu0 0
      %1992 = vmatprep.subr.bf16.mxu0 0
      %1993 = vmatpush1.bf16.xpose.msra.mxu0 0
      %1994 = vmatprep.subr.bf16.mxu0 0
      %1995 = vmatpush1.bf16.xpose.msra.mxu0 0
      %1996 = vmatprep.subr.bf16.mxu0 0
      %1997 = vmatpush1.bf16.xpose.msra.mxu0 0
      %1998 = vmatprep.subr.bf16.mxu0 0
      %1999 = vmatpush1.bf16.xpose.msra.mxu0 0
      %2000 = vmatprep.subr.bf16.mxu0 0
      %2001 = vmatpush1.bf16.xpose.msra.mxu0 0
      %2002 = vmatprep.subr.bf16.mxu0 0
      %2003 = vmatpush1.bf16.xpose.msra.mxu0 0
      %2004 = vmatprep.subr.bf16.mxu0 0
      %2005 = vmatpush1.bf16.xpose.msra.mxu0 0
      %2006 = vmatprep.subr.bf16.mxu0 0
      %2007 = vmatpush1.bf16.xpose.msra.mxu0 0
      %2008 = vmatprep.subr.bf16.mxu0 0
      %2009 = vmatpush1.bf16.xpose.msra.mxu0 0
      %2010 = vmatprep.subr.bf16.mxu0 0
      %2011 = vmatpush1.bf16.xpose.msra.mxu0 0
      %2012 = vmatprep.mubr.bf16.mxu0 0
      %2013 = vmatmul.mubr.bf16.gmra.mrb[0].mxu0 %v1975
      %v2014 = vpop.f32.mrb[0].mxu0
      %v2015 = vadd.f32 0.0, %v2014
      %v2016 = vpop.f32.mrb[0].mxu0
      %v2017 = vpop.f32.mrb[0].mxu0
      %v2018 = vpop.f32.mrb[0].mxu0
      %2019 = vdwg.mxu0
      %2020 = vrot.lane.b32.xlu0 %v1525, 64
      %v2021 = vpop.permute.xlu0 %2020
      %2022 = vrot.lane.b32.xlu0 %v1527, 64
      %v2023 = vpop.permute.xlu0 %2022
      %v2025 = vsel %vm1530, %v2021, 0
      %v2028 = vsel %vm1530, %v2023, 0
      %2030 = vmatprep.subr.bf16.mxu0 0
      %2031 = vmatpush1.bf16.xpose.msra.mxu0 %v2028
      %2032 = vmatprep.subr.bf16.mxu0 0
      %2033 = vmatpush1.bf16.xpose.msra.mxu0 0
      %2034 = vmatprep.subr.bf16.mxu0 0
      %2035 = vmatpush1.bf16.xpose.msra.mxu0 0
      %2036 = vmatprep.subr.bf16.mxu0 0
      %2037 = vmatpush1.bf16.xpose.msra.mxu0 0
      %2038 = vmatprep.subr.bf16.mxu0 0
      %2039 = vmatpush1.bf16.xpose.msra.mxu0 0
      %2040 = vmatprep.subr.bf16.mxu0 0
      %2041 = vmatpush1.bf16.xpose.msra.mxu0 0
      %2042 = vmatprep.subr.bf16.mxu0 0
      %2043 = vmatpush1.bf16.xpose.msra.mxu0 0
      %2044 = vmatprep.subr.bf16.mxu0 0
      %2045 = vmatpush1.bf16.xpose.msra.mxu0 0
      %2046 = vmatprep.subr.bf16.mxu0 0
      %2047 = vmatpush1.bf16.xpose.msra.mxu0 0
      %2048 = vmatprep.subr.bf16.mxu0 0
      %2049 = vmatpush1.bf16.xpose.msra.mxu0 0
      %2050 = vmatprep.subr.bf16.mxu0 0
      %2051 = vmatpush1.bf16.xpose.msra.mxu0 0
      %2052 = vmatprep.subr.bf16.mxu0 0
      %2053 = vmatpush1.bf16.xpose.msra.mxu0 0
      %2054 = vmatprep.subr.bf16.mxu0 0
      %2055 = vmatpush1.bf16.xpose.msra.mxu0 0
      %2056 = vmatprep.subr.bf16.mxu0 0
      %2057 = vmatpush1.bf16.xpose.msra.mxu0 0
      %2058 = vmatprep.subr.bf16.mxu0 0
      %2059 = vmatpush1.bf16.xpose.msra.mxu0 0
      %2060 = vmatprep.subr.bf16.mxu0 0
      %2061 = vmatpush1.bf16.xpose.msra.mxu0 0
      %2062 = vmatprep.mubr.bf16.mxu0 0
      %2063 = vmatmul.mubr.bf16.gmra.mrb[0].mxu0 %v2025
      %v2064 = vpop.f32.mrb[0].mxu0
      %v2065 = vadd.f32 0.0, %v2064
      %v2066 = vpop.f32.mrb[0].mxu0
      %v2067 = vpop.f32.mrb[0].mxu0
      %v2068 = vpop.f32.mrb[0].mxu0
      %2069 = vdwg.mxu0
      %v2070 = vmul.f32 %v2015, 0.17677669
      %v2071 = vmul.f32 %v2065, 0.17677669
      %v2072 = vsel %vm1625, %v2070, -inf
      %2073 = vmax.xlane.f32.xlu0 %v2072
      %v2074 = vpop.xlane.xlu0 %2073
      %v2075 = vsel %vm1625, %v2071, -inf
      %2076 = vmax.xlane.f32.xlu0 %v2075
      %v2077 = vpop.xlane.xlu0 %2076
      %v2078 = vsub.f32 %v2070, %v2074
      %v2079 = vsub.f32 %v2071, %v2077
      %v2080 = vmul.f32 %v2078, 1.442695
      %v2081 = vpow.pop %v2080
      %v2082 = vmul.f32 %v2079, 1.442695
      %v2083 = vpow.pop %v2082
      %v2084 = vsel %vm1625, %v2081, 0.0
      %2085 = vadd.xlane.f32.xlu0 %v2084
      %v2086 = vpop.xlane.xlu0 %2085
      %v2087 = vsel %vm1625, %v2083, 0.0
      %2088 = vadd.xlane.f32.xlu0 %v2087
      %v2089 = vpop.xlane.xlu0 %2088
      %v2090 = vrcp.pop %v2086
      %v2091 = vmul.f32 %v2081, %v2090
      %v2092 = vrcp.pop %v2089
      %v2093 = vmul.f32 %v2083, %v2092
      %v2094 = vpack.c.bf16 %v2091, %v2091
      %v2095 = vpack.c.bf16 %v2093, %v2093
      %2096 = vrot.lane.b32.xlu0 %v1528, 64
      %v2097 = vpop.permute.xlu0 %2096
      %v2099 = vsel %vm1625, %v2094, 0
      %v2102 = vsel %vm412, %v2097, 0
      %2104 = vmatprep.subr.bf16.mxu0 0
      %2105 = vmatpush1.bf16.msra.mxu0 %v2102
      %2106 = vmatprep.subr.bf16.mxu0 0
      %2107 = vmatpush1.bf16.msra.mxu0 0
      %2108 = vmatprep.subr.bf16.mxu0 0
      %2109 = vmatpush1.bf16.msra.mxu0 0
      %2110 = vmatprep.subr.bf16.mxu0 0
      %2111 = vmatpush1.bf16.msra.mxu0 0
      %2112 = vmatprep.subr.bf16.mxu0 0
      %2113 = vmatpush1.bf16.msra.mxu0 0
      %2114 = vmatprep.subr.bf16.mxu0 0
      %2115 = vmatpush1.bf16.msra.mxu0 0
      %2116 = vmatprep.subr.bf16.mxu0 0
      %2117 = vmatpush1.bf16.msra.mxu0 0
      %2118 = vmatprep.subr.bf16.mxu0 0
      %2119 = vmatpush1.bf16.msra.mxu0 0
      %2120 = vmatprep.subr.bf16.mxu0 0
      %2121 = vmatpush1.bf16.msra.mxu0 0
      %2122 = vmatprep.subr.bf16.mxu0 0
      %2123 = vmatpush1.bf16.msra.mxu0 0
      %2124 = vmatprep.subr.bf16.mxu0 0
      %2125 = vmatpush1.bf16.msra.mxu0 0
      %2126 = vmatprep.subr.bf16.mxu0 0
      %2127 = vmatpush1.bf16.msra.mxu0 0
      %2128 = vmatprep.subr.bf16.mxu0 0
      %2129 = vmatpush1.bf16.msra.mxu0 0
      %2130 = vmatprep.subr.bf16.mxu0 0
      %2131 = vmatpush1.bf16.msra.mxu0 0
      %2132 = vmatprep.subr.bf16.mxu0 0
      %2133 = vmatpush1.bf16.msra.mxu0 0
      %2134 = vmatprep.subr.bf16.mxu0 0
      %2135 = vmatpush1.bf16.msra.mxu0 0
      %2136 = vmatprep.mubr.bf16.mxu0 0
      %2137 = vmatmul.mubr.bf16.gmra.mrb[0].mxu0 %v2099
      %v2138 = vpop.f32.mrb[0].mxu0
      %v2139 = vadd.f32 0.0, %v2138
      %v2140 = vpop.f32.mrb[0].mxu0
      %v2141 = vpop.f32.mrb[0].mxu0
      %v2142 = vpop.f32.mrb[0].mxu0
      %2143 = vdwg.mxu0
      %2144 = vrot.lane.b32.xlu0 %v1529, 64
      %v2145 = vpop.permute.xlu0 %2144
      %v2147 = vsel %vm1625, %v2095, 0
      %v2150 = vsel %vm412, %v2145, 0
      %2152 = vmatprep.subr.bf16.mxu0 0
      %2153 = vmatpush1.bf16.msra.mxu0 %v2150
      %2154 = vmatprep.subr.bf16.mxu0 0
      %2155 = vmatpush1.bf16.msra.mxu0 0
      %2156 = vmatprep.subr.bf16.mxu0 0
      %2157 = vmatpush1.bf16.msra.mxu0 0
      %2158 = vmatprep.subr.bf16.mxu0 0
      %2159 = vmatpush1.bf16.msra.mxu0 0
      %2160 = vmatprep.subr.bf16.mxu0 0
      %2161 = vmatpush1.bf16.msra.mxu0 0
      %2162 = vmatprep.subr.bf16.mxu0 0
      %2163 = vmatpush1.bf16.msra.mxu0 0
      %2164 = vmatprep.subr.bf16.mxu0 0
      %2165 = vmatpush1.bf16.msra.mxu0 0
      %2166 = vmatprep.subr.bf16.mxu0 0
      %2167 = vmatpush1.bf16.msra.mxu0 0
      %2168 = vmatprep.subr.bf16.mxu0 0
      %2169 = vmatpush1.bf16.msra.mxu0 0
      %2170 = vmatprep.subr.bf16.mxu0 0
      %2171 = vmatpush1.bf16.msra.mxu0 0
      %2172 = vmatprep.subr.bf16.mxu0 0
      %2173 = vmatpush1.bf16.msra.mxu0 0
      %2174 = vmatprep.subr.bf16.mxu0 0
      %2175 = vmatpush1.bf16.msra.mxu0 0
      %2176 = vmatprep.subr.bf16.mxu0 0
      %2177 = vmatpush1.bf16.msra.mxu0 0
      %2178 = vmatprep.subr.bf16.mxu0 0
      %2179 = vmatpush1.bf16.msra.mxu0 0
      %2180 = vmatprep.subr.bf16.mxu0 0
      %2181 = vmatpush1.bf16.msra.mxu0 0
      %2182 = vmatprep.subr.bf16.mxu0 0
      %2183 = vmatpush1.bf16.msra.mxu0 0
      %2184 = vmatprep.mubr.bf16.mxu0 0
      %2185 = vmatmul.mubr.bf16.gmra.mrb[0].mxu0 %v2147
      %v2186 = vpop.f32.mrb[0].mxu0
      %v2187 = vadd.f32 0.0, %v2186
      %v2188 = vpop.f32.mrb[0].mxu0
      %v2189 = vpop.f32.mrb[0].mxu0
      %v2190 = vpop.f32.mrb[0].mxu0
      %2191 = vdwg.mxu0
      %2192 = vrot.lane.b32.xlu0 %v1524, 32
      %v2193 = vpop.permute.xlu0 %2192
      %2194 = vrot.lane.b32.xlu0 %v1526, 32
      %v2195 = vpop.permute.xlu0 %2194
      %v2197 = vsel %vm1530, %v2193, 0
      %v2200 = vsel %vm1530, %v2195, 0
      %2202 = vmatprep.subr.bf16.mxu0 0
      %2203 = vmatpush1.bf16.xpose.msra.mxu0 %v2200
      %2204 = vmatprep.subr.bf16.mxu0 0
      %2205 = vmatpush1.bf16.xpose.msra.mxu0 0
      %2206 = vmatprep.subr.bf16.mxu0 0
      %2207 = vmatpush1.bf16.xpose.msra.mxu0 0
      %2208 = vmatprep.subr.bf16.mxu0 0
      %2209 = vmatpush1.bf16.xpose.msra.mxu0 0
      %2210 = vmatprep.subr.bf16.mxu0 0
      %2211 = vmatpush1.bf16.xpose.msra.mxu0 0
      %2212 = vmatprep.subr.bf16.mxu0 0
      %2213 = vmatpush1.bf16.xpose.msra.mxu0 0
      %2214 = vmatprep.subr.bf16.mxu0 0
      %2215 = vmatpush1.bf16.xpose.msra.mxu0 0
      %2216 = vmatprep.subr.bf16.mxu0 0
      %2217 = vmatpush1.bf16.xpose.msra.mxu0 0
      %2218 = vmatprep.subr.bf16.mxu0 0
      %2219 = vmatpush1.bf16.xpose.msra.mxu0 0
      %2220 = vmatprep.subr.bf16.mxu0 0
      %2221 = vmatpush1.bf16.xpose.msra.mxu0 0
      %2222 = vmatprep.subr.bf16.mxu0 0
      %2223 = vmatpush1.bf16.xpose.msra.mxu0 0
      %2224 = vmatprep.subr.bf16.mxu0 0
      %2225 = vmatpush1.bf16.xpose.msra.mxu0 0
      %2226 = vmatprep.subr.bf16.mxu0 0
      %2227 = vmatpush1.bf16.xpose.msra.mxu0 0
      %2228 = vmatprep.subr.bf16.mxu0 0
      %2229 = vmatpush1.bf16.xpose.msra.mxu0 0
      %2230 = vmatprep.subr.bf16.mxu0 0
      %2231 = vmatpush1.bf16.xpose.msra.mxu0 0
      %2232 = vmatprep.subr.bf16.mxu0 0
      %2233 = vmatpush1.bf16.xpose.msra.mxu0 0
      %2234 = vmatprep.mubr.bf16.mxu0 0
      %2235 = vmatmul.mubr.bf16.gmra.mrb[0].mxu0 %v2197
      %v2236 = vpop.f32.mrb[0].mxu0
      %v2237 = vadd.f32 0.0, %v2236
      %v2238 = vpop.f32.mrb[0].mxu0
      %v2239 = vpop.f32.mrb[0].mxu0
      %v2240 = vpop.f32.mrb[0].mxu0
      %2241 = vdwg.mxu0
      %2242 = vrot.lane.b32.xlu0 %v1525, 32
      %v2243 = vpop.permute.xlu0 %2242
      %2244 = vrot.lane.b32.xlu0 %v1527, 32
      %v2245 = vpop.permute.xlu0 %2244
      %v2247 = vsel %vm1530, %v2243, 0
      %v2250 = vsel %vm1530, %v2245, 0
      %2252 = vmatprep.subr.bf16.mxu0 0
      %2253 = vmatpush1.bf16.xpose.msra.mxu0 %v2250
      %2254 = vmatprep.subr.bf16.mxu0 0
      %2255 = vmatpush1.bf16.xpose.msra.mxu0 0
      %2256 = vmatprep.subr.bf16.mxu0 0
      %2257 = vmatpush1.bf16.xpose.msra.mxu0 0
      %2258 = vmatprep.subr.bf16.mxu0 0
      %2259 = vmatpush1.bf16.xpose.msra.mxu0 0
      %2260 = vmatprep.subr.bf16.mxu0 0
      %2261 = vmatpush1.bf16.xpose.msra.mxu0 0
      %2262 = vmatprep.subr.bf16.mxu0 0
      %2263 = vmatpush1.bf16.xpose.msra.mxu0 0
      %2264 = vmatprep.subr.bf16.mxu0 0
      %2265 = vmatpush1.bf16.xpose.msra.mxu0 0
      %2266 = vmatprep.subr.bf16.mxu0 0
      %2267 = vmatpush1.bf16.xpose.msra.mxu0 0
      %2268 = vmatprep.subr.bf16.mxu0 0
      %2269 = vmatpush1.bf16.xpose.msra.mxu0 0
      %2270 = vmatprep.subr.bf16.mxu0 0
      %2271 = vmatpush1.bf16.xpose.msra.mxu0 0
      %2272 = vmatprep.subr.bf16.mxu0 0
      %2273 = vmatpush1.bf16.xpose.msra.mxu0 0
      %2274 = vmatprep.subr.bf16.mxu0 0
      %2275 = vmatpush1.bf16.xpose.msra.mxu0 0
      %2276 = vmatprep.subr.bf16.mxu0 0
      %2277 = vmatpush1.bf16.xpose.msra.mxu0 0
      %2278 = vmatprep.subr.bf16.mxu0 0
      %2279 = vmatpush1.bf16.xpose.msra.mxu0 0
      %2280 = vmatprep.subr.bf16.mxu0 0
      %2281 = vmatpush1.bf16.xpose.msra.mxu0 0
      %2282 = vmatprep.subr.bf16.mxu0 0
      %2283 = vmatpush1.bf16.xpose.msra.mxu0 0
      %2284 = vmatprep.mubr.bf16.mxu0 0
      %2285 = vmatmul.mubr.bf16.gmra.mrb[0].mxu0 %v2247
      %v2286 = vpop.f32.mrb[0].mxu0
      %v2287 = vadd.f32 0.0, %v2286
      %v2288 = vpop.f32.mrb[0].mxu0
      %v2289 = vpop.f32.mrb[0].mxu0
      %v2290 = vpop.f32.mrb[0].mxu0
      %2291 = vdwg.mxu0
      %v2292 = vmul.f32 %v2237, 0.17677669
      %v2293 = vmul.f32 %v2287, 0.17677669
      %v2294 = vsel %vm1625, %v2292, -inf
      %2295 = vmax.xlane.f32.xlu0 %v2294
      %v2296 = vpop.xlane.xlu0 %2295
      %v2297 = vsel %vm1625, %v2293, -inf
      %2298 = vmax.xlane.f32.xlu0 %v2297
      %v2299 = vpop.xlane.xlu0 %2298
      %v2300 = vsub.f32 %v2292, %v2296
      %v2301 = vsub.f32 %v2293, %v2299
      %v2302 = vmul.f32 %v2300, 1.442695
      %v2303 = vpow.pop %v2302
      %v2304 = vmul.f32 %v2301, 1.442695
      %v2305 = vpow.pop %v2304
      %v2306 = vsel %vm1625, %v2303, 0.0
      %2307 = vadd.xlane.f32.xlu0 %v2306
      %v2308 = vpop.xlane.xlu0 %2307
      %v2309 = vsel %vm1625, %v2305, 0.0
      %2310 = vadd.xlane.f32.xlu0 %v2309
      %v2311 = vpop.xlane.xlu0 %2310
      %v2312 = vrcp.pop %v2308
      %v2313 = vmul.f32 %v2303, %v2312
      %v2314 = vrcp.pop %v2311
      %v2315 = vmul.f32 %v2305, %v2314
      %v2316 = vpack.c.bf16 %v2313, %v2313
      %v2317 = vpack.c.bf16 %v2315, %v2315
      %2318 = vrot.lane.b32.xlu0 %v1528, 32
      %v2319 = vpop.permute.xlu0 %2318
      %v2321 = vsel %vm1625, %v2316, 0
      %v2324 = vsel %vm412, %v2319, 0
      %2326 = vmatprep.subr.bf16.mxu0 0
      %2327 = vmatpush1.bf16.msra.mxu0 %v2324
      %2328 = vmatprep.subr.bf16.mxu0 0
      %2329 = vmatpush1.bf16.msra.mxu0 0
      %2330 = vmatprep.subr.bf16.mxu0 0
      %2331 = vmatpush1.bf16.msra.mxu0 0
      %2332 = vmatprep.subr.bf16.mxu0 0
      %2333 = vmatpush1.bf16.msra.mxu0 0
      %2334 = vmatprep.subr.bf16.mxu0 0
      %2335 = vmatpush1.bf16.msra.mxu0 0
      %2336 = vmatprep.subr.bf16.mxu0 0
      %2337 = vmatpush1.bf16.msra.mxu0 0
      %2338 = vmatprep.subr.bf16.mxu0 0
      %2339 = vmatpush1.bf16.msra.mxu0 0
      %2340 = vmatprep.subr.bf16.mxu0 0
      %2341 = vmatpush1.bf16.msra.mxu0 0
      %2342 = vmatprep.subr.bf16.mxu0 0
      %2343 = vmatpush1.bf16.msra.mxu0 0
      %2344 = vmatprep.subr.bf16.mxu0 0
      %2345 = vmatpush1.bf16.msra.mxu0 0
      %2346 = vmatprep.subr.bf16.mxu0 0
      %2347 = vmatpush1.bf16.msra.mxu0 0
      %2348 = vmatprep.subr.bf16.mxu0 0
      %2349 = vmatpush1.bf16.msra.mxu0 0
      %2350 = vmatprep.subr.bf16.mxu0 0
      %2351 = vmatpush1.bf16.msra.mxu0 0
      %2352 = vmatprep.subr.bf16.mxu0 0
      %2353 = vmatpush1.bf16.msra.mxu0 0
      %2354 = vmatprep.subr.bf16.mxu0 0
      %2355 = vmatpush1.bf16.msra.mxu0 0
      %2356 = vmatprep.subr.bf16.mxu0 0
      %2357 = vmatpush1.bf16.msra.mxu0 0
      %2358 = vmatprep.mubr.bf16.mxu0 0
      %2359 = vmatmul.mubr.bf16.gmra.mrb[0].mxu0 %v2321
      %v2360 = vpop.f32.mrb[0].mxu0
      %v2361 = vadd.f32 0.0, %v2360
      %v2362 = vpop.f32.mrb[0].mxu0
      %v2363 = vpop.f32.mrb[0].mxu0
      %v2364 = vpop.f32.mrb[0].mxu0
      %2365 = vdwg.mxu0
      %2366 = vrot.lane.b32.xlu0 %v1529, 32
      %v2367 = vpop.permute.xlu0 %2366
      %v2369 = vsel %vm1625, %v2317, 0
      %v2372 = vsel %vm412, %v2367, 0
      %2374 = vmatprep.subr.bf16.mxu0 0
      %2375 = vmatpush1.bf16.msra.mxu0 %v2372
      %2376 = vmatprep.subr.bf16.mxu0 0
      %2377 = vmatpush1.bf16.msra.mxu0 0
      %2378 = vmatprep.subr.bf16.mxu0 0
      %2379 = vmatpush1.bf16.msra.mxu0 0
      %2380 = vmatprep.subr.bf16.mxu0 0
      %2381 = vmatpush1.bf16.msra.mxu0 0
      %2382 = vmatprep.subr.bf16.mxu0 0
      %2383 = vmatpush1.bf16.msra.mxu0 0
      %2384 = vmatprep.subr.bf16.mxu0 0
      %2385 = vmatpush1.bf16.msra.mxu0 0
      %2386 = vmatprep.subr.bf16.mxu0 0
      %2387 = vmatpush1.bf16.msra.mxu0 0
      %2388 = vmatprep.subr.bf16.mxu0 0
      %2389 = vmatpush1.bf16.msra.mxu0 0
      %2390 = vmatprep.subr.bf16.mxu0 0
      %2391 = vmatpush1.bf16.msra.mxu0 0
      %2392 = vmatprep.subr.bf16.mxu0 0
      %2393 = vmatpush1.bf16.msra.mxu0 0
      %2394 = vmatprep.subr.bf16.mxu0 0
      %2395 = vmatpush1.bf16.msra.mxu0 0
      %2396 = vmatprep.subr.bf16.mxu0 0
      %2397 = vmatpush1.bf16.msra.mxu0 0
      %2398 = vmatprep.subr.bf16.mxu0 0
      %2399 = vmatpush1.bf16.msra.mxu0 0
      %2400 = vmatprep.subr.bf16.mxu0 0
      %2401 = vmatpush1.bf16.msra.mxu0 0
      %2402 = vmatprep.subr.bf16.mxu0 0
      %2403 = vmatpush1.bf16.msra.mxu0 0
      %2404 = vmatprep.subr.bf16.mxu0 0
      %2405 = vmatpush1.bf16.msra.mxu0 0
      %2406 = vmatprep.mubr.bf16.mxu0 0
      %2407 = vmatmul.mubr.bf16.gmra.mrb[0].mxu0 %v2369
      %v2408 = vpop.f32.mrb[0].mxu0
      %v2409 = vadd.f32 0.0, %v2408
      %v2410 = vpop.f32.mrb[0].mxu0
      %v2411 = vpop.f32.mrb[0].mxu0
      %v2412 = vpop.f32.mrb[0].mxu0
      %2413 = vdwg.mxu0
      %v2414 = vpack.c.bf16 %v1432, %v1432
      %v2415 = vpack.c.bf16 %v1436, %v1436
      %v2416 = vpack.c.bf16 %v1475, %v1475
      %v2417 = vpack.c.bf16 %v1479, %v1479
      %v2418 = vpack.c.bf16 %v1518, %v1518
      %v2419 = vpack.c.bf16 %v1522, %v1522
      %v2421 = vsel %vm1530, %v2414, 0
      %v2424 = vsel %vm1530, %v2416, 0
      %2426 = vmatprep.subr.bf16.mxu0 0
      %2427 = vmatpush1.bf16.xpose.msra.mxu0 %v2424
      %2428 = vmatprep.subr.bf16.mxu0 0
      %2429 = vmatpush1.bf16.xpose.msra.mxu0 0
      %2430 = vmatprep.subr.bf16.mxu0 0
      %2431 = vmatpush1.bf16.xpose.msra.mxu0 0
      %2432 = vmatprep.subr.bf16.mxu0 0
      %2433 = vmatpush1.bf16.xpose.msra.mxu0 0
      %2434 = vmatprep.subr.bf16.mxu0 0
      %2435 = vmatpush1.bf16.xpose.msra.mxu0 0
      %2436 = vmatprep.subr.bf16.mxu0 0
      %2437 = vmatpush1.bf16.xpose.msra.mxu0 0
      %2438 = vmatprep.subr.bf16.mxu0 0
      %2439 = vmatpush1.bf16.xpose.msra.mxu0 0
      %2440 = vmatprep.subr.bf16.mxu0 0
      %2441 = vmatpush1.bf16.xpose.msra.mxu0 0
      %2442 = vmatprep.subr.bf16.mxu0 0
      %2443 = vmatpush1.bf16.xpose.msra.mxu0 0
      %2444 = vmatprep.subr.bf16.mxu0 0
      %2445 = vmatpush1.bf16.xpose.msra.mxu0 0
      %2446 = vmatprep.subr.bf16.mxu0 0
      %2447 = vmatpush1.bf16.xpose.msra.mxu0 0
      %2448 = vmatprep.subr.bf16.mxu0 0
      %2449 = vmatpush1.bf16.xpose.msra.mxu0 0
      %2450 = vmatprep.subr.bf16.mxu0 0
      %2451 = vmatpush1.bf16.xpose.msra.mxu0 0
      %2452 = vmatprep.subr.bf16.mxu0 0
      %2453 = vmatpush1.bf16.xpose.msra.mxu0 0
      %2454 = vmatprep.subr.bf16.mxu0 0
      %2455 = vmatpush1.bf16.xpose.msra.mxu0 0
      %2456 = vmatprep.subr.bf16.mxu0 0
      %2457 = vmatpush1.bf16.xpose.msra.mxu0 0
      %2458 = vmatprep.mubr.bf16.mxu0 0
      %2459 = vmatmul.mubr.bf16.gmra.mrb[0].mxu0 %v2421
      %v2460 = vpop.f32.mrb[0].mxu0
      %v2461 = vadd.f32 0.0, %v2460
      %v2462 = vpop.f32.mrb[0].mxu0
      %v2463 = vpop.f32.mrb[0].mxu0
      %v2464 = vpop.f32.mrb[0].mxu0
      %2465 = vdwg.mxu0
      %v2467 = vsel %vm1530, %v2415, 0
      %v2470 = vsel %vm1530, %v2417, 0
      %2472 = vmatprep.subr.bf16.mxu0 0
      %2473 = vmatpush1.bf16.xpose.msra.mxu0 %v2470
      %2474 = vmatprep.subr.bf16.mxu0 0
      %2475 = vmatpush1.bf16.xpose.msra.mxu0 0
      %2476 = vmatprep.subr.bf16.mxu0 0
      %2477 = vmatpush1.bf16.xpose.msra.mxu0 0
      %2478 = vmatprep.subr.bf16.mxu0 0
      %2479 = vmatpush1.bf16.xpose.msra.mxu0 0
      %2480 = vmatprep.subr.bf16.mxu0 0
      %2481 = vmatpush1.bf16.xpose.msra.mxu0 0
      %2482 = vmatprep.subr.bf16.mxu0 0
      %2483 = vmatpush1.bf16.xpose.msra.mxu0 0
      %2484 = vmatprep.subr.bf16.mxu0 0
      %2485 = vmatpush1.bf16.xpose.msra.mxu0 0
      %2486 = vmatprep.subr.bf16.mxu0 0
      %2487 = vmatpush1.bf16.xpose.msra.mxu0 0
      %2488 = vmatprep.subr.bf16.mxu0 0
      %2489 = vmatpush1.bf16.xpose.msra.mxu0 0
      %2490 = vmatprep.subr.bf16.mxu0 0
      %2491 = vmatpush1.bf16.xpose.msra.mxu0 0
      %2492 = vmatprep.subr.bf16.mxu0 0
      %2493 = vmatpush1.bf16.xpose.msra.mxu0 0
      %2494 = vmatprep.subr.bf16.mxu0 0
      %2495 = vmatpush1.bf16.xpose.msra.mxu0 0
      %2496 = vmatprep.subr.bf16.mxu0 0
      %2497 = vmatpush1.bf16.xpose.msra.mxu0 0
      %2498 = vmatprep.subr.bf16.mxu0 0
      %2499 = vmatpush1.bf16.xpose.msra.mxu0 0
      %2500 = vmatprep.subr.bf16.mxu0 0
      %2501 = vmatpush1.bf16.xpose.msra.mxu0 0
      %2502 = vmatprep.subr.bf16.mxu0 0
      %2503 = vmatpush1.bf16.xpose.msra.mxu0 0
      %2504 = vmatprep.mubr.bf16.mxu0 0
      %2505 = vmatmul.mubr.bf16.gmra.mrb[0].mxu0 %v2467
      %v2506 = vpop.f32.mrb[0].mxu0
      %v2507 = vadd.f32 0.0, %v2506
      %v2508 = vpop.f32.mrb[0].mxu0
      %v2509 = vpop.f32.mrb[0].mxu0
      %v2510 = vpop.f32.mrb[0].mxu0
      %2511 = vdwg.mxu0
      %v2512 = vmul.f32 %v2461, 0.17677669
      %v2513 = vmul.f32 %v2507, 0.17677669
      %v2514 = vsel %vm1625, %v2512, -inf
      %2515 = vmax.xlane.f32.xlu0 %v2514
      %v2516 = vpop.xlane.xlu0 %2515
      %v2517 = vsel %vm1625, %v2513, -inf
      %2518 = vmax.xlane.f32.xlu0 %v2517
      %v2519 = vpop.xlane.xlu0 %2518
      %v2520 = vsub.f32 %v2512, %v2516
      %v2521 = vsub.f32 %v2513, %v2519
      %v2522 = vmul.f32 %v2520, 1.442695
      %v2523 = vpow.pop %v2522
      %v2524 = vmul.f32 %v2521, 1.442695
      %v2525 = vpow.pop %v2524
      %v2526 = vsel %vm1625, %v2523, 0.0
      %2527 = vadd.xlane.f32.xlu0 %v2526
      %v2528 = vpop.xlane.xlu0 %2527
      %v2529 = vsel %vm1625, %v2525, 0.0
      %2530 = vadd.xlane.f32.xlu0 %v2529
      %v2531 = vpop.xlane.xlu0 %2530
      %v2532 = vrcp.pop %v2528
      %v2533 = vmul.f32 %v2523, %v2532
      %v2534 = vrcp.pop %v2531
      %v2535 = vmul.f32 %v2525, %v2534
      %v2536 = vpack.c.bf16 %v2533, %v2533
      %v2537 = vpack.c.bf16 %v2535, %v2535
      %v2539 = vsel %vm1625, %v2536, 0
      %v2542 = vsel %vm412, %v2418, 0
      %2544 = vmatprep.subr.bf16.mxu0 0
      %2545 = vmatpush1.bf16.msra.mxu0 %v2542
      %2546 = vmatprep.subr.bf16.mxu0 0
      %2547 = vmatpush1.bf16.msra.mxu0 0
      %2548 = vmatprep.subr.bf16.mxu0 0
      %2549 = vmatpush1.bf16.msra.mxu0 0
      %2550 = vmatprep.subr.bf16.mxu0 0
      %2551 = vmatpush1.bf16.msra.mxu0 0
      %2552 = vmatprep.subr.bf16.mxu0 0
      %2553 = vmatpush1.bf16.msra.mxu0 0
      %2554 = vmatprep.subr.bf16.mxu0 0
      %2555 = vmatpush1.bf16.msra.mxu0 0
      %2556 = vmatprep.subr.bf16.mxu0 0
      %2557 = vmatpush1.bf16.msra.mxu0 0
      %2558 = vmatprep.subr.bf16.mxu0 0
      %2559 = vmatpush1.bf16.msra.mxu0 0
      %2560 = vmatprep.subr.bf16.mxu0 0
      %2561 = vmatpush1.bf16.msra.mxu0 0
      %2562 = vmatprep.subr.bf16.mxu0 0
      %2563 = vmatpush1.bf16.msra.mxu0 0
      %2564 = vmatprep.subr.bf16.mxu0 0
      %2565 = vmatpush1.bf16.msra.mxu0 0
      %2566 = vmatprep.subr.bf16.mxu0 0
      %2567 = vmatpush1.bf16.msra.mxu0 0
      %2568 = vmatprep.subr.bf16.mxu0 0
      %2569 = vmatpush1.bf16.msra.mxu0 0
      %2570 = vmatprep.subr.bf16.mxu0 0
      %2571 = vmatpush1.bf16.msra.mxu0 0
      %2572 = vmatprep.subr.bf16.mxu0 0
      %2573 = vmatpush1.bf16.msra.mxu0 0
      %2574 = vmatprep.subr.bf16.mxu0 0
      %2575 = vmatpush1.bf16.msra.mxu0 0
      %2576 = vmatprep.mubr.bf16.mxu0 0
      %2577 = vmatmul.mubr.bf16.gmra.mrb[0].mxu0 %v2539
      %v2578 = vpop.f32.mrb[0].mxu0
      %v2579 = vadd.f32 0.0, %v2578
      %v2580 = vpop.f32.mrb[0].mxu0
      %v2581 = vpop.f32.mrb[0].mxu0
      %v2582 = vpop.f32.mrb[0].mxu0
      %2583 = vdwg.mxu0
      %v2585 = vsel %vm1625, %v2537, 0
      %v2588 = vsel %vm412, %v2419, 0
      %2590 = vmatprep.subr.bf16.mxu0 0
      %2591 = vmatpush1.bf16.msra.mxu0 %v2588
      %2592 = vmatprep.subr.bf16.mxu0 0
      %2593 = vmatpush1.bf16.msra.mxu0 0
      %2594 = vmatprep.subr.bf16.mxu0 0
      %2595 = vmatpush1.bf16.msra.mxu0 0
      %2596 = vmatprep.subr.bf16.mxu0 0
      %2597 = vmatpush1.bf16.msra.mxu0 0
      %2598 = vmatprep.subr.bf16.mxu0 0
      %2599 = vmatpush1.bf16.msra.mxu0 0
      %2600 = vmatprep.subr.bf16.mxu0 0
      %2601 = vmatpush1.bf16.msra.mxu0 0
      %2602 = vmatprep.subr.bf16.mxu0 0
      %2603 = vmatpush1.bf16.msra.mxu0 0
      %2604 = vmatprep.subr.bf16.mxu0 0
      %2605 = vmatpush1.bf16.msra.mxu0 0
      %2606 = vmatprep.subr.bf16.mxu0 0
      %2607 = vmatpush1.bf16.msra.mxu0 0
      %2608 = vmatprep.subr.bf16.mxu0 0
      %2609 = vmatpush1.bf16.msra.mxu0 0
      %2610 = vmatprep.subr.bf16.mxu0 0
      %2611 = vmatpush1.bf16.msra.mxu0 0
      %2612 = vmatprep.subr.bf16.mxu0 0
      %2613 = vmatpush1.bf16.msra.mxu0 0
      %2614 = vmatprep.subr.bf16.mxu0 0
      %2615 = vmatpush1.bf16.msra.mxu0 0
      %2616 = vmatprep.subr.bf16.mxu0 0
      %2617 = vmatpush1.bf16.msra.mxu0 0
      %2618 = vmatprep.subr.bf16.mxu0 0
      %2619 = vmatpush1.bf16.msra.mxu0 0
      %2620 = vmatprep.subr.bf16.mxu0 0
      %2621 = vmatpush1.bf16.msra.mxu0 0
      %2622 = vmatprep.mubr.bf16.mxu0 0
      %2623 = vmatmul.mubr.bf16.gmra.mrb[0].mxu0 %v2585
      %v2624 = vpop.f32.mrb[0].mxu0
      %v2625 = vadd.f32 0.0, %v2624
      %v2626 = vpop.f32.mrb[0].mxu0
      %v2627 = vpop.f32.mrb[0].mxu0
      %v2628 = vpop.f32.mrb[0].mxu0
      %2629 = vdwg.mxu0
      %2631 = vrot.lane.b32.xlu0 %v2414, 96
      %v2632 = vpop.permute.xlu0 %2631
      %2634 = vrot.lane.b32.xlu0 %v2416, 96
      %v2635 = vpop.permute.xlu0 %2634
      %v2637 = vsel %vm1530, %v2632, 0
      %v2640 = vsel %vm1530, %v2635, 0
      %2642 = vmatprep.subr.bf16.mxu0 0
      %2643 = vmatpush1.bf16.xpose.msra.mxu0 %v2640
      %2644 = vmatprep.subr.bf16.mxu0 0
      %2645 = vmatpush1.bf16.xpose.msra.mxu0 0
      %2646 = vmatprep.subr.bf16.mxu0 0
      %2647 = vmatpush1.bf16.xpose.msra.mxu0 0
      %2648 = vmatprep.subr.bf16.mxu0 0
      %2649 = vmatpush1.bf16.xpose.msra.mxu0 0
      %2650 = vmatprep.subr.bf16.mxu0 0
      %2651 = vmatpush1.bf16.xpose.msra.mxu0 0
      %2652 = vmatprep.subr.bf16.mxu0 0
      %2653 = vmatpush1.bf16.xpose.msra.mxu0 0
      %2654 = vmatprep.subr.bf16.mxu0 0
      %2655 = vmatpush1.bf16.xpose.msra.mxu0 0
      %2656 = vmatprep.subr.bf16.mxu0 0
      %2657 = vmatpush1.bf16.xpose.msra.mxu0 0
      %2658 = vmatprep.subr.bf16.mxu0 0
      %2659 = vmatpush1.bf16.xpose.msra.mxu0 0
      %2660 = vmatprep.subr.bf16.mxu0 0
      %2661 = vmatpush1.bf16.xpose.msra.mxu0 0
      %2662 = vmatprep.subr.bf16.mxu0 0
      %2663 = vmatpush1.bf16.xpose.msra.mxu0 0
      %2664 = vmatprep.subr.bf16.mxu0 0
      %2665 = vmatpush1.bf16.xpose.msra.mxu0 0
      %2666 = vmatprep.subr.bf16.mxu0 0
      %2667 = vmatpush1.bf16.xpose.msra.mxu0 0
      %2668 = vmatprep.subr.bf16.mxu0 0
      %2669 = vmatpush1.bf16.xpose.msra.mxu0 0
      %2670 = vmatprep.subr.bf16.mxu0 0
      %2671 = vmatpush1.bf16.xpose.msra.mxu0 0
      %2672 = vmatprep.subr.bf16.mxu0 0
      %2673 = vmatpush1.bf16.xpose.msra.mxu0 0
      %2674 = vmatprep.mubr.bf16.mxu0 0
      %2675 = vmatmul.mubr.bf16.gmra.mrb[0].mxu0 %v2637
      %v2676 = vpop.f32.mrb[0].mxu0
      %v2677 = vadd.f32 0.0, %v2676
      %v2678 = vpop.f32.mrb[0].mxu0
      %v2679 = vpop.f32.mrb[0].mxu0
      %v2680 = vpop.f32.mrb[0].mxu0
      %2681 = vdwg.mxu0
      %2683 = vrot.lane.b32.xlu0 %v2415, 96
      %v2684 = vpop.permute.xlu0 %2683
      %2686 = vrot.lane.b32.xlu0 %v2417, 96
      %v2687 = vpop.permute.xlu0 %2686
      %v2689 = vsel %vm1530, %v2684, 0
      %v2692 = vsel %vm1530, %v2687, 0
      %2694 = vmatprep.subr.bf16.mxu0 0
      %2695 = vmatpush1.bf16.xpose.msra.mxu0 %v2692
      %2696 = vmatprep.subr.bf16.mxu0 0
      %2697 = vmatpush1.bf16.xpose.msra.mxu0 0
      %2698 = vmatprep.subr.bf16.mxu0 0
      %2699 = vmatpush1.bf16.xpose.msra.mxu0 0
      %2700 = vmatprep.subr.bf16.mxu0 0
      %2701 = vmatpush1.bf16.xpose.msra.mxu0 0
      %2702 = vmatprep.subr.bf16.mxu0 0
      %2703 = vmatpush1.bf16.xpose.msra.mxu0 0
      %2704 = vmatprep.subr.bf16.mxu0 0
      %2705 = vmatpush1.bf16.xpose.msra.mxu0 0
      %2706 = vmatprep.subr.bf16.mxu0 0
      %2707 = vmatpush1.bf16.xpose.msra.mxu0 0
      %2708 = vmatprep.subr.bf16.mxu0 0
      %2709 = vmatpush1.bf16.xpose.msra.mxu0 0
      %2710 = vmatprep.subr.bf16.mxu0 0
      %2711 = vmatpush1.bf16.xpose.msra.mxu0 0
      %2712 = vmatprep.subr.bf16.mxu0 0
      %2713 = vmatpush1.bf16.xpose.msra.mxu0 0
      %2714 = vmatprep.subr.bf16.mxu0 0
      %2715 = vmatpush1.bf16.xpose.msra.mxu0 0
      %2716 = vmatprep.subr.bf16.mxu0 0
      %2717 = vmatpush1.bf16.xpose.msra.mxu0 0
      %2718 = vmatprep.subr.bf16.mxu0 0
      %2719 = vmatpush1.bf16.xpose.msra.mxu0 0
      %2720 = vmatprep.subr.bf16.mxu0 0
      %2721 = vmatpush1.bf16.xpose.msra.mxu0 0
      %2722 = vmatprep.subr.bf16.mxu0 0
      %2723 = vmatpush1.bf16.xpose.msra.mxu0 0
      %2724 = vmatprep.subr.bf16.mxu0 0
      %2725 = vmatpush1.bf16.xpose.msra.mxu0 0
      %2726 = vmatprep.mubr.bf16.mxu0 0
      %2727 = vmatmul.mubr.bf16.gmra.mrb[0].mxu0 %v2689
      %v2728 = vpop.f32.mrb[0].mxu0
      %v2729 = vadd.f32 0.0, %v2728
      %v2730 = vpop.f32.mrb[0].mxu0
      %v2731 = vpop.f32.mrb[0].mxu0
      %v2732 = vpop.f32.mrb[0].mxu0
      %2733 = vdwg.mxu0
      %v2734 = vmul.f32 %v2677, 0.17677669
      %v2735 = vmul.f32 %v2729, 0.17677669
      %v2736 = vsel %vm1625, %v2734, -inf
      %2737 = vmax.xlane.f32.xlu0 %v2736
      %v2738 = vpop.xlane.xlu0 %2737
      %v2739 = vsel %vm1625, %v2735, -inf
      %2740 = vmax.xlane.f32.xlu0 %v2739
      %v2741 = vpop.xlane.xlu0 %2740
      %v2742 = vsub.f32 %v2734, %v2738
      %v2743 = vsub.f32 %v2735, %v2741
      %v2744 = vmul.f32 %v2742, 1.442695
      %v2745 = vpow.pop %v2744
      %v2746 = vmul.f32 %v2743, 1.442695
      %v2747 = vpow.pop %v2746
      %v2748 = vsel %vm1625, %v2745, 0.0
      %2749 = vadd.xlane.f32.xlu0 %v2748
      %v2750 = vpop.xlane.xlu0 %2749
      %v2751 = vsel %vm1625, %v2747, 0.0
      %2752 = vadd.xlane.f32.xlu0 %v2751
      %v2753 = vpop.xlane.xlu0 %2752
      %v2754 = vrcp.pop %v2750
      %v2755 = vmul.f32 %v2745, %v2754
      %v2756 = vrcp.pop %v2753
      %v2757 = vmul.f32 %v2747, %v2756
      %v2758 = vpack.c.bf16 %v2755, %v2755
      %v2759 = vpack.c.bf16 %v2757, %v2757
      %2761 = vrot.lane.b32.xlu0 %v2418, 96
      %v2762 = vpop.permute.xlu0 %2761
      %v2764 = vsel %vm1625, %v2758, 0
      %v2767 = vsel %vm412, %v2762, 0
      %2769 = vmatprep.subr.bf16.mxu0 0
      %2770 = vmatpush1.bf16.msra.mxu0 %v2767
      %2771 = vmatprep.subr.bf16.mxu0 0
      %2772 = vmatpush1.bf16.msra.mxu0 0
      %2773 = vmatprep.subr.bf16.mxu0 0
      %2774 = vmatpush1.bf16.msra.mxu0 0
      %2775 = vmatprep.subr.bf16.mxu0 0
      %2776 = vmatpush1.bf16.msra.mxu0 0
      %2777 = vmatprep.subr.bf16.mxu0 0
      %2778 = vmatpush1.bf16.msra.mxu0 0
      %2779 = vmatprep.subr.bf16.mxu0 0
      %2780 = vmatpush1.bf16.msra.mxu0 0
      %2781 = vmatprep.subr.bf16.mxu0 0
      %2782 = vmatpush1.bf16.msra.mxu0 0
      %2783 = vmatprep.subr.bf16.mxu0 0
      %2784 = vmatpush1.bf16.msra.mxu0 0
      %2785 = vmatprep.subr.bf16.mxu0 0
      %2786 = vmatpush1.bf16.msra.mxu0 0
      %2787 = vmatprep.subr.bf16.mxu0 0
      %2788 = vmatpush1.bf16.msra.mxu0 0
      %2789 = vmatprep.subr.bf16.mxu0 0
      %2790 = vmatpush1.bf16.msra.mxu0 0
      %2791 = vmatprep.subr.bf16.mxu0 0
      %2792 = vmatpush1.bf16.msra.mxu0 0
      %2793 = vmatprep.subr.bf16.mxu0 0
      %2794 = vmatpush1.bf16.msra.mxu0 0
      %2795 = vmatprep.subr.bf16.mxu0 0
      %2796 = vmatpush1.bf16.msra.mxu0 0
      %2797 = vmatprep.subr.bf16.mxu0 0
      %2798 = vmatpush1.bf16.msra.mxu0 0
      %2799 = vmatprep.subr.bf16.mxu0 0
      %2800 = vmatpush1.bf16.msra.mxu0 0
      %2801 = vmatprep.mubr.bf16.mxu0 0
      %2802 = vmatmul.mubr.bf16.gmra.mrb[0].mxu0 %v2764
      %v2803 = vpop.f32.mrb[0].mxu0
      %v2804 = vadd.f32 0.0, %v2803
      %v2805 = vpop.f32.mrb[0].mxu0
      %v2806 = vpop.f32.mrb[0].mxu0
      %v2807 = vpop.f32.mrb[0].mxu0
      %2808 = vdwg.mxu0
      %2810 = vrot.lane.b32.xlu0 %v2419, 96
      %v2811 = vpop.permute.xlu0 %2810
      %v2813 = vsel %vm1625, %v2759, 0
      %v2816 = vsel %vm412, %v2811, 0
      %2818 = vmatprep.subr.bf16.mxu0 0
      %2819 = vmatpush1.bf16.msra.mxu0 %v2816
      %2820 = vmatprep.subr.bf16.mxu0 0
      %2821 = vmatpush1.bf16.msra.mxu0 0
      %2822 = vmatprep.subr.bf16.mxu0 0
      %2823 = vmatpush1.bf16.msra.mxu0 0
      %2824 = vmatprep.subr.bf16.mxu0 0
      %2825 = vmatpush1.bf16.msra.mxu0 0
      %2826 = vmatprep.subr.bf16.mxu0 0
      %2827 = vmatpush1.bf16.msra.mxu0 0
      %2828 = vmatprep.subr.bf16.mxu0 0
      %2829 = vmatpush1.bf16.msra.mxu0 0
      %2830 = vmatprep.subr.bf16.mxu0 0
      %2831 = vmatpush1.bf16.msra.mxu0 0
      %2832 = vmatprep.subr.bf16.mxu0 0
      %2833 = vmatpush1.bf16.msra.mxu0 0
      %2834 = vmatprep.subr.bf16.mxu0 0
      %2835 = vmatpush1.bf16.msra.mxu0 0
      %2836 = vmatprep.subr.bf16.mxu0 0
      %2837 = vmatpush1.bf16.msra.mxu0 0
      %2838 = vmatprep.subr.bf16.mxu0 0
      %2839 = vmatpush1.bf16.msra.mxu0 0
      %2840 = vmatprep.subr.bf16.mxu0 0
      %2841 = vmatpush1.bf16.msra.mxu0 0
      %2842 = vmatprep.subr.bf16.mxu0 0
      %2843 = vmatpush1.bf16.msra.mxu0 0
      %2844 = vmatprep.subr.bf16.mxu0 0
      %2845 = vmatpush1.bf16.msra.mxu0 0
      %2846 = vmatprep.subr.bf16.mxu0 0
      %2847 = vmatpush1.bf16.msra.mxu0 0
      %2848 = vmatprep.subr.bf16.mxu0 0
      %2849 = vmatpush1.bf16.msra.mxu0 0
      %2850 = vmatprep.mubr.bf16.mxu0 0
      %2851 = vmatmul.mubr.bf16.gmra.mrb[0].mxu0 %v2813
      %v2852 = vpop.f32.mrb[0].mxu0
      %v2853 = vadd.f32 0.0, %v2852
      %v2854 = vpop.f32.mrb[0].mxu0
      %v2855 = vpop.f32.mrb[0].mxu0
      %v2856 = vpop.f32.mrb[0].mxu0
      %2857 = vdwg.mxu0
      %2858 = vrot.lane.b32.xlu0 %v2414, 64
      %v2859 = vpop.permute.xlu0 %2858
      %2860 = vrot.lane.b32.xlu0 %v2416, 64
      %v2861 = vpop.permute.xlu0 %2860
      %v2863 = vsel %vm1530, %v2859, 0
      %v2866 = vsel %vm1530, %v2861, 0
      %2868 = vmatprep.subr.bf16.mxu0 0
      %2869 = vmatpush1.bf16.xpose.msra.mxu0 %v2866
      %2870 = vmatprep.subr.bf16.mxu0 0
      %2871 = vmatpush1.bf16.xpose.msra.mxu0 0
      %2872 = vmatprep.subr.bf16.mxu0 0
      %2873 = vmatpush1.bf16.xpose.msra.mxu0 0
      %2874 = vmatprep.subr.bf16.mxu0 0
      %2875 = vmatpush1.bf16.xpose.msra.mxu0 0
      %2876 = vmatprep.subr.bf16.mxu0 0
      %2877 = vmatpush1.bf16.xpose.msra.mxu0 0
      %2878 = vmatprep.subr.bf16.mxu0 0
      %2879 = vmatpush1.bf16.xpose.msra.mxu0 0
      %2880 = vmatprep.subr.bf16.mxu0 0
      %2881 = vmatpush1.bf16.xpose.msra.mxu0 0
      %2882 = vmatprep.subr.bf16.mxu0 0
      %2883 = vmatpush1.bf16.xpose.msra.mxu0 0
      %2884 = vmatprep.subr.bf16.mxu0 0
      %2885 = vmatpush1.bf16.xpose.msra.mxu0 0
      %2886 = vmatprep.subr.bf16.mxu0 0
      %2887 = vmatpush1.bf16.xpose.msra.mxu0 0
      %2888 = vmatprep.subr.bf16.mxu0 0
      %2889 = vmatpush1.bf16.xpose.msra.mxu0 0
      %2890 = vmatprep.subr.bf16.mxu0 0
      %2891 = vmatpush1.bf16.xpose.msra.mxu0 0
      %2892 = vmatprep.subr.bf16.mxu0 0
      %2893 = vmatpush1.bf16.xpose.msra.mxu0 0
      %2894 = vmatprep.subr.bf16.mxu0 0
      %2895 = vmatpush1.bf16.xpose.msra.mxu0 0
      %2896 = vmatprep.subr.bf16.mxu0 0
      %2897 = vmatpush1.bf16.xpose.msra.mxu0 0
      %2898 = vmatprep.subr.bf16.mxu0 0
      %2899 = vmatpush1.bf16.xpose.msra.mxu0 0
      %2900 = vmatprep.mubr.bf16.mxu0 0
      %2901 = vmatmul.mubr.bf16.gmra.mrb[0].mxu0 %v2863
      %v2902 = vpop.f32.mrb[0].mxu0
      %v2903 = vadd.f32 0.0, %v2902
      %v2904 = vpop.f32.mrb[0].mxu0
      %v2905 = vpop.f32.mrb[0].mxu0
      %v2906 = vpop.f32.mrb[0].mxu0
      %2907 = vdwg.mxu0
      %2908 = vrot.lane.b32.xlu0 %v2415, 64
      %v2909 = vpop.permute.xlu0 %2908
      %2910 = vrot.lane.b32.xlu0 %v2417, 64
      %v2911 = vpop.permute.xlu0 %2910
      %v2913 = vsel %vm1530, %v2909, 0
      %v2916 = vsel %vm1530, %v2911, 0
      %2918 = vmatprep.subr.bf16.mxu0 0
      %2919 = vmatpush1.bf16.xpose.msra.mxu0 %v2916
      %2920 = vmatprep.subr.bf16.mxu0 0
      %2921 = vmatpush1.bf16.xpose.msra.mxu0 0
      %2922 = vmatprep.subr.bf16.mxu0 0
      %2923 = vmatpush1.bf16.xpose.msra.mxu0 0
      %2924 = vmatprep.subr.bf16.mxu0 0
      %2925 = vmatpush1.bf16.xpose.msra.mxu0 0
      %2926 = vmatprep.subr.bf16.mxu0 0
      %2927 = vmatpush1.bf16.xpose.msra.mxu0 0
      %2928 = vmatprep.subr.bf16.mxu0 0
      %2929 = vmatpush1.bf16.xpose.msra.mxu0 0
      %2930 = vmatprep.subr.bf16.mxu0 0
      %2931 = vmatpush1.bf16.xpose.msra.mxu0 0
      %2932 = vmatprep.subr.bf16.mxu0 0
      %2933 = vmatpush1.bf16.xpose.msra.mxu0 0
      %2934 = vmatprep.subr.bf16.mxu0 0
      %2935 = vmatpush1.bf16.xpose.msra.mxu0 0
      %2936 = vmatprep.subr.bf16.mxu0 0
      %2937 = vmatpush1.bf16.xpose.msra.mxu0 0
      %2938 = vmatprep.subr.bf16.mxu0 0
      %2939 = vmatpush1.bf16.xpose.msra.mxu0 0
      %2940 = vmatprep.subr.bf16.mxu0 0
      %2941 = vmatpush1.bf16.xpose.msra.mxu0 0
      %2942 = vmatprep.subr.bf16.mxu0 0
      %2943 = vmatpush1.bf16.xpose.msra.mxu0 0
      %2944 = vmatprep.subr.bf16.mxu0 0
      %2945 = vmatpush1.bf16.xpose.msra.mxu0 0
      %2946 = vmatprep.subr.bf16.mxu0 0
      %2947 = vmatpush1.bf16.xpose.msra.mxu0 0
      %2948 = vmatprep.subr.bf16.mxu0 0
      %2949 = vmatpush1.bf16.xpose.msra.mxu0 0
      %2950 = vmatprep.mubr.bf16.mxu0 0
      %2951 = vmatmul.mubr.bf16.gmra.mrb[0].mxu0 %v2913
      %v2952 = vpop.f32.mrb[0].mxu0
      %v2953 = vadd.f32 0.0, %v2952
      %v2954 = vpop.f32.mrb[0].mxu0
      %v2955 = vpop.f32.mrb[0].mxu0
      %v2956 = vpop.f32.mrb[0].mxu0
      %2957 = vdwg.mxu0
      %v2958 = vmul.f32 %v2903, 0.17677669
      %v2959 = vmul.f32 %v2953, 0.17677669
      %v2960 = vsel %vm1625, %v2958, -inf
      %2961 = vmax.xlane.f32.xlu0 %v2960
      %v2962 = vpop.xlane.xlu0 %2961
      %v2963 = vsel %vm1625, %v2959, -inf
      %2964 = vmax.xlane.f32.xlu0 %v2963
      %v2965 = vpop.xlane.xlu0 %2964
      %v2966 = vsub.f32 %v2958, %v2962
      %v2967 = vsub.f32 %v2959, %v2965
      %v2968 = vmul.f32 %v2966, 1.442695
      %v2969 = vpow.pop %v2968
      %v2970 = vmul.f32 %v2967, 1.442695
      %v2971 = vpow.pop %v2970
      %v2972 = vsel %vm1625, %v2969, 0.0
      %2973 = vadd.xlane.f32.xlu0 %v2972
      %v2974 = vpop.xlane.xlu0 %2973
      %v2975 = vsel %vm1625, %v2971, 0.0
      %2976 = vadd.xlane.f32.xlu0 %v2975
      %v2977 = vpop.xlane.xlu0 %2976
      %v2978 = vrcp.pop %v2974
      %v2979 = vmul.f32 %v2969, %v2978
      %v2980 = vrcp.pop %v2977
      %v2981 = vmul.f32 %v2971, %v2980
      %v2982 = vpack.c.bf16 %v2979, %v2979
      %v2983 = vpack.c.bf16 %v2981, %v2981
      %2984 = vrot.lane.b32.xlu0 %v2418, 64
      %v2985 = vpop.permute.xlu0 %2984
      %v2987 = vsel %vm1625, %v2982, 0
      %v2990 = vsel %vm412, %v2985, 0
      %2992 = vmatprep.subr.bf16.mxu0 0
      %2993 = vmatpush1.bf16.msra.mxu0 %v2990
      %2994 = vmatprep.subr.bf16.mxu0 0
      %2995 = vmatpush1.bf16.msra.mxu0 0
      %2996 = vmatprep.subr.bf16.mxu0 0
      %2997 = vmatpush1.bf16.msra.mxu0 0
      %2998 = vmatprep.subr.bf16.mxu0 0
      %2999 = vmatpush1.bf16.msra.mxu0 0
      %3000 = vmatprep.subr.bf16.mxu0 0
      %3001 = vmatpush1.bf16.msra.mxu0 0
      %3002 = vmatprep.subr.bf16.mxu0 0
      %3003 = vmatpush1.bf16.msra.mxu0 0
      %3004 = vmatprep.subr.bf16.mxu0 0
      %3005 = vmatpush1.bf16.msra.mxu0 0
      %3006 = vmatprep.subr.bf16.mxu0 0
      %3007 = vmatpush1.bf16.msra.mxu0 0
      %3008 = vmatprep.subr.bf16.mxu0 0
      %3009 = vmatpush1.bf16.msra.mxu0 0
      %3010 = vmatprep.subr.bf16.mxu0 0
      %3011 = vmatpush1.bf16.msra.mxu0 0
      %3012 = vmatprep.subr.bf16.mxu0 0
      %3013 = vmatpush1.bf16.msra.mxu0 0
      %3014 = vmatprep.subr.bf16.mxu0 0
      %3015 = vmatpush1.bf16.msra.mxu0 0
      %3016 = vmatprep.subr.bf16.mxu0 0
      %3017 = vmatpush1.bf16.msra.mxu0 0
      %3018 = vmatprep.subr.bf16.mxu0 0
      %3019 = vmatpush1.bf16.msra.mxu0 0
      %3020 = vmatprep.subr.bf16.mxu0 0
      %3021 = vmatpush1.bf16.msra.mxu0 0
      %3022 = vmatprep.subr.bf16.mxu0 0
      %3023 = vmatpush1.bf16.msra.mxu0 0
      %3024 = vmatprep.mubr.bf16.mxu0 0
      %3025 = vmatmul.mubr.bf16.gmra.mrb[0].mxu0 %v2987
      %v3026 = vpop.f32.mrb[0].mxu0
      %v3027 = vadd.f32 0.0, %v3026
      %v3028 = vpop.f32.mrb[0].mxu0
      %v3029 = vpop.f32.mrb[0].mxu0
      %v3030 = vpop.f32.mrb[0].mxu0
      %3031 = vdwg.mxu0
      %3032 = vrot.lane.b32.xlu0 %v2419, 64
      %v3033 = vpop.permute.xlu0 %3032
      %v3035 = vsel %vm1625, %v2983, 0
      %v3038 = vsel %vm412, %v3033, 0
      %3040 = vmatprep.subr.bf16.mxu0 0
      %3041 = vmatpush1.bf16.msra.mxu0 %v3038
      %3042 = vmatprep.subr.bf16.mxu0 0
      %3043 = vmatpush1.bf16.msra.mxu0 0
      %3044 = vmatprep.subr.bf16.mxu0 0
      %3045 = vmatpush1.bf16.msra.mxu0 0
      %3046 = vmatprep.subr.bf16.mxu0 0
      %3047 = vmatpush1.bf16.msra.mxu0 0
      %3048 = vmatprep.subr.bf16.mxu0 0
      %3049 = vmatpush1.bf16.msra.mxu0 0
      %3050 = vmatprep.subr.bf16.mxu0 0
      %3051 = vmatpush1.bf16.msra.mxu0 0
      %3052 = vmatprep.subr.bf16.mxu0 0
      %3053 = vmatpush1.bf16.msra.mxu0 0
      %3054 = vmatprep.subr.bf16.mxu0 0
      %3055 = vmatpush1.bf16.msra.mxu0 0
      %3056 = vmatprep.subr.bf16.mxu0 0
      %3057 = vmatpush1.bf16.msra.mxu0 0
      %3058 = vmatprep.subr.bf16.mxu0 0
      %3059 = vmatpush1.bf16.msra.mxu0 0
      %3060 = vmatprep.subr.bf16.mxu0 0
      %3061 = vmatpush1.bf16.msra.mxu0 0
      %3062 = vmatprep.subr.bf16.mxu0 0
      %3063 = vmatpush1.bf16.msra.mxu0 0
      %3064 = vmatprep.subr.bf16.mxu0 0
      %3065 = vmatpush1.bf16.msra.mxu0 0
      %3066 = vmatprep.subr.bf16.mxu0 0
      %3067 = vmatpush1.bf16.msra.mxu0 0
      %3068 = vmatprep.subr.bf16.mxu0 0
      %3069 = vmatpush1.bf16.msra.mxu0 0
      %3070 = vmatprep.subr.bf16.mxu0 0
      %3071 = vmatpush1.bf16.msra.mxu0 0
      %3072 = vmatprep.mubr.bf16.mxu0 0
      %3073 = vmatmul.mubr.bf16.gmra.mrb[0].mxu0 %v3035
      %v3074 = vpop.f32.mrb[0].mxu0
      %v3075 = vadd.f32 0.0, %v3074
      %v3076 = vpop.f32.mrb[0].mxu0
      %v3077 = vpop.f32.mrb[0].mxu0
      %v3078 = vpop.f32.mrb[0].mxu0
      %3079 = vdwg.mxu0
      %3080 = vrot.lane.b32.xlu0 %v2414, 32
      %v3081 = vpop.permute.xlu0 %3080
      %3082 = vrot.lane.b32.xlu0 %v2416, 32
      %v3083 = vpop.permute.xlu0 %3082
      %v3085 = vsel %vm1530, %v3081, 0
      %v3088 = vsel %vm1530, %v3083, 0
      %3090 = vmatprep.subr.bf16.mxu0 0
      %3091 = vmatpush1.bf16.xpose.msra.mxu0 %v3088
      %3092 = vmatprep.subr.bf16.mxu0 0
      %3093 = vmatpush1.bf16.xpose.msra.mxu0 0
      %3094 = vmatprep.subr.bf16.mxu0 0
      %3095 = vmatpush1.bf16.xpose.msra.mxu0 0
      %3096 = vmatprep.subr.bf16.mxu0 0
      %3097 = vmatpush1.bf16.xpose.msra.mxu0 0
      %3098 = vmatprep.subr.bf16.mxu0 0
      %3099 = vmatpush1.bf16.xpose.msra.mxu0 0
      %3100 = vmatprep.subr.bf16.mxu0 0
      %3101 = vmatpush1.bf16.xpose.msra.mxu0 0
      %3102 = vmatprep.subr.bf16.mxu0 0
      %3103 = vmatpush1.bf16.xpose.msra.mxu0 0
      %3104 = vmatprep.subr.bf16.mxu0 0
      %3105 = vmatpush1.bf16.xpose.msra.mxu0 0
      %3106 = vmatprep.subr.bf16.mxu0 0
      %3107 = vmatpush1.bf16.xpose.msra.mxu0 0
      %3108 = vmatprep.subr.bf16.mxu0 0
      %3109 = vmatpush1.bf16.xpose.msra.mxu0 0
      %3110 = vmatprep.subr.bf16.mxu0 0
      %3111 = vmatpush1.bf16.xpose.msra.mxu0 0
      %3112 = vmatprep.subr.bf16.mxu0 0
      %3113 = vmatpush1.bf16.xpose.msra.mxu0 0
      %3114 = vmatprep.subr.bf16.mxu0 0
      %3115 = vmatpush1.bf16.xpose.msra.mxu0 0
      %3116 = vmatprep.subr.bf16.mxu0 0
      %3117 = vmatpush1.bf16.xpose.msra.mxu0 0
      %3118 = vmatprep.subr.bf16.mxu0 0
      %3119 = vmatpush1.bf16.xpose.msra.mxu0 0
      %3120 = vmatprep.subr.bf16.mxu0 0
      %3121 = vmatpush1.bf16.xpose.msra.mxu0 0
      %3122 = vmatprep.mubr.bf16.mxu0 0
      %3123 = vmatmul.mubr.bf16.gmra.mrb[0].mxu0 %v3085
      %v3124 = vpop.f32.mrb[0].mxu0
      %v3125 = vadd.f32 0.0, %v3124
      %v3126 = vpop.f32.mrb[0].mxu0
      %v3127 = vpop.f32.mrb[0].mxu0
      %v3128 = vpop.f32.mrb[0].mxu0
      %3129 = vdwg.mxu0
      %3130 = vrot.lane.b32.xlu0 %v2415, 32
      %v3131 = vpop.permute.xlu0 %3130
      %3132 = vrot.lane.b32.xlu0 %v2417, 32
      %v3133 = vpop.permute.xlu0 %3132
      %v3135 = vsel %vm1530, %v3131, 0
      %v3138 = vsel %vm1530, %v3133, 0
      %3140 = vmatprep.subr.bf16.mxu0 0
      %3141 = vmatpush1.bf16.xpose.msra.mxu0 %v3138
      %3142 = vmatprep.subr.bf16.mxu0 0
      %3143 = vmatpush1.bf16.xpose.msra.mxu0 0
      %3144 = vmatprep.subr.bf16.mxu0 0
      %3145 = vmatpush1.bf16.xpose.msra.mxu0 0
      %3146 = vmatprep.subr.bf16.mxu0 0
      %3147 = vmatpush1.bf16.xpose.msra.mxu0 0
      %3148 = vmatprep.subr.bf16.mxu0 0
      %3149 = vmatpush1.bf16.xpose.msra.mxu0 0
      %3150 = vmatprep.subr.bf16.mxu0 0
      %3151 = vmatpush1.bf16.xpose.msra.mxu0 0
      %3152 = vmatprep.subr.bf16.mxu0 0
      %3153 = vmatpush1.bf16.xpose.msra.mxu0 0
      %3154 = vmatprep.subr.bf16.mxu0 0
      %3155 = vmatpush1.bf16.xpose.msra.mxu0 0
      %3156 = vmatprep.subr.bf16.mxu0 0
      %3157 = vmatpush1.bf16.xpose.msra.mxu0 0
      %3158 = vmatprep.subr.bf16.mxu0 0
      %3159 = vmatpush1.bf16.xpose.msra.mxu0 0
      %3160 = vmatprep.subr.bf16.mxu0 0
      %3161 = vmatpush1.bf16.xpose.msra.mxu0 0
      %3162 = vmatprep.subr.bf16.mxu0 0
      %3163 = vmatpush1.bf16.xpose.msra.mxu0 0
      %3164 = vmatprep.subr.bf16.mxu0 0
      %3165 = vmatpush1.bf16.xpose.msra.mxu0 0
      %3166 = vmatprep.subr.bf16.mxu0 0
      %3167 = vmatpush1.bf16.xpose.msra.mxu0 0
      %3168 = vmatprep.subr.bf16.mxu0 0
      %3169 = vmatpush1.bf16.xpose.msra.mxu0 0
      %3170 = vmatprep.subr.bf16.mxu0 0
      %3171 = vmatpush1.bf16.xpose.msra.mxu0 0
      %3172 = vmatprep.mubr.bf16.mxu0 0
      %3173 = vmatmul.mubr.bf16.gmra.mrb[0].mxu0 %v3135
      %v3174 = vpop.f32.mrb[0].mxu0
      %v3175 = vadd.f32 0.0, %v3174
      %v3176 = vpop.f32.mrb[0].mxu0
      %v3177 = vpop.f32.mrb[0].mxu0
      %v3178 = vpop.f32.mrb[0].mxu0
      %3179 = vdwg.mxu0
      %v3180 = vmul.f32 %v3125, 0.17677669
      %v3181 = vmul.f32 %v3175, 0.17677669
      %v3182 = vsel %vm1625, %v3180, -inf
      %3183 = vmax.xlane.f32.xlu0 %v3182
      %v3184 = vpop.xlane.xlu0 %3183
      %v3185 = vsel %vm1625, %v3181, -inf
      %3186 = vmax.xlane.f32.xlu0 %v3185
      %v3187 = vpop.xlane.xlu0 %3186
      %v3188 = vsub.f32 %v3180, %v3184
      %v3189 = vsub.f32 %v3181, %v3187
      %v3190 = vmul.f32 %v3188, 1.442695
      %v3191 = vpow.pop %v3190
      %v3192 = vmul.f32 %v3189, 1.442695
      %v3193 = vpow.pop %v3192
      %v3194 = vsel %vm1625, %v3191, 0.0
      %3195 = vadd.xlane.f32.xlu0 %v3194
      %v3196 = vpop.xlane.xlu0 %3195
      %v3197 = vsel %vm1625, %v3193, 0.0
      %3198 = vadd.xlane.f32.xlu0 %v3197
      %v3199 = vpop.xlane.xlu0 %3198
      %v3200 = vrcp.pop %v3196
      %v3201 = vmul.f32 %v3191, %v3200
      %v3202 = vrcp.pop %v3199
      %v3203 = vmul.f32 %v3193, %v3202
      %v3204 = vpack.c.bf16 %v3201, %v3201
      %v3205 = vpack.c.bf16 %v3203, %v3203
      %3206 = vrot.lane.b32.xlu0 %v2418, 32
      %v3207 = vpop.permute.xlu0 %3206
      %v3209 = vsel %vm1625, %v3204, 0
      %v3212 = vsel %vm412, %v3207, 0
      %3214 = vmatprep.subr.bf16.mxu0 0
      %3215 = vmatpush1.bf16.msra.mxu0 %v3212
      %3216 = vmatprep.subr.bf16.mxu0 0
      %3217 = vmatpush1.bf16.msra.mxu0 0
      %3218 = vmatprep.subr.bf16.mxu0 0
      %3219 = vmatpush1.bf16.msra.mxu0 0
      %3220 = vmatprep.subr.bf16.mxu0 0
      %3221 = vmatpush1.bf16.msra.mxu0 0
      %3222 = vmatprep.subr.bf16.mxu0 0
      %3223 = vmatpush1.bf16.msra.mxu0 0
      %3224 = vmatprep.subr.bf16.mxu0 0
      %3225 = vmatpush1.bf16.msra.mxu0 0
      %3226 = vmatprep.subr.bf16.mxu0 0
      %3227 = vmatpush1.bf16.msra.mxu0 0
      %3228 = vmatprep.subr.bf16.mxu0 0
      %3229 = vmatpush1.bf16.msra.mxu0 0
      %3230 = vmatprep.subr.bf16.mxu0 0
      %3231 = vmatpush1.bf16.msra.mxu0 0
      %3232 = vmatprep.subr.bf16.mxu0 0
      %3233 = vmatpush1.bf16.msra.mxu0 0
      %3234 = vmatprep.subr.bf16.mxu0 0
      %3235 = vmatpush1.bf16.msra.mxu0 0
      %3236 = vmatprep.subr.bf16.mxu0 0
      %3237 = vmatpush1.bf16.msra.mxu0 0
      %3238 = vmatprep.subr.bf16.mxu0 0
      %3239 = vmatpush1.bf16.msra.mxu0 0
      %3240 = vmatprep.subr.bf16.mxu0 0
      %3241 = vmatpush1.bf16.msra.mxu0 0
      %3242 = vmatprep.subr.bf16.mxu0 0
      %3243 = vmatpush1.bf16.msra.mxu0 0
      %3244 = vmatprep.subr.bf16.mxu0 0
      %3245 = vmatpush1.bf16.msra.mxu0 0
      %3246 = vmatprep.mubr.bf16.mxu0 0
      %3247 = vmatmul.mubr.bf16.gmra.mrb[0].mxu0 %v3209
      %v3248 = vpop.f32.mrb[0].mxu0
      %v3249 = vadd.f32 0.0, %v3248
      %v3250 = vpop.f32.mrb[0].mxu0
      %v3251 = vpop.f32.mrb[0].mxu0
      %v3252 = vpop.f32.mrb[0].mxu0
      %3253 = vdwg.mxu0
      %3254 = vrot.lane.b32.xlu0 %v2419, 32
      %v3255 = vpop.permute.xlu0 %3254
      %v3257 = vsel %vm1625, %v3205, 0
      %v3260 = vsel %vm412, %v3255, 0
      %3262 = vmatprep.subr.bf16.mxu0 0
      %3263 = vmatpush1.bf16.msra.mxu0 %v3260
      %3264 = vmatprep.subr.bf16.mxu0 0
      %3265 = vmatpush1.bf16.msra.mxu0 0
      %3266 = vmatprep.subr.bf16.mxu0 0
      %3267 = vmatpush1.bf16.msra.mxu0 0
      %3268 = vmatprep.subr.bf16.mxu0 0
      %3269 = vmatpush1.bf16.msra.mxu0 0
      %3270 = vmatprep.subr.bf16.mxu0 0
      %3271 = vmatpush1.bf16.msra.mxu0 0
      %3272 = vmatprep.subr.bf16.mxu0 0
      %3273 = vmatpush1.bf16.msra.mxu0 0
      %3274 = vmatprep.subr.bf16.mxu0 0
      %3275 = vmatpush1.bf16.msra.mxu0 0
      %3276 = vmatprep.subr.bf16.mxu0 0
      %3277 = vmatpush1.bf16.msra.mxu0 0
      %3278 = vmatprep.subr.bf16.mxu0 0
      %3279 = vmatpush1.bf16.msra.mxu0 0
      %3280 = vmatprep.subr.bf16.mxu0 0
      %3281 = vmatpush1.bf16.msra.mxu0 0
      %3282 = vmatprep.subr.bf16.mxu0 0
      %3283 = vmatpush1.bf16.msra.mxu0 0
      %3284 = vmatprep.subr.bf16.mxu0 0
      %3285 = vmatpush1.bf16.msra.mxu0 0
      %3286 = vmatprep.subr.bf16.mxu0 0
      %3287 = vmatpush1.bf16.msra.mxu0 0
      %3288 = vmatprep.subr.bf16.mxu0 0
      %3289 = vmatpush1.bf16.msra.mxu0 0
      %3290 = vmatprep.subr.bf16.mxu0 0
      %3291 = vmatpush1.bf16.msra.mxu0 0
      %3292 = vmatprep.subr.bf16.mxu0 0
      %3293 = vmatpush1.bf16.msra.mxu0 0
      %3294 = vmatprep.mubr.bf16.mxu0 0
      %3295 = vmatmul.mubr.bf16.gmra.mrb[0].mxu0 %v3257
      %v3296 = vpop.f32.mrb[0].mxu0
      %v3297 = vadd.f32 0.0, %v3296
      %v3298 = vpop.f32.mrb[0].mxu0
      %v3299 = vpop.f32.mrb[0].mxu0
      %v3300 = vpop.f32.mrb[0].mxu0
      %3301 = vdwg.mxu0
      %3304 = vrot.lane.b32.xlu0 %v1916, 32
      %v3305 = vpop.permute.xlu0 %3304
      %3306 = vrot.lane.b32.xlu0 %v1965, 32
      %v3307 = vpop.permute.xlu0 %3306
      %3312 = vrot.lane.b32.xlu0 %v2139, 64
      %v3313 = vpop.permute.xlu0 %3312
      %3314 = vrot.lane.b32.xlu0 %v2187, 64
      %v3315 = vpop.permute.xlu0 %3314
      %3320 = vrot.lane.b32.xlu0 %v2361, 96
      %v3321 = vpop.permute.xlu0 %3320
      %3322 = vrot.lane.b32.xlu0 %v2409, 96
      %v3323 = vpop.permute.xlu0 %3322
      %3328 = vrot.lane.b32.xlu0 %v2804, 32
      %v3329 = vpop.permute.xlu0 %3328
      %3330 = vrot.lane.b32.xlu0 %v2853, 32
      %v3331 = vpop.permute.xlu0 %3330
      %3336 = vrot.lane.b32.xlu0 %v3027, 64
      %v3337 = vpop.permute.xlu0 %3336
      %3338 = vrot.lane.b32.xlu0 %v3075, 64
      %v3339 = vpop.permute.xlu0 %3338
      %3344 = vrot.lane.b32.xlu0 %v3249, 96
      %v3345 = vpop.permute.xlu0 %3344
      %3346 = vrot.lane.b32.xlu0 %v3297, 96
      %v3347 = vpop.permute.xlu0 %3346
      %v3350 = vsel %vm1530, %v1691, %v3305
      %v3351 = vsel %vm1530, %v1737, %v3307
      %vm3352 = vcmask 523264
      %v3353 = vsel %vm3352, %v3350, %v3313
      %v3354 = vsel %vm3352, %v3351, %v3315
      %vm3355 = vcmask 785408
      %v3356 = vsel %vm3355, %v3353, %v3321
      %v3357 = vsel %vm3355, %v3354, %v3323
      %v3358 = vsel %vm1530, %v2579, %v3329
      %v3359 = vsel %vm1530, %v2625, %v3331
      %v3360 = vsel %vm3352, %v3358, %v3337
      %v3361 = vsel %vm3352, %v3359, %v3339
      %v3362 = vsel %vm3355, %v3360, %v3345
      %v3363 = vsel %vm3355, %v3361, %v3347
      %v3364 = vpack.c.bf16 %v3357, %v3356
      %v3365 = vpack.c.bf16 %v3363, %v3362
      %s3366 = smul.u32 %s771, 64
      %s3367 = smul.addr %s3366, 4
      %s3368 = scalar_lea.vmem [#allocation13], %s3367
      %v3369 = vld [vmem:[%s3368] sm:$0xff]
      %v3370 = vld [vmem:[%s3368 + $0x8] sm:$0xff]
      %v3371 = vld [vmem:[%s3368 + $0x10] sm:$0xff]
      %v3372 = vld [vmem:[%s3368 + $0x18] sm:$0xff]
      %v3373 = vld [vmem:[%s3368 + $0x20] sm:$0xff]
      %v3374 = vld [vmem:[%s3368 + $0x28] sm:$0xff]
      %v3375 = vld [vmem:[%s3368 + $0x30] sm:$0xff]
      %v3376 = vld [vmem:[%s3368 + $0x38] sm:$0xff]
      %v3377 = vld [vmem:[%s3368 + $0x40] sm:$0xff]
      %v3378 = vld [vmem:[%s3368 + $0x48] sm:$0xff]
      %v3379 = vld [vmem:[%s3368 + $0x50] sm:$0xff]
      %v3380 = vld [vmem:[%s3368 + $0x58] sm:$0xff]
      %v3381 = vld [vmem:[%s3368 + $0x60] sm:$0xff]
      %v3382 = vld [vmem:[%s3368 + $0x68] sm:$0xff]
      %v3383 = vld [vmem:[%s3368 + $0x70] sm:$0xff]
      %v3384 = vld [vmem:[%s3368 + $0x78] sm:$0xff]
      %v3385 = vld [vmem:[%s3368 + $0x80] sm:$0xff]
      %v3386 = vld [vmem:[%s3368 + $0x88] sm:$0xff]
      %v3387 = vld [vmem:[%s3368 + $0x90] sm:$0xff]
      %v3388 = vld [vmem:[%s3368 + $0x98] sm:$0xff]
      %v3389 = vld [vmem:[%s3368 + $0xa0] sm:$0xff]
      %v3390 = vld [vmem:[%s3368 + $0xa8] sm:$0xff]
      %v3391 = vld [vmem:[%s3368 + $0xb0] sm:$0xff]
      %v3392 = vld [vmem:[%s3368 + $0xb8] sm:$0xff]
      %v3393 = vld [vmem:[%s3368 + $0xc0] sm:$0xff]
      %v3394 = vld [vmem:[%s3368 + $0xc8] sm:$0xff]
      %v3395 = vld [vmem:[%s3368 + $0xd0] sm:$0xff]
      %v3396 = vld [vmem:[%s3368 + $0xd8] sm:$0xff]
      %v3397 = vld [vmem:[%s3368 + $0xe0] sm:$0xff]
      %v3398 = vld [vmem:[%s3368 + $0xe8] sm:$0xff]
      %v3399 = vld [vmem:[%s3368 + $0xf0] sm:$0xff]
      %v3400 = vld [vmem:[%s3368 + $0xf8] sm:$0xff]
      %s3401 = smul.u32 %s771, 2
      %s3402 = scalar_lea.vmem [#allocation15], %s3401
      %v3403 = vld [vmem:[%s3402] sm:$0x3]
      %v3405 = vlaneseq
      %v3406 = vshrl.u32 %v3405, 7
      %v3407 = vsub.s32 0, %v3406
      %v3408 = vrot.slane %v3403, %v3407
      %v3409 = vlaneseq
      %v3410 = vshrl.u32 %v3409, 7
      %v3411 = vsub.s32 1, %v3410
      %v3412 = vrot.slane %v3403, %v3411
      %v3447 = vunpack.c.l.b16 %v3369
      %v3448 = vunpack.c.h.b16 %v3369
      %v3449 = vunpack.c.l.b16 %v3370
      %v3450 = vunpack.c.h.b16 %v3370
      %v3451 = vunpack.c.l.b16 %v3371
      %v3452 = vunpack.c.h.b16 %v3371
      %v3453 = vunpack.c.l.b16 %v3372
      %v3454 = vunpack.c.h.b16 %v3372
      %v3455 = vunpack.c.l.b16 %v3373
      %v3456 = vunpack.c.h.b16 %v3373
      %v3457 = vunpack.c.l.b16 %v3374
      %v3458 = vunpack.c.h.b16 %v3374
      %v3459 = vunpack.c.l.b16 %v3375
      %v3460 = vunpack.c.h.b16 %v3375
      %v3461 = vunpack.c.l.b16 %v3376
      %v3462 = vunpack.c.h.b16 %v3376
      %v3463 = vunpack.c.l.b16 %v3377
      %v3464 = vunpack.c.h.b16 %v3377
      %v3465 = vunpack.c.l.b16 %v3378
      %v3466 = vunpack.c.h.b16 %v3378
      %v3467 = vunpack.c.l.b16 %v3379
      %v3468 = vunpack.c.h.b16 %v3379
      %v3469 = vunpack.c.l.b16 %v3380
      %v3470 = vunpack.c.h.b16 %v3380
      %v3471 = vunpack.c.l.b16 %v3381
      %v3472 = vunpack.c.h.b16 %v3381
      %v3473 = vunpack.c.l.b16 %v3382
      %v3474 = vunpack.c.h.b16 %v3382
      %v3475 = vunpack.c.l.b16 %v3383
      %v3476 = vunpack.c.h.b16 %v3383
      %v3477 = vunpack.c.l.b16 %v3384
      %v3478 = vunpack.c.h.b16 %v3384
      %v3479 = vunpack.c.l.b16 %v3385
      %v3480 = vunpack.c.h.b16 %v3385
      %v3481 = vunpack.c.l.b16 %v3386
      %v3482 = vunpack.c.h.b16 %v3386
      %v3483 = vunpack.c.l.b16 %v3387
      %v3484 = vunpack.c.h.b16 %v3387
      %v3485 = vunpack.c.l.b16 %v3388
      %v3486 = vunpack.c.h.b16 %v3388
      %v3487 = vunpack.c.l.b16 %v3389
      %v3488 = vunpack.c.h.b16 %v3389
      %v3489 = vunpack.c.l.b16 %v3390
      %v3490 = vunpack.c.h.b16 %v3390
      %v3491 = vunpack.c.l.b16 %v3391
      %v3492 = vunpack.c.h.b16 %v3391
      %v3493 = vunpack.c.l.b16 %v3392
      %v3494 = vunpack.c.h.b16 %v3392
      %v3495 = vunpack.c.l.b16 %v3393
      %v3496 = vunpack.c.h.b16 %v3393
      %v3497 = vunpack.c.l.b16 %v3394
      %v3498 = vunpack.c.h.b16 %v3394
      %v3499 = vunpack.c.l.b16 %v3395
      %v3500 = vunpack.c.h.b16 %v3395
      %v3501 = vunpack.c.l.b16 %v3396
      %v3502 = vunpack.c.h.b16 %v3396
      %v3503 = vunpack.c.l.b16 %v3397
      %v3504 = vunpack.c.h.b16 %v3397
      %v3505 = vunpack.c.l.b16 %v3398
      %v3506 = vunpack.c.h.b16 %v3398
      %v3507 = vunpack.c.l.b16 %v3399
      %v3508 = vunpack.c.h.b16 %v3399
      %v3509 = vunpack.c.l.b16 %v3400
      %v3510 = vunpack.c.h.b16 %v3400
      %v3511 = vpack.c.b16 %v3449, %v3447
      %v3512 = vpack.c.b16 %v3450, %v3448
      %v3513 = vpack.c.b16 %v3453, %v3451
      %v3514 = vpack.c.b16 %v3454, %v3452
      %v3515 = vpack.c.b16 %v3457, %v3455
      %v3516 = vpack.c.b16 %v3458, %v3456
      %v3517 = vpack.c.b16 %v3461, %v3459
      %v3518 = vpack.c.b16 %v3462, %v3460
      %v3519 = vpack.c.b16 %v3465, %v3463
      %v3520 = vpack.c.b16 %v3466, %v3464
      %v3521 = vpack.c.b16 %v3469, %v3467
      %v3522 = vpack.c.b16 %v3470, %v3468
      %v3523 = vpack.c.b16 %v3473, %v3471
      %v3524 = vpack.c.b16 %v3474, %v3472
      %v3525 = vpack.c.b16 %v3477, %v3475
      %v3526 = vpack.c.b16 %v3478, %v3476
      %v3527 = vpack.c.b16 %v3481, %v3479
      %v3528 = vpack.c.b16 %v3482, %v3480
      %v3529 = vpack.c.b16 %v3485, %v3483
      %v3530 = vpack.c.b16 %v3486, %v3484
      %v3531 = vpack.c.b16 %v3489, %v3487
      %v3532 = vpack.c.b16 %v3490, %v3488
      %v3533 = vpack.c.b16 %v3493, %v3491
      %v3534 = vpack.c.b16 %v3494, %v3492
      %v3535 = vpack.c.b16 %v3497, %v3495
      %v3536 = vpack.c.b16 %v3498, %v3496
      %v3537 = vpack.c.b16 %v3501, %v3499
      %v3538 = vpack.c.b16 %v3502, %v3500
      %v3539 = vpack.c.b16 %v3505, %v3503
      %v3540 = vpack.c.b16 %v3506, %v3504
      %v3541 = vpack.c.b16 %v3509, %v3507
      %v3542 = vpack.c.b16 %v3510, %v3508
      %3575 = vmatprep.subr.bf16.mxu0 %v3512
      %3576 = vmatpush1.bf16.msra.mxu0 %v3511
      %3577 = vmatprep.subr.bf16.mxu0 %v3514
      %3578 = vmatpush1.bf16.msra.mxu0 %v3513
      %3579 = vmatprep.subr.bf16.mxu0 %v3516
      %3580 = vmatpush1.bf16.msra.mxu0 %v3515
      %3581 = vmatprep.subr.bf16.mxu0 %v3518
      %3582 = vmatpush1.bf16.msra.mxu0 %v3517
      %3583 = vmatprep.subr.bf16.mxu0 %v3520
      %3584 = vmatpush1.bf16.msra.mxu0 %v3519
      %3585 = vmatprep.subr.bf16.mxu0 %v3522
      %3586 = vmatpush1.bf16.msra.mxu0 %v3521
      %3587 = vmatprep.subr.bf16.mxu0 %v3524
      %3588 = vmatpush1.bf16.msra.mxu0 %v3523
      %3589 = vmatprep.subr.bf16.mxu0 %v3526
      %3590 = vmatpush1.bf16.msra.mxu0 %v3525
      %3591 = vmatprep.subr.bf16.mxu0 %v3528
      %3592 = vmatpush1.bf16.msra.mxu0 %v3527
      %3593 = vmatprep.subr.bf16.mxu0 %v3530
      %3594 = vmatpush1.bf16.msra.mxu0 %v3529
      %3595 = vmatprep.subr.bf16.mxu0 %v3532
      %3596 = vmatpush1.bf16.msra.mxu0 %v3531
      %3597 = vmatprep.subr.bf16.mxu0 %v3534
      %3598 = vmatpush1.bf16.msra.mxu0 %v3533
      %3599 = vmatprep.subr.bf16.mxu0 %v3536
      %3600 = vmatpush1.bf16.msra.mxu0 %v3535
      %3601 = vmatprep.subr.bf16.mxu0 %v3538
      %3602 = vmatpush1.bf16.msra.mxu0 %v3537
      %3603 = vmatprep.subr.bf16.mxu0 %v3540
      %3604 = vmatpush1.bf16.msra.mxu0 %v3539
      %3605 = vmatprep.subr.bf16.mxu0 %v3542
      %3606 = vmatpush1.bf16.msra.mxu0 %v3541
      %3607 = vmatprep.mubr.bf16.mxu0 %v3365
      %3608 = vmatmul.mubr.bf16.gmra.mrb[0].mxu0 %v3364
      %v3609 = vpop.f32.mrb[0].mxu0
      %v3610 = vadd.f32 %v3408, %v3609
      %v3611 = vpop.f32.mrb[0].mxu0
      %v3612 = vadd.f32 %v3412, %v3611
      %v3613 = vpop.f32.mrb[0].mxu0
      %v3614 = vadd.f32 %v3408, %v3613
      %v3615 = vpop.f32.mrb[0].mxu0
      %v3616 = vadd.f32 %v3412, %v3615
      %3617 = vdwg.mxu0
      %v3618 = vadd.f32 %v776, %v3610
      %v3619 = vadd.f32 %v777, %v3612
      %v3620 = vadd.f32 %v778, %v3614
      %v3621 = vadd.f32 %v779, %v3616
      %s3622 = scalar_lea.vmem [#allocation16], %s3401
      %v3623 = vld [vmem:[%s3622] sm:$0x3]
      %s3624 = scalar_lea.vmem [#allocation18], %s3401
      %v3625 = vld [vmem:[%s3624] sm:$0x3]
      %v3626 = vadd.f32 %v3618, %v3619
      %3627 = vadd.xlane.f32.xlu0 %v3626
      %v3628 = vpop.xlane.xlu0 %3627
      %v3629 = vadd.f32 %v3620, %v3621
      %3630 = vadd.xlane.f32.xlu0 %v3629
      %v3631 = vpop.xlane.xlu0 %3630
      %v3632 = vrcp.pop 256.0
      %v3633 = vmul.f32 %v3628, %v3632
      %v3634 = vmul.f32 %v3631, %v3632
      %v3635 = vsub.f32 %v3618, %v3633
      %v3636 = vsub.f32 %v3619, %v3633
      %v3637 = vsub.f32 %v3620, %v3634
      %v3638 = vsub.f32 %v3621, %v3634
      %v3639 = vmul.f32 %v3635, %v3635
      %v3640 = vmul.f32 %v3636, %v3636
      %v3641 = vmul.f32 %v3637, %v3637
      %v3642 = vmul.f32 %v3638, %v3638
      %v3643 = vadd.f32 %v3639, %v3640
      %3644 = vadd.xlane.f32.xlu0 %v3643
      %v3645 = vpop.xlane.xlu0 %3644
      %v3646 = vadd.f32 %v3641, %v3642
      %3647 = vadd.xlane.f32.xlu0 %v3646
      %v3648 = vpop.xlane.xlu0 %3647
      %v3649 = vmul.f32 %v3645, %v3632
      %v3650 = vmul.f32 %v3648, %v3632
      %v3651 = vadd.f32 %v3649, 1e-05
      %v3652 = vadd.f32 %v3650, 1e-05
      %v3653 = vrsqrt.pop %v3651
      %v3654 = vrsqrt.pop %v3652
      %v3655 = vmul.f32 %v3635, %v3653
      %v3656 = vmul.f32 %v3636, %v3653
      %v3657 = vmul.f32 %v3637, %v3654
      %v3658 = vmul.f32 %v3638, %v3654
      %v3660 = vlaneseq
      %v3661 = vshrl.u32 %v3660, 7
      %v3662 = vsub.s32 0, %v3661
      %v3663 = vrot.slane %v3623, %v3662
      %v3664 = vlaneseq
      %v3665 = vshrl.u32 %v3664, 7
      %v3666 = vsub.s32 1, %v3665
      %v3667 = vrot.slane %v3623, %v3666
      %v3670 = vmul.f32 %v3655, %v3663
      %v3671 = vmul.f32 %v3656, %v3667
      %v3672 = vmul.f32 %v3657, %v3663
      %v3673 = vmul.f32 %v3658, %v3667
      %v3675 = vlaneseq
      %v3676 = vshrl.u32 %v3675, 7
      %v3677 = vsub.s32 0, %v3676
      %v3678 = vrot.slane %v3625, %v3677
      %v3679 = vlaneseq
      %v3680 = vshrl.u32 %v3679, 7
      %v3681 = vsub.s32 1, %v3680
      %v3682 = vrot.slane %v3625, %v3681
      %v3685 = vadd.f32 %v3670, %v3678
      %v3686 = vadd.f32 %v3671, %v3682
      %v3687 = vadd.f32 %v3672, %v3678
      %v3688 = vadd.f32 %v3673, %v3682
      %v3689 = vpack.c.bf16 %v3687, %v3685
      %v3690 = vpack.c.bf16 %v3688, %v3686
      %s3691 = smul.u32 %s771, 32
      %s3692 = smul.addr %s3691, 4
      %s3693 = scalar_lea.vmem [#allocation19], %s3692
      %v3694 = vld [vmem:[%s3693] sm:$0xf]
      %v3695 = vld [vmem:[%s3693 + $0x4] sm:$0xf]
      %v3696 = vld [vmem:[%s3693 + $0x8] sm:$0xf]
      %v3697 = vld [vmem:[%s3693 + $0xc] sm:$0xf]
      %v3698 = vld [vmem:[%s3693 + $0x10] sm:$0xf]
      %v3699 = vld [vmem:[%s3693 + $0x14] sm:$0xf]
      %v3700 = vld [vmem:[%s3693 + $0x18] sm:$0xf]
      %v3701 = vld [vmem:[%s3693 + $0x1c] sm:$0xf]
      %v3702 = vld [vmem:[%s3693 + $0x20] sm:$0xf]
      %v3703 = vld [vmem:[%s3693 + $0x24] sm:$0xf]
      %v3704 = vld [vmem:[%s3693 + $0x28] sm:$0xf]
      %v3705 = vld [vmem:[%s3693 + $0x2c] sm:$0xf]
      %v3706 = vld [vmem:[%s3693 + $0x30] sm:$0xf]
      %v3707 = vld [vmem:[%s3693 + $0x34] sm:$0xf]
      %v3708 = vld [vmem:[%s3693 + $0x38] sm:$0xf]
      %v3709 = vld [vmem:[%s3693 + $0x3c] sm:$0xf]
      %v3710 = vld [vmem:[%s3693 + $0x40] sm:$0xf]
      %v3711 = vld [vmem:[%s3693 + $0x44] sm:$0xf]
      %v3712 = vld [vmem:[%s3693 + $0x48] sm:$0xf]
      %v3713 = vld [vmem:[%s3693 + $0x4c] sm:$0xf]
      %v3714 = vld [vmem:[%s3693 + $0x50] sm:$0xf]
      %v3715 = vld [vmem:[%s3693 + $0x54] sm:$0xf]
      %v3716 = vld [vmem:[%s3693 + $0x58] sm:$0xf]
      %v3717 = vld [vmem:[%s3693 + $0x5c] sm:$0xf]
      %v3718 = vld [vmem:[%s3693 + $0x60] sm:$0xf]
      %v3719 = vld [vmem:[%s3693 + $0x64] sm:$0xf]
      %v3720 = vld [vmem:[%s3693 + $0x68] sm:$0xf]
      %v3721 = vld [vmem:[%s3693 + $0x6c] sm:$0xf]
      %v3722 = vld [vmem:[%s3693 + $0x70] sm:$0xf]
      %v3723 = vld [vmem:[%s3693 + $0x74] sm:$0xf]
      %v3724 = vld [vmem:[%s3693 + $0x78] sm:$0xf]
      %v3725 = vld [vmem:[%s3693 + $0x7c] sm:$0xf]
      %s3726 = scalar_lea.vmem [#allocation21], %s771
      %v3727 = vld [vmem:[%s3726] sm:$0x1]
      %v3729 = vlaneseq
      %v3730 = vshrl.u32 %v3729, 7
      %v3731 = vsub.s32 0, %v3730
      %v3732 = vrot.slane %v3727, %v3731
      %v3766 = vunpack.c.l.b16 %v3694
      %v3767 = vunpack.c.l.b16 %v3695
      %v3768 = vunpack.c.l.b16 %v3696
      %v3769 = vunpack.c.l.b16 %v3697
      %v3770 = vunpack.c.l.b16 %v3698
      %v3771 = vunpack.c.l.b16 %v3699
      %v3772 = vunpack.c.l.b16 %v3700
      %v3773 = vunpack.c.l.b16 %v3701
      %v3774 = vunpack.c.l.b16 %v3702
      %v3775 = vunpack.c.l.b16 %v3703
      %v3776 = vunpack.c.l.b16 %v3704
      %v3777 = vunpack.c.l.b16 %v3705
      %v3778 = vunpack.c.l.b16 %v3706
      %v3779 = vunpack.c.l.b16 %v3707
      %v3780 = vunpack.c.l.b16 %v3708
      %v3781 = vunpack.c.l.b16 %v3709
      %v3782 = vunpack.c.l.b16 %v3710
      %v3783 = vunpack.c.l.b16 %v3711
      %v3784 = vunpack.c.l.b16 %v3712
      %v3785 = vunpack.c.l.b16 %v3713
      %v3786 = vunpack.c.l.b16 %v3714
      %v3787 = vunpack.c.l.b16 %v3715
      %v3788 = vunpack.c.l.b16 %v3716
      %v3789 = vunpack.c.l.b16 %v3717
      %v3790 = vunpack.c.l.b16 %v3718
      %v3791 = vunpack.c.l.b16 %v3719
      %v3792 = vunpack.c.l.b16 %v3720
      %v3793 = vunpack.c.l.b16 %v3721
      %v3794 = vunpack.c.l.b16 %v3722
      %v3795 = vunpack.c.l.b16 %v3723
      %v3796 = vunpack.c.l.b16 %v3724
      %v3797 = vunpack.c.l.b16 %v3725
      %v3798 = vpack.c.b16 %v3767, %v3766
      %v3799 = vpack.c.b16 %v3769, %v3768
      %v3800 = vpack.c.b16 %v3771, %v3770
      %v3801 = vpack.c.b16 %v3773, %v3772
      %v3802 = vpack.c.b16 %v3775, %v3774
      %v3803 = vpack.c.b16 %v3777, %v3776
      %v3804 = vpack.c.b16 %v3779, %v3778
      %v3805 = vpack.c.b16 %v3781, %v3780
      %v3806 = vpack.c.b16 %v3783, %v3782
      %v3807 = vpack.c.b16 %v3785, %v3784
      %v3808 = vpack.c.b16 %v3787, %v3786
      %v3809 = vpack.c.b16 %v3789, %v3788
      %v3810 = vpack.c.b16 %v3791, %v3790
      %v3811 = vpack.c.b16 %v3793, %v3792
      %v3812 = vpack.c.b16 %v3795, %v3794
      %v3813 = vpack.c.b16 %v3797, %v3796
      %3830 = vmatprep.subr.bf16.mxu0 0
      %3831 = vmatpush1.bf16.msra.mxu0 %v3798
      %3832 = vmatprep.subr.bf16.mxu0 0
      %3833 = vmatpush1.bf16.msra.mxu0 %v3799
      %3834 = vmatprep.subr.bf16.mxu0 0
      %3835 = vmatpush1.bf16.msra.mxu0 %v3800
      %3836 = vmatprep.subr.bf16.mxu0 0
      %3837 = vmatpush1.bf16.msra.mxu0 %v3801
      %3838 = vmatprep.subr.bf16.mxu0 0
      %3839 = vmatpush1.bf16.msra.mxu0 %v3802
      %3840 = vmatprep.subr.bf16.mxu0 0
      %3841 = vmatpush1.bf16.msra.mxu0 %v3803
      %3842 = vmatprep.subr.bf16.mxu0 0
      %3843 = vmatpush1.bf16.msra.mxu0 %v3804
      %3844 = vmatprep.subr.bf16.mxu0 0
      %3845 = vmatpush1.bf16.msra.mxu0 %v3805
      %3846 = vmatprep.subr.bf16.mxu0 0
      %3847 = vmatpush1.bf16.msra.mxu0 %v3806
      %3848 = vmatprep.subr.bf16.mxu0 0
      %3849 = vmatpush1.bf16.msra.mxu0 %v3807
      %3850 = vmatprep.subr.bf16.mxu0 0
      %3851 = vmatpush1.bf16.msra.mxu0 %v3808
      %3852 = vmatprep.subr.bf16.mxu0 0
      %3853 = vmatpush1.bf16.msra.mxu0 %v3809
      %3854 = vmatprep.subr.bf16.mxu0 0
      %3855 = vmatpush1.bf16.msra.mxu0 %v3810
      %3856 = vmatprep.subr.bf16.mxu0 0
      %3857 = vmatpush1.bf16.msra.mxu0 %v3811
      %3858 = vmatprep.subr.bf16.mxu0 0
      %3859 = vmatpush1.bf16.msra.mxu0 %v3812
      %3860 = vmatprep.subr.bf16.mxu0 0
      %3861 = vmatpush1.bf16.msra.mxu0 %v3813
      %3862 = vmatprep.mubr.bf16.mxu0 %v3690
      %3863 = vmatmul.mubr.bf16.gmra.mrb[0].mxu0 %v3689
      %v3864 = vpop.f32.mrb[0].mxu0
      %v3865 = vadd.f32 %v3732, %v3864
      %v3866 = vpop.f32.mrb[0].mxu0
      %v3867 = vpop.f32.mrb[0].mxu0
      %v3868 = vadd.f32 %v3732, %v3867
      %v3869 = vpop.f32.mrb[0].mxu0
      %3870 = vdwg.mxu0
      %v3871 = vmax.f32 %v3865, 0.0
      %v3872 = vmax.f32 %v3868, 0.0
      %v3873 = vpack.c.bf16 %v3872, %v3871
      %s3874 = smul.addr %s3691, 4
      %s3875 = scalar_lea.vmem [#allocation22], %s3874
      %v3876 = vld [vmem:[%s3875] sm:$0xff]
      %v3877 = vld [vmem:[%s3875 + $0x8] sm:$0xff]
      %v3878 = vld [vmem:[%s3875 + $0x10] sm:$0xff]
      %v3879 = vld [vmem:[%s3875 + $0x18] sm:$0xff]
      %v3880 = vld [vmem:[%s3875 + $0x20] sm:$0xff]
      %v3881 = vld [vmem:[%s3875 + $0x28] sm:$0xff]
      %v3882 = vld [vmem:[%s3875 + $0x30] sm:$0xff]
      %v3883 = vld [vmem:[%s3875 + $0x38] sm:$0xff]
      %v3884 = vld [vmem:[%s3875 + $0x40] sm:$0xff]
      %v3885 = vld [vmem:[%s3875 + $0x48] sm:$0xff]
      %v3886 = vld [vmem:[%s3875 + $0x50] sm:$0xff]
      %v3887 = vld [vmem:[%s3875 + $0x58] sm:$0xff]
      %v3888 = vld [vmem:[%s3875 + $0x60] sm:$0xff]
      %v3889 = vld [vmem:[%s3875 + $0x68] sm:$0xff]
      %v3890 = vld [vmem:[%s3875 + $0x70] sm:$0xff]
      %v3891 = vld [vmem:[%s3875 + $0x78] sm:$0xff]
      %s3892 = scalar_lea.vmem [#allocation24], %s3401
      %v3893 = vld [vmem:[%s3892] sm:$0x3]
      %v3895 = vlaneseq
      %v3896 = vshrl.u32 %v3895, 7
      %v3897 = vsub.s32 0, %v3896
      %v3898 = vrot.slane %v3893, %v3897
      %v3899 = vlaneseq
      %v3900 = vshrl.u32 %v3899, 7
      %v3901 = vsub.s32 1, %v3900
      %v3902 = vrot.slane %v3893, %v3901
      %v3921 = vunpack.c.l.b16 %v3876
      %v3922 = vunpack.c.h.b16 %v3876
      %v3923 = vunpack.c.l.b16 %v3877
      %v3924 = vunpack.c.h.b16 %v3877
      %v3925 = vunpack.c.l.b16 %v3878
      %v3926 = vunpack.c.h.b16 %v3878
      %v3927 = vunpack.c.l.b16 %v3879
      %v3928 = vunpack.c.h.b16 %v3879
      %v3929 = vunpack.c.l.b16 %v3880
      %v3930 = vunpack.c.h.b16 %v3880
      %v3931 = vunpack.c.l.b16 %v3881
      %v3932 = vunpack.c.h.b16 %v3881
      %v3933 = vunpack.c.l.b16 %v3882
      %v3934 = vunpack.c.h.b16 %v3882
      %v3935 = vunpack.c.l.b16 %v3883
      %v3936 = vunpack.c.h.b16 %v3883
      %v3937 = vunpack.c.l.b16 %v3884
      %v3938 = vunpack.c.h.b16 %v3884
      %v3939 = vunpack.c.l.b16 %v3885
      %v3940 = vunpack.c.h.b16 %v3885
      %v3941 = vunpack.c.l.b16 %v3886
      %v3942 = vunpack.c.h.b16 %v3886
      %v3943 = vunpack.c.l.b16 %v3887
      %v3944 = vunpack.c.h.b16 %v3887
      %v3945 = vunpack.c.l.b16 %v3888
      %v3946 = vunpack.c.h.b16 %v3888
      %v3947 = vunpack.c.l.b16 %v3889
      %v3948 = vunpack.c.h.b16 %v3889
      %v3949 = vunpack.c.l.b16 %v3890
      %v3950 = vunpack.c.h.b16 %v3890
      %v3951 = vunpack.c.l.b16 %v3891
      %v3952 = vunpack.c.h.b16 %v3891
      %v3953 = vpack.c.b16 %v3923, %v3921
      %v3954 = vpack.c.b16 %v3924, %v3922
      %v3955 = vpack.c.b16 %v3927, %v3925
      %v3956 = vpack.c.b16 %v3928, %v3926
      %v3957 = vpack.c.b16 %v3931, %v3929
      %v3958 = vpack.c.b16 %v3932, %v3930
      %v3959 = vpack.c.b16 %v3935, %v3933
      %v3960 = vpack.c.b16 %v3936, %v3934
      %v3961 = vpack.c.b16 %v3939, %v3937
      %v3962 = vpack.c.b16 %v3940, %v3938
      %v3963 = vpack.c.b16 %v3943, %v3941
      %v3964 = vpack.c.b16 %v3944, %v3942
      %v3965 = vpack.c.b16 %v3947, %v3945
      %v3966 = vpack.c.b16 %v3948, %v3946
      %v3967 = vpack.c.b16 %v3951, %v3949
      %v3968 = vpack.c.b16 %v3952, %v3950
      %3985 = vmatprep.subr.bf16.mxu0 %v3954
      %3986 = vmatpush1.bf16.msra.mxu0 %v3953
      %3987 = vmatprep.subr.bf16.mxu0 %v3956
      %3988 = vmatpush1.bf16.msra.mxu0 %v3955
      %3989 = vmatprep.subr.bf16.mxu0 %v3958
      %3990 = vmatpush1.bf16.msra.mxu0 %v3957
      %3991 = vmatprep.subr.bf16.mxu0 %v3960
      %3992 = vmatpush1.bf16.msra.mxu0 %v3959
      %3993 = vmatprep.subr.bf16.mxu0 %v3962
      %3994 = vmatpush1.bf16.msra.mxu0 %v3961
      %3995 = vmatprep.subr.bf16.mxu0 %v3964
      %3996 = vmatpush1.bf16.msra.mxu0 %v3963
      %3997 = vmatprep.subr.bf16.mxu0 %v3966
      %3998 = vmatpush1.bf16.msra.mxu0 %v3965
      %3999 = vmatprep.subr.bf16.mxu0 %v3968
      %4000 = vmatpush1.bf16.msra.mxu0 %v3967
      %4001 = vmatprep.subr.bf16.mxu0 0
      %4002 = vmatpush1.bf16.msra.mxu0 0
      %4003 = vmatprep.subr.bf16.mxu0 0
      %4004 = vmatpush1.bf16.msra.mxu0 0
      %4005 = vmatprep.subr.bf16.mxu0 0
      %4006 = vmatpush1.bf16.msra.mxu0 0
      %4007 = vmatprep.subr.bf16.mxu0 0
      %4008 = vmatpush1.bf16.msra.mxu0 0
      %4009 = vmatprep.subr.bf16.mxu0 0
      %4010 = vmatpush1.bf16.msra.mxu0 0
      %4011 = vmatprep.subr.bf16.mxu0 0
      %4012 = vmatpush1.bf16.msra.mxu0 0
      %4013 = vmatprep.subr.bf16.mxu0 0
      %4014 = vmatpush1.bf16.msra.mxu0 0
      %4015 = vmatprep.subr.bf16.mxu0 0
      %4016 = vmatpush1.bf16.msra.mxu0 0
      %4017 = vmatprep.mubr.bf16.mxu0 0
      %4018 = vmatmul.mubr.bf16.gmra.mrb[0].mxu0 %v3873
      %v4019 = vpop.f32.mrb[0].mxu0
      %v4020 = vadd.f32 %v3898, %v4019
      %v4021 = vpop.f32.mrb[0].mxu0
      %v4022 = vadd.f32 %v3902, %v4021
      %v4023 = vpop.f32.mrb[0].mxu0
      %v4024 = vadd.f32 %v3898, %v4023
      %v4025 = vpop.f32.mrb[0].mxu0
      %v4026 = vadd.f32 %v3902, %v4025
      %4027 = vdwg.mxu0
      %v4028 = vadd.f32 %v3685, %v4020
      %v4029 = vadd.f32 %v3686, %v4022
      %v4030 = vadd.f32 %v3687, %v4024
      %v4031 = vadd.f32 %v3688, %v4026
      %s4032 = scalar_lea.vmem [#allocation25], %s3401
      %v4033 = vld [vmem:[%s4032] sm:$0x3]
      %s4034 = scalar_lea.vmem [#allocation27], %s3401
      %v4035 = vld [vmem:[%s4034] sm:$0x3]
      %v4036 = vadd.f32 %v4028, %v4029
      %4037 = vadd.xlane.f32.xlu0 %v4036
      %v4038 = vpop.xlane.xlu0 %4037
      %v4039 = vadd.f32 %v4030, %v4031
      %4040 = vadd.xlane.f32.xlu0 %v4039
      %v4041 = vpop.xlane.xlu0 %4040
      %v4042 = vmul.f32 %v4038, %v3632
      %v4043 = vmul.f32 %v4041, %v3632
      %v4044 = vsub.f32 %v4028, %v4042
      %v4045 = vsub.f32 %v4029, %v4042
      %v4046 = vsub.f32 %v4030, %v4043
      %v4047 = vsub.f32 %v4031, %v4043
      %v4048 = vmul.f32 %v4044, %v4044
      %v4049 = vmul.f32 %v4045, %v4045
      %v4050 = vmul.f32 %v4046, %v4046
      %v4051 = vmul.f32 %v4047, %v4047
      %v4052 = vadd.f32 %v4048, %v4049
      %4053 = vadd.xlane.f32.xlu0 %v4052
      %v4054 = vpop.xlane.xlu0 %4053
      %v4055 = vadd.f32 %v4050, %v4051
      %4056 = vadd.xlane.f32.xlu0 %v4055
      %v4057 = vpop.xlane.xlu0 %4056
      %v4058 = vmul.f32 %v4054, %v3632
      %v4059 = vmul.f32 %v4057, %v3632
      %v4060 = vadd.f32 %v4058, 1e-05
      %v4061 = vadd.f32 %v4059, 1e-05
      %v4062 = vrsqrt.pop %v4060
      %v4063 = vrsqrt.pop %v4061
      %v4064 = vmul.f32 %v4044, %v4062
      %v4065 = vmul.f32 %v4045, %v4062
      %v4066 = vmul.f32 %v4046, %v4063
      %v4067 = vmul.f32 %v4047, %v4063
      %v4069 = vlaneseq
      %v4070 = vshrl.u32 %v4069, 7
      %v4071 = vsub.s32 0, %v4070
      %v4072 = vrot.slane %v4033, %v4071
      %v4073 = vlaneseq
      %v4074 = vshrl.u32 %v4073, 7
      %v4075 = vsub.s32 1, %v4074
      %v4076 = vrot.slane %v4033, %v4075
      %v4079 = vmul.f32 %v4064, %v4072
      %v4080 = vmul.f32 %v4065, %v4076
      %v4081 = vmul.f32 %v4066, %v4072
      %v4082 = vmul.f32 %v4067, %v4076
      %v4084 = vlaneseq
      %v4085 = vshrl.u32 %v4084, 7
      %v4086 = vsub.s32 0, %v4085
      %v4087 = vrot.slane %v4035, %v4086
      %v4088 = vlaneseq
      %v4089 = vshrl.u32 %v4088, 7
      %v4090 = vsub.s32 1, %v4089
      %v4091 = vrot.slane %v4035, %v4090
      %v4094 = vadd.f32 %v4079, %v4087
      %v4095 = vadd.f32 %v4080, %v4091
      %v4096 = vadd.f32 %v4081, %v4087
      %v4097 = vadd.f32 %v4082, %v4091
    $region194: #{forward.1} parent=1 // loop_footer
      %s775 = sadd.s32 1, %s771
    $region195: #{forward.1} parent=1 // loop_footer_branch
      %770 = sbr.rel target = $region191
    $region196: #{forward.1} parent=1 // loop_exit
      _
    %v4098 = vpack.c.bf16 %v778, %v776
    %v4099 = vpack.c.bf16 %v779, %v777
    %v4100 = vld [vmem:[#allocation28] sm:$0xff]
    %v4101 = vld [vmem:[#allocation28 + $0x8] sm:$0xff]
    %v4102 = vld [vmem:[#allocation28 + $0x10] sm:$0xff]
    %v4103 = vld [vmem:[#allocation28 + $0x18] sm:$0xff]
    %v4104 = vld [vmem:[#allocation28 + $0x20] sm:$0xff]
    %v4105 = vld [vmem:[#allocation28 + $0x28] sm:$0xff]
    %v4106 = vld [vmem:[#allocation28 + $0x30] sm:$0xff]
    %v4107 = vld [vmem:[#allocation28 + $0x38] sm:$0xff]
    %v4108 = vld [vmem:[#allocation28 + $0x40] sm:$0xff]
    %v4109 = vld [vmem:[#allocation28 + $0x48] sm:$0xff]
    %v4110 = vld [vmem:[#allocation28 + $0x50] sm:$0xff]
    %v4111 = vld [vmem:[#allocation28 + $0x58] sm:$0xff]
    %v4112 = vld [vmem:[#allocation28 + $0x60] sm:$0xff]
    %v4113 = vld [vmem:[#allocation28 + $0x68] sm:$0xff]
    %v4114 = vld [vmem:[#allocation28 + $0x70] sm:$0xff]
    %v4115 = vld [vmem:[#allocation28 + $0x78] sm:$0xff]
    %v4116 = vld [vmem:[#allocation28 + $0x80] sm:$0xff]
    %v4117 = vld [vmem:[#allocation28 + $0x88] sm:$0xff]
    %v4118 = vld [vmem:[#allocation28 + $0x90] sm:$0xff]
    %v4119 = vld [vmem:[#allocation28 + $0x98] sm:$0xff]
    %v4120 = vld [vmem:[#allocation28 + $0xa0] sm:$0xff]
    %v4121 = vld [vmem:[#allocation28 + $0xa8] sm:$0xff]
    %v4122 = vld [vmem:[#allocation28 + $0xb0] sm:$0xff]
    %v4123 = vld [vmem:[#allocation28 + $0xb8] sm:$0xff]
    %v4124 = vld [vmem:[#allocation28 + $0xc0] sm:$0xff]
    %v4125 = vld [vmem:[#allocation28 + $0xc8] sm:$0xff]
    %v4126 = vld [vmem:[#allocation28 + $0xd0] sm:$0xff]
    %v4127 = vld [vmem:[#allocation28 + $0xd8] sm:$0xff]
    %v4128 = vld [vmem:[#allocation28 + $0xe0] sm:$0xff]
    %v4129 = vld [vmem:[#allocation28 + $0xe8] sm:$0xff]
    %v4130 = vld [vmem:[#allocation28 + $0xf0] sm:$0xff]
    %v4131 = vld [vmem:[#allocation28 + $0xf8] sm:$0xff]
    %v4132 = vld [vmem:[#allocation28 + $0x100] sm:$0xff]
    %v4133 = vld [vmem:[#allocation28 + $0x108] sm:$0xff]
    %v4134 = vld [vmem:[#allocation28 + $0x110] sm:$0xff]
    %v4135 = vld [vmem:[#allocation28 + $0x118] sm:$0xff]
    %v4136 = vld [vmem:[#allocation28 + $0x120] sm:$0xff]
    %v4137 = vld [vmem:[#allocation28 + $0x128] sm:$0xff]
    %v4138 = vld [vmem:[#allocation28 + $0x130] sm:$0xff]
    %v4139 = vld [vmem:[#allocation28 + $0x138] sm:$0xff]
    %v4140 = vld [vmem:[#allocation28 + $0x140] sm:$0xff]
    %v4141 = vld [vmem:[#allocation28 + $0x148] sm:$0xff]
    %v4142 = vld [vmem:[#allocation28 + $0x150] sm:$0xff]
    %v4143 = vld [vmem:[#allocation28 + $0x158] sm:$0xff]
    %v4144 = vld [vmem:[#allocation28 + $0x160] sm:$0xff]
    %v4145 = vld [vmem:[#allocation28 + $0x168] sm:$0xff]
    %v4146 = vld [vmem:[#allocation28 + $0x170] sm:$0xff]
    %v4147 = vld [vmem:[#allocation28 + $0x178] sm:$0xff]
    %v4148 = vld [vmem:[#allocation28 + $0x180] sm:$0xff]
    %v4149 = vld [vmem:[#allocation28 + $0x188] sm:$0xff]
    %v4150 = vld [vmem:[#allocation28 + $0x190] sm:$0xff]
    %v4151 = vld [vmem:[#allocation28 + $0x198] sm:$0xff]
    %v4152 = vld [vmem:[#allocation28 + $0x1a0] sm:$0xff]
    %v4153 = vld [vmem:[#allocation28 + $0x1a8] sm:$0xff]
    %v4154 = vld [vmem:[#allocation28 + $0x1b0] sm:$0xff]
    %v4155 = vld [vmem:[#allocation28 + $0x1b8] sm:$0xff]
    %v4156 = vld [vmem:[#allocation28 + $0x1c0] sm:$0xff]
    %v4157 = vld [vmem:[#allocation28 + $0x1c8] sm:$0xff]
    %v4158 = vld [vmem:[#allocation28 + $0x1d0] sm:$0xff]
    %v4159 = vld [vmem:[#allocation28 + $0x1d8] sm:$0xff]
    %v4160 = vld [vmem:[#allocation28 + $0x1e0] sm:$0xff]
    %v4161 = vld [vmem:[#allocation28 + $0x1e8] sm:$0xff]
    %v4162 = vld [vmem:[#allocation28 + $0x1f0] sm:$0xff]
    %v4163 = vld [vmem:[#allocation28 + $0x1f8] sm:$0xff]
    %v4164 = vld [vmem:[#allocation30] sm:$0xf]
    %v4166 = vlaneseq
    %v4167 = vshrl.u32 %v4166, 7
    %v4168 = vsub.s32 0, %v4167
    %v4169 = vrot.slane %v4164, %v4168
    %v4170 = vlaneseq
    %v4171 = vshrl.u32 %v4170, 7
    %v4172 = vsub.s32 1, %v4171
    %v4173 = vrot.slane %v4164, %v4172
    %v4174 = vlaneseq
    %v4175 = vshrl.u32 %v4174, 7
    %v4176 = vsub.s32 2, %v4175
    %v4177 = vrot.slane %v4164, %v4176
    %v4178 = vlaneseq
    %v4179 = vshrl.u32 %v4178, 7
    %v4180 = vsub.s32 3, %v4179
    %v4181 = vrot.slane %v4164, %v4180
    %v4250 = vunpack.c.l.b16 %v4100
    %v4251 = vunpack.c.h.b16 %v4100
    %v4252 = vunpack.c.l.b16 %v4101
    %v4253 = vunpack.c.h.b16 %v4101
    %v4254 = vunpack.c.l.b16 %v4102
    %v4255 = vunpack.c.h.b16 %v4102
    %v4256 = vunpack.c.l.b16 %v4103
    %v4257 = vunpack.c.h.b16 %v4103
    %v4258 = vunpack.c.l.b16 %v4104
    %v4259 = vunpack.c.h.b16 %v4104
    %v4260 = vunpack.c.l.b16 %v4105
    %v4261 = vunpack.c.h.b16 %v4105
    %v4262 = vunpack.c.l.b16 %v4106
    %v4263 = vunpack.c.h.b16 %v4106
    %v4264 = vunpack.c.l.b16 %v4107
    %v4265 = vunpack.c.h.b16 %v4107
    %v4266 = vunpack.c.l.b16 %v4108
    %v4267 = vunpack.c.h.b16 %v4108
    %v4268 = vunpack.c.l.b16 %v4109
    %v4269 = vunpack.c.h.b16 %v4109
    %v4270 = vunpack.c.l.b16 %v4110
    %v4271 = vunpack.c.h.b16 %v4110
    %v4272 = vunpack.c.l.b16 %v4111
    %v4273 = vunpack.c.h.b16 %v4111
    %v4274 = vunpack.c.l.b16 %v4112
    %v4275 = vunpack.c.h.b16 %v4112
    %v4276 = vunpack.c.l.b16 %v4113
    %v4277 = vunpack.c.h.b16 %v4113
    %v4278 = vunpack.c.l.b16 %v4114
    %v4279 = vunpack.c.h.b16 %v4114
    %v4280 = vunpack.c.l.b16 %v4115
    %v4281 = vunpack.c.h.b16 %v4115
    %v4282 = vunpack.c.l.b16 %v4116
    %v4283 = vunpack.c.h.b16 %v4116
    %v4284 = vunpack.c.l.b16 %v4117
    %v4285 = vunpack.c.h.b16 %v4117
    %v4286 = vunpack.c.l.b16 %v4118
    %v4287 = vunpack.c.h.b16 %v4118
    %v4288 = vunpack.c.l.b16 %v4119
    %v4289 = vunpack.c.h.b16 %v4119
    %v4290 = vunpack.c.l.b16 %v4120
    %v4291 = vunpack.c.h.b16 %v4120
    %v4292 = vunpack.c.l.b16 %v4121
    %v4293 = vunpack.c.h.b16 %v4121
    %v4294 = vunpack.c.l.b16 %v4122
    %v4295 = vunpack.c.h.b16 %v4122
    %v4296 = vunpack.c.l.b16 %v4123
    %v4297 = vunpack.c.h.b16 %v4123
    %v4298 = vunpack.c.l.b16 %v4124
    %v4299 = vunpack.c.h.b16 %v4124
    %v4300 = vunpack.c.l.b16 %v4125
    %v4301 = vunpack.c.h.b16 %v4125
    %v4302 = vunpack.c.l.b16 %v4126
    %v4303 = vunpack.c.h.b16 %v4126
    %v4304 = vunpack.c.l.b16 %v4127
    %v4305 = vunpack.c.h.b16 %v4127
    %v4306 = vunpack.c.l.b16 %v4128
    %v4307 = vunpack.c.h.b16 %v4128
    %v4308 = vunpack.c.l.b16 %v4129
    %v4309 = vunpack.c.h.b16 %v4129
    %v4310 = vunpack.c.l.b16 %v4130
    %v4311 = vunpack.c.h.b16 %v4130
    %v4312 = vunpack.c.l.b16 %v4131
    %v4313 = vunpack.c.h.b16 %v4131
    %v4314 = vunpack.c.l.b16 %v4132
    %v4315 = vunpack.c.h.b16 %v4132
    %v4316 = vunpack.c.l.b16 %v4133
    %v4317 = vunpack.c.h.b16 %v4133
    %v4318 = vunpack.c.l.b16 %v4134
    %v4319 = vunpack.c.h.b16 %v4134
    %v4320 = vunpack.c.l.b16 %v4135
    %v4321 = vunpack.c.h.b16 %v4135
    %v4322 = vunpack.c.l.b16 %v4136
    %v4323 = vunpack.c.h.b16 %v4136
    %v4324 = vunpack.c.l.b16 %v4137
    %v4325 = vunpack.c.h.b16 %v4137
    %v4326 = vunpack.c.l.b16 %v4138
    %v4327 = vunpack.c.h.b16 %v4138
    %v4328 = vunpack.c.l.b16 %v4139
    %v4329 = vunpack.c.h.b16 %v4139
    %v4330 = vunpack.c.l.b16 %v4140
    %v4331 = vunpack.c.h.b16 %v4140
    %v4332 = vunpack.c.l.b16 %v4141
    %v4333 = vunpack.c.h.b16 %v4141
    %v4334 = vunpack.c.l.b16 %v4142
    %v4335 = vunpack.c.h.b16 %v4142
    %v4336 = vunpack.c.l.b16 %v4143
    %v4337 = vunpack.c.h.b16 %v4143
    %v4338 = vunpack.c.l.b16 %v4144
    %v4339 = vunpack.c.h.b16 %v4144
    %v4340 = vunpack.c.l.b16 %v4145
    %v4341 = vunpack.c.h.b16 %v4145
    %v4342 = vunpack.c.l.b16 %v4146
    %v4343 = vunpack.c.h.b16 %v4146
    %v4344 = vunpack.c.l.b16 %v4147
    %v4345 = vunpack.c.h.b16 %v4147
    %v4346 = vunpack.c.l.b16 %v4148
    %v4347 = vunpack.c.h.b16 %v4148
    %v4348 = vunpack.c.l.b16 %v4149
    %v4349 = vunpack.c.h.b16 %v4149
    %v4350 = vunpack.c.l.b16 %v4150
    %v4351 = vunpack.c.h.b16 %v4150
    %v4352 = vunpack.c.l.b16 %v4151
    %v4353 = vunpack.c.h.b16 %v4151
    %v4354 = vunpack.c.l.b16 %v4152
    %v4355 = vunpack.c.h.b16 %v4152
    %v4356 = vunpack.c.l.b16 %v4153
    %v4357 = vunpack.c.h.b16 %v4153
    %v4358 = vunpack.c.l.b16 %v4154
    %v4359 = vunpack.c.h.b16 %v4154
    %v4360 = vunpack.c.l.b16 %v4155
    %v4361 = vunpack.c.h.b16 %v4155
    %v4362 = vunpack.c.l.b16 %v4156
    %v4363 = vunpack.c.h.b16 %v4156
    %v4364 = vunpack.c.l.b16 %v4157
    %v4365 = vunpack.c.h.b16 %v4157
    %v4366 = vunpack.c.l.b16 %v4158
    %v4367 = vunpack.c.h.b16 %v4158
    %v4368 = vunpack.c.l.b16 %v4159
    %v4369 = vunpack.c.h.b16 %v4159
    %v4370 = vunpack.c.l.b16 %v4160
    %v4371 = vunpack.c.h.b16 %v4160
    %v4372 = vunpack.c.l.b16 %v4161
    %v4373 = vunpack.c.h.b16 %v4161
    %v4374 = vunpack.c.l.b16 %v4162
    %v4375 = vunpack.c.h.b16 %v4162
    %v4376 = vunpack.c.l.b16 %v4163
    %v4377 = vunpack.c.h.b16 %v4163
    %v4378 = vpack.c.b16 %v4254, %v4250
    %v4379 = vpack.c.b16 %v4255, %v4251
    %v4380 = vpack.c.b16 %v4256, %v4252
    %v4381 = vpack.c.b16 %v4257, %v4253
    %v4382 = vpack.c.b16 %v4262, %v4258
    %v4383 = vpack.c.b16 %v4263, %v4259
    %v4384 = vpack.c.b16 %v4264, %v4260
    %v4385 = vpack.c.b16 %v4265, %v4261
    %v4386 = vpack.c.b16 %v4270, %v4266
    %v4387 = vpack.c.b16 %v4271, %v4267
    %v4388 = vpack.c.b16 %v4272, %v4268
    %v4389 = vpack.c.b16 %v4273, %v4269
    %v4390 = vpack.c.b16 %v4278, %v4274
    %v4391 = vpack.c.b16 %v4279, %v4275
    %v4392 = vpack.c.b16 %v4280, %v4276
    %v4393 = vpack.c.b16 %v4281, %v4277
    %v4394 = vpack.c.b16 %v4286, %v4282
    %v4395 = vpack.c.b16 %v4287, %v4283
    %v4396 = vpack.c.b16 %v4288, %v4284
    %v4397 = vpack.c.b16 %v4289, %v4285
    %v4398 = vpack.c.b16 %v4294, %v4290
    %v4399 = vpack.c.b16 %v4295, %v4291
    %v4400 = vpack.c.b16 %v4296, %v4292
    %v4401 = vpack.c.b16 %v4297, %v4293
    %v4402 = vpack.c.b16 %v4302, %v4298
    %v4403 = vpack.c.b16 %v4303, %v4299
    %v4404 = vpack.c.b16 %v4304, %v4300
    %v4405 = vpack.c.b16 %v4305, %v4301
    %v4406 = vpack.c.b16 %v4310, %v4306
    %v4407 = vpack.c.b16 %v4311, %v4307
    %v4408 = vpack.c.b16 %v4312, %v4308
    %v4409 = vpack.c.b16 %v4313, %v4309
    %v4410 = vpack.c.b16 %v4318, %v4314
    %v4411 = vpack.c.b16 %v4319, %v4315
    %v4412 = vpack.c.b16 %v4320, %v4316
    %v4413 = vpack.c.b16 %v4321, %v4317
    %v4414 = vpack.c.b16 %v4326, %v4322
    %v4415 = vpack.c.b16 %v4327, %v4323
    %v4416 = vpack.c.b16 %v4328, %v4324
    %v4417 = vpack.c.b16 %v4329, %v4325
    %v4418 = vpack.c.b16 %v4334, %v4330
    %v4419 = vpack.c.b16 %v4335, %v4331
    %v4420 = vpack.c.b16 %v4336, %v4332
    %v4421 = vpack.c.b16 %v4337, %v4333
    %v4422 = vpack.c.b16 %v4342, %v4338
    %v4423 = vpack.c.b16 %v4343, %v4339
    %v4424 = vpack.c.b16 %v4344, %v4340
    %v4425 = vpack.c.b16 %v4345, %v4341
    %v4426 = vpack.c.b16 %v4350, %v4346
    %v4427 = vpack.c.b16 %v4351, %v4347
    %v4428 = vpack.c.b16 %v4352, %v4348
    %v4429 = vpack.c.b16 %v4353, %v4349
    %v4430 = vpack.c.b16 %v4358, %v4354
    %v4431 = vpack.c.b16 %v4359, %v4355
    %v4432 = vpack.c.b16 %v4360, %v4356
    %v4433 = vpack.c.b16 %v4361, %v4357
    %v4434 = vpack.c.b16 %v4366, %v4362
    %v4435 = vpack.c.b16 %v4367, %v4363
    %v4436 = vpack.c.b16 %v4368, %v4364
    %v4437 = vpack.c.b16 %v4369, %v4365
    %v4438 = vpack.c.b16 %v4374, %v4370
    %v4439 = vpack.c.b16 %v4375, %v4371
    %v4440 = vpack.c.b16 %v4376, %v4372
    %v4441 = vpack.c.b16 %v4377, %v4373
    %4506 = vmatprep.subr.bf16.mxu0 %v4379
    %4507 = vmatpush1.bf16.msra.mxu0 %v4378
    %4508 = vmatprep.subr.bf16.mxu0 %v4383
    %4509 = vmatpush1.bf16.msra.mxu0 %v4382
    %4510 = vmatprep.subr.bf16.mxu0 %v4387
    %4511 = vmatpush1.bf16.msra.mxu0 %v4386
    %4512 = vmatprep.subr.bf16.mxu0 %v4391
    %4513 = vmatpush1.bf16.msra.mxu0 %v4390
    %4514 = vmatprep.subr.bf16.mxu0 %v4395
    %4515 = vmatpush1.bf16.msra.mxu0 %v4394
    %4516 = vmatprep.subr.bf16.mxu0 %v4399
    %4517 = vmatpush1.bf16.msra.mxu0 %v4398
    %4518 = vmatprep.subr.bf16.mxu0 %v4403
    %4519 = vmatpush1.bf16.msra.mxu0 %v4402
    %4520 = vmatprep.subr.bf16.mxu0 %v4407
    %4521 = vmatpush1.bf16.msra.mxu0 %v4406
    %4522 = vmatprep.subr.bf16.mxu0 %v4411
    %4523 = vmatpush1.bf16.msra.mxu0 %v4410
    %4524 = vmatprep.subr.bf16.mxu0 %v4415
    %4525 = vmatpush1.bf16.msra.mxu0 %v4414
    %4526 = vmatprep.subr.bf16.mxu0 %v4419
    %4527 = vmatpush1.bf16.msra.mxu0 %v4418
    %4528 = vmatprep.subr.bf16.mxu0 %v4423
    %4529 = vmatpush1.bf16.msra.mxu0 %v4422
    %4530 = vmatprep.subr.bf16.mxu0 %v4427
    %4531 = vmatpush1.bf16.msra.mxu0 %v4426
    %4532 = vmatprep.subr.bf16.mxu0 %v4431
    %4533 = vmatpush1.bf16.msra.mxu0 %v4430
    %4534 = vmatprep.subr.bf16.mxu0 %v4435
    %4535 = vmatpush1.bf16.msra.mxu0 %v4434
    %4536 = vmatprep.subr.bf16.mxu0 %v4439
    %4537 = vmatpush1.bf16.msra.mxu0 %v4438
    %4538 = vmatprep.mubr.bf16.mxu0 %v4099
    %4539 = vmatmul.mubr.bf16.gmra.mrb[0].mxu0 %v4098
    %v4540 = vpop.f32.mrb[0].mxu0
    %v4541 = vadd.f32 %v4169, %v4540
    %v4542 = vpop.f32.mrb[0].mxu0
    %v4543 = vadd.f32 %v4173, %v4542
    %v4544 = vpop.f32.mrb[0].mxu0
    %v4545 = vadd.f32 %v4169, %v4544
    %v4546 = vpop.f32.mrb[0].mxu0
    %v4547 = vadd.f32 %v4173, %v4546
    %4548 = vdwg.mxu0
    %4549 = vmatprep.subr.bf16.mxu0 %v4381
    %4550 = vmatpush1.bf16.msra.mxu0 %v4380
    %4551 = vmatprep.subr.bf16.mxu0 %v4385
    %4552 = vmatpush1.bf16.msra.mxu0 %v4384
    %4553 = vmatprep.subr.bf16.mxu0 %v4389
    %4554 = vmatpush1.bf16.msra.mxu0 %v4388
    %4555 = vmatprep.subr.bf16.mxu0 %v4393
    %4556 = vmatpush1.bf16.msra.mxu0 %v4392
    %4557 = vmatprep.subr.bf16.mxu0 %v4397
    %4558 = vmatpush1.bf16.msra.mxu0 %v4396
    %4559 = vmatprep.subr.bf16.mxu0 %v4401
    %4560 = vmatpush1.bf16.msra.mxu0 %v4400
    %4561 = vmatprep.subr.bf16.mxu0 %v4405
    %4562 = vmatpush1.bf16.msra.mxu0 %v4404
    %4563 = vmatprep.subr.bf16.mxu0 %v4409
    %4564 = vmatpush1.bf16.msra.mxu0 %v4408
    %4565 = vmatprep.subr.bf16.mxu0 %v4413
    %4566 = vmatpush1.bf16.msra.mxu0 %v4412
    %4567 = vmatprep.subr.bf16.mxu0 %v4417
    %4568 = vmatpush1.bf16.msra.mxu0 %v4416
    %4569 = vmatprep.subr.bf16.mxu0 %v4421
    %4570 = vmatpush1.bf16.msra.mxu0 %v4420
    %4571 = vmatprep.subr.bf16.mxu0 %v4425
    %4572 = vmatpush1.bf16.msra.mxu0 %v4424
    %4573 = vmatprep.subr.bf16.mxu0 %v4429
    %4574 = vmatpush1.bf16.msra.mxu0 %v4428
    %4575 = vmatprep.subr.bf16.mxu0 %v4433
    %4576 = vmatpush1.bf16.msra.mxu0 %v4432
    %4577 = vmatprep.subr.bf16.mxu0 %v4437
    %4578 = vmatpush1.bf16.msra.mxu0 %v4436
    %4579 = vmatprep.subr.bf16.mxu0 %v4441
    %4580 = vmatpush1.bf16.msra.mxu0 %v4440
    %4581 = vmatprep.mubr.bf16.mxu0 %v4099
    %4582 = vmatmul.mubr.bf16.gmra.mrb[0].mxu0 %v4098
    %v4583 = vpop.f32.mrb[0].mxu0
    %v4584 = vadd.f32 %v4177, %v4583
    %v4585 = vpop.f32.mrb[0].mxu0
    %v4586 = vadd.f32 %v4181, %v4585
    %v4587 = vpop.f32.mrb[0].mxu0
    %v4588 = vadd.f32 %v4177, %v4587
    %v4589 = vpop.f32.mrb[0].mxu0
    %v4590 = vadd.f32 %v4181, %v4589
    %4591 = vdwg.mxu0
    %v4592 = vld [vmem:[#allocation31] sm:$0xf]
    %v4593 = vld [vmem:[#allocation33] sm:$0xf]
    %v4594 = vadd.f32 %v4541, %v4543
    %v4595 = vadd.f32 %v4594, %v4584
    %v4596 = vadd.f32 %v4595, %v4586
    %4597 = vadd.xlane.f32.xlu0 %v4596
    %v4598 = vpop.xlane.xlu0 %4597
    %v4599 = vadd.f32 %v4545, %v4547
    %v4600 = vadd.f32 %v4599, %v4588
    %v4601 = vadd.f32 %v4600, %v4590
    %4602 = vadd.xlane.f32.xlu0 %v4601
    %v4603 = vpop.xlane.xlu0 %4602
    %v4604 = vrcp.pop 512.0
    %v4605 = vmul.f32 %v4598, %v4604
    %v4606 = vmul.f32 %v4603, %v4604
    %v4607 = vsub.f32 %v4541, %v4605
    %v4608 = vsub.f32 %v4543, %v4605
    %v4609 = vsub.f32 %v4584, %v4605
    %v4610 = vsub.f32 %v4586, %v4605
    %v4611 = vsub.f32 %v4545, %v4606
    %v4612 = vsub.f32 %v4547, %v4606
    %v4613 = vsub.f32 %v4588, %v4606
    %v4614 = vsub.f32 %v4590, %v4606
    %v4615 = vmul.f32 %v4607, %v4607
    %v4616 = vmul.f32 %v4608, %v4608
    %v4617 = vmul.f32 %v4609, %v4609
    %v4618 = vmul.f32 %v4610, %v4610
    %v4619 = vmul.f32 %v4611, %v4611
    %v4620 = vmul.f32 %v4612, %v4612
    %v4621 = vmul.f32 %v4613, %v4613
    %v4622 = vmul.f32 %v4614, %v4614
    %v4623 = vadd.f32 %v4615, %v4616
    %v4624 = vadd.f32 %v4623, %v4617
    %v4625 = vadd.f32 %v4624, %v4618
    %4626 = vadd.xlane.f32.xlu0 %v4625
    %v4627 = vpop.xlane.xlu0 %4626
    %v4628 = vadd.f32 %v4619, %v4620
    %v4629 = vadd.f32 %v4628, %v4621
    %v4630 = vadd.f32 %v4629, %v4622
    %4631 = vadd.xlane.f32.xlu0 %v4630
    %v4632 = vpop.xlane.xlu0 %4631
    %v4633 = vmul.f32 %v4627, %v4604
    %v4634 = vmul.f32 %v4632, %v4604
    %v4635 = vadd.f32 %v4633, 1e-05
    %v4636 = vadd.f32 %v4634, 1e-05
    %v4637 = vrsqrt.pop %v4635
    %v4638 = vrsqrt.pop %v4636
    %v4639 = vmul.f32 %v4607, %v4637
    %v4640 = vmul.f32 %v4608, %v4637
    %v4641 = vmul.f32 %v4609, %v4637
    %v4642 = vmul.f32 %v4610, %v4637
    %v4643 = vmul.f32 %v4611, %v4638
    %v4644 = vmul.f32 %v4612, %v4638
    %v4645 = vmul.f32 %v4613, %v4638
    %v4646 = vmul.f32 %v4614, %v4638
    %v4648 = vlaneseq
    %v4649 = vshrl.u32 %v4648, 7
    %v4650 = vsub.s32 0, %v4649
    %v4651 = vrot.slane %v4592, %v4650
    %v4652 = vlaneseq
    %v4653 = vshrl.u32 %v4652, 7
    %v4654 = vsub.s32 1, %v4653
    %v4655 = vrot.slane %v4592, %v4654
    %v4656 = vlaneseq
    %v4657 = vshrl.u32 %v4656, 7
    %v4658 = vsub.s32 2, %v4657
    %v4659 = vrot.slane %v4592, %v4658
    %v4660 = vlaneseq
    %v4661 = vshrl.u32 %v4660, 7
    %v4662 = vsub.s32 3, %v4661
    %v4663 = vrot.slane %v4592, %v4662
    %v4668 = vmul.f32 %v4639, %v4651
    %v4669 = vmul.f32 %v4640, %v4655
    %v4670 = vmul.f32 %v4641, %v4659
    %v4671 = vmul.f32 %v4642, %v4663
    %v4672 = vmul.f32 %v4643, %v4651
    %v4673 = vmul.f32 %v4644, %v4655
    %v4674 = vmul.f32 %v4645, %v4659
    %v4675 = vmul.f32 %v4646, %v4663
    %v4677 = vlaneseq
    %v4678 = vshrl.u32 %v4677, 7
    %v4679 = vsub.s32 0, %v4678
    %v4680 = vrot.slane %v4593, %v4679
    %v4681 = vlaneseq
    %v4682 = vshrl.u32 %v4681, 7
    %v4683 = vsub.s32 1, %v4682
    %v4684 = vrot.slane %v4593, %v4683
    %v4685 = vlaneseq
    %v4686 = vshrl.u32 %v4685, 7
    %v4687 = vsub.s32 2, %v4686
    %v4688 = vrot.slane %v4593, %v4687
    %v4689 = vlaneseq
    %v4690 = vshrl.u32 %v4689, 7
    %v4691 = vsub.s32 3, %v4690
    %v4692 = vrot.slane %v4593, %v4691
    %v4697 = vadd.f32 %v4668, %v4680
    %v4698 = vadd.f32 %v4669, %v4684
    %v4699 = vadd.f32 %v4670, %v4688
    %v4700 = vadd.f32 %v4671, %v4692
    %v4701 = vadd.f32 %v4672, %v4680
    %v4702 = vadd.f32 %v4673, %v4684
    %v4703 = vadd.f32 %v4674, %v4688
    %v4704 = vadd.f32 %v4675, %v4692
    %v4705 = vmax.f32 %v4697, 0.0
    %v4706 = vmax.f32 %v4698, 0.0
    %v4707 = vmax.f32 %v4699, 0.0
    %v4708 = vmax.f32 %v4700, 0.0
    %v4709 = vmax.f32 %v4701, 0.0
    %v4710 = vmax.f32 %v4702, 0.0
    %v4711 = vmax.f32 %v4703, 0.0
    %v4712 = vmax.f32 %v4704, 0.0
    %v4713 = vpack.c.bf16 %v4709, %v4705
    %v4714 = vpack.c.bf16 %v4710, %v4706
    %v4715 = vpack.c.bf16 %v4711, %v4707
    %v4716 = vpack.c.bf16 %v4712, %v4708
    %v4717 = vld [vmem:[#allocation34] sm:$0xff]
    %v4718 = vld [vmem:[#allocation34 + $0x8] sm:$0xff]
    %v4719 = vld [vmem:[#allocation34 + $0x10] sm:$0xff]
    %v4720 = vld [vmem:[#allocation34 + $0x18] sm:$0xff]
    %v4721 = vld [vmem:[#allocation34 + $0x20] sm:$0xff]
    %v4722 = vld [vmem:[#allocation34 + $0x28] sm:$0xff]
    %v4723 = vld [vmem:[#allocation34 + $0x30] sm:$0xff]
    %v4724 = vld [vmem:[#allocation34 + $0x38] sm:$0xff]
    %v4725 = vld [vmem:[#allocation34 + $0x40] sm:$0xff]
    %v4726 = vld [vmem:[#allocation34 + $0x48] sm:$0xff]
    %v4727 = vld [vmem:[#allocation34 + $0x50] sm:$0xff]
    %v4728 = vld [vmem:[#allocation34 + $0x58] sm:$0xff]
    %v4729 = vld [vmem:[#allocation34 + $0x60] sm:$0xff]
    %v4730 = vld [vmem:[#allocation34 + $0x68] sm:$0xff]
    %v4731 = vld [vmem:[#allocation34 + $0x70] sm:$0xff]
    %v4732 = vld [vmem:[#allocation34 + $0x78] sm:$0xff]
    %v4733 = vld [vmem:[#allocation34 + $0x80] sm:$0xff]
    %v4734 = vld [vmem:[#allocation34 + $0x88] sm:$0xff]
    %v4735 = vld [vmem:[#allocation34 + $0x90] sm:$0xff]
    %v4736 = vld [vmem:[#allocation34 + $0x98] sm:$0xff]
    %v4737 = vld [vmem:[#allocation34 + $0xa0] sm:$0xff]
    %v4738 = vld [vmem:[#allocation34 + $0xa8] sm:$0xff]
    %v4739 = vld [vmem:[#allocation34 + $0xb0] sm:$0xff]
    %v4740 = vld [vmem:[#allocation34 + $0xb8] sm:$0xff]
    %v4741 = vld [vmem:[#allocation34 + $0xc0] sm:$0xff]
    %v4742 = vld [vmem:[#allocation34 + $0xc8] sm:$0xff]
    %v4743 = vld [vmem:[#allocation34 + $0xd0] sm:$0xff]
    %v4744 = vld [vmem:[#allocation34 + $0xd8] sm:$0xff]
    %v4745 = vld [vmem:[#allocation34 + $0xe0] sm:$0xff]
    %v4746 = vld [vmem:[#allocation34 + $0xe8] sm:$0xff]
    %v4747 = vld [vmem:[#allocation34 + $0xf0] sm:$0xff]
    %v4748 = vld [vmem:[#allocation34 + $0xf8] sm:$0xff]
    %v4749 = vld [vmem:[#allocation34 + $0x100] sm:$0xff]
    %v4750 = vld [vmem:[#allocation34 + $0x108] sm:$0xff]
    %v4751 = vld [vmem:[#allocation34 + $0x110] sm:$0xff]
    %v4752 = vld [vmem:[#allocation34 + $0x118] sm:$0xff]
    %v4753 = vld [vmem:[#allocation34 + $0x120] sm:$0xff]
    %v4754 = vld [vmem:[#allocation34 + $0x128] sm:$0xff]
    %v4755 = vld [vmem:[#allocation34 + $0x130] sm:$0xff]
    %v4756 = vld [vmem:[#allocation34 + $0x138] sm:$0xff]
    %v4757 = vld [vmem:[#allocation34 + $0x140] sm:$0xff]
    %v4758 = vld [vmem:[#allocation34 + $0x148] sm:$0xff]
    %v4759 = vld [vmem:[#allocation34 + $0x150] sm:$0xff]
    %v4760 = vld [vmem:[#allocation34 + $0x158] sm:$0xff]
    %v4761 = vld [vmem:[#allocation34 + $0x160] sm:$0xff]
    %v4762 = vld [vmem:[#allocation34 + $0x168] sm:$0xff]
    %v4763 = vld [vmem:[#allocation34 + $0x170] sm:$0xff]
    %v4764 = vld [vmem:[#allocation34 + $0x178] sm:$0xff]
    %v4765 = vld [vmem:[#allocation34 + $0x180] sm:$0xff]
    %v4766 = vld [vmem:[#allocation34 + $0x188] sm:$0xff]
    %v4767 = vld [vmem:[#allocation34 + $0x190] sm:$0xff]
    %v4768 = vld [vmem:[#allocation34 + $0x198] sm:$0xff]
    %v4769 = vld [vmem:[#allocation34 + $0x1a0] sm:$0xff]
    %v4770 = vld [vmem:[#allocation34 + $0x1a8] sm:$0xff]
    %v4771 = vld [vmem:[#allocation34 + $0x1b0] sm:$0xff]
    %v4772 = vld [vmem:[#allocation34 + $0x1b8] sm:$0xff]
    %v4773 = vld [vmem:[#allocation34 + $0x1c0] sm:$0xff]
    %v4774 = vld [vmem:[#allocation34 + $0x1c8] sm:$0xff]
    %v4775 = vld [vmem:[#allocation34 + $0x1d0] sm:$0xff]
    %v4776 = vld [vmem:[#allocation34 + $0x1d8] sm:$0xff]
    %v4777 = vld [vmem:[#allocation34 + $0x1e0] sm:$0xff]
    %v4778 = vld [vmem:[#allocation34 + $0x1e8] sm:$0xff]
    %v4779 = vld [vmem:[#allocation34 + $0x1f0] sm:$0xff]
    %v4780 = vld [vmem:[#allocation34 + $0x1f8] sm:$0xff]
    %v4781 = vld [vmem:[#allocation36] sm:$0x3]
    %v4783 = vlaneseq
    %v4784 = vshrl.u32 %v4783, 7
    %v4785 = vsub.s32 0, %v4784
    %v4786 = vrot.slane %v4781, %v4785
    %v4787 = vlaneseq
    %v4788 = vshrl.u32 %v4787, 7
    %v4789 = vsub.s32 1, %v4788
    %v4790 = vrot.slane %v4781, %v4789
    %v4857 = vunpack.c.l.b16 %v4717
    %v4858 = vunpack.c.h.b16 %v4717
    %v4859 = vunpack.c.l.b16 %v4718
    %v4860 = vunpack.c.h.b16 %v4718
    %v4861 = vunpack.c.l.b16 %v4719
    %v4862 = vunpack.c.h.b16 %v4719
    %v4863 = vunpack.c.l.b16 %v4720
    %v4864 = vunpack.c.h.b16 %v4720
    %v4865 = vunpack.c.l.b16 %v4721
    %v4866 = vunpack.c.h.b16 %v4721
    %v4867 = vunpack.c.l.b16 %v4722
    %v4868 = vunpack.c.h.b16 %v4722
    %v4869 = vunpack.c.l.b16 %v4723
    %v4870 = vunpack.c.h.b16 %v4723
    %v4871 = vunpack.c.l.b16 %v4724
    %v4872 = vunpack.c.h.b16 %v4724
    %v4873 = vunpack.c.l.b16 %v4725
    %v4874 = vunpack.c.h.b16 %v4725
    %v4875 = vunpack.c.l.b16 %v4726
    %v4876 = vunpack.c.h.b16 %v4726
    %v4877 = vunpack.c.l.b16 %v4727
    %v4878 = vunpack.c.h.b16 %v4727
    %v4879 = vunpack.c.l.b16 %v4728
    %v4880 = vunpack.c.h.b16 %v4728
    %v4881 = vunpack.c.l.b16 %v4729
    %v4882 = vunpack.c.h.b16 %v4729
    %v4883 = vunpack.c.l.b16 %v4730
    %v4884 = vunpack.c.h.b16 %v4730
    %v4885 = vunpack.c.l.b16 %v4731
    %v4886 = vunpack.c.h.b16 %v4731
    %v4887 = vunpack.c.l.b16 %v4732
    %v4888 = vunpack.c.h.b16 %v4732
    %v4889 = vunpack.c.l.b16 %v4733
    %v4890 = vunpack.c.h.b16 %v4733
    %v4891 = vunpack.c.l.b16 %v4734
    %v4892 = vunpack.c.h.b16 %v4734
    %v4893 = vunpack.c.l.b16 %v4735
    %v4894 = vunpack.c.h.b16 %v4735
    %v4895 = vunpack.c.l.b16 %v4736
    %v4896 = vunpack.c.h.b16 %v4736
    %v4897 = vunpack.c.l.b16 %v4737
    %v4898 = vunpack.c.h.b16 %v4737
    %v4899 = vunpack.c.l.b16 %v4738
    %v4900 = vunpack.c.h.b16 %v4738
    %v4901 = vunpack.c.l.b16 %v4739
    %v4902 = vunpack.c.h.b16 %v4739
    %v4903 = vunpack.c.l.b16 %v4740
    %v4904 = vunpack.c.h.b16 %v4740
    %v4905 = vunpack.c.l.b16 %v4741
    %v4906 = vunpack.c.h.b16 %v4741
    %v4907 = vunpack.c.l.b16 %v4742
    %v4908 = vunpack.c.h.b16 %v4742
    %v4909 = vunpack.c.l.b16 %v4743
    %v4910 = vunpack.c.h.b16 %v4743
    %v4911 = vunpack.c.l.b16 %v4744
    %v4912 = vunpack.c.h.b16 %v4744
    %v4913 = vunpack.c.l.b16 %v4745
    %v4914 = vunpack.c.h.b16 %v4745
    %v4915 = vunpack.c.l.b16 %v4746
    %v4916 = vunpack.c.h.b16 %v4746
    %v4917 = vunpack.c.l.b16 %v4747
    %v4918 = vunpack.c.h.b16 %v4747
    %v4919 = vunpack.c.l.b16 %v4748
    %v4920 = vunpack.c.h.b16 %v4748
    %v4921 = vunpack.c.l.b16 %v4749
    %v4922 = vunpack.c.h.b16 %v4749
    %v4923 = vunpack.c.l.b16 %v4750
    %v4924 = vunpack.c.h.b16 %v4750
    %v4925 = vunpack.c.l.b16 %v4751
    %v4926 = vunpack.c.h.b16 %v4751
    %v4927 = vunpack.c.l.b16 %v4752
    %v4928 = vunpack.c.h.b16 %v4752
    %v4929 = vunpack.c.l.b16 %v4753
    %v4930 = vunpack.c.h.b16 %v4753
    %v4931 = vunpack.c.l.b16 %v4754
    %v4932 = vunpack.c.h.b16 %v4754
    %v4933 = vunpack.c.l.b16 %v4755
    %v4934 = vunpack.c.h.b16 %v4755
    %v4935 = vunpack.c.l.b16 %v4756
    %v4936 = vunpack.c.h.b16 %v4756
    %v4937 = vunpack.c.l.b16 %v4757
    %v4938 = vunpack.c.h.b16 %v4757
    %v4939 = vunpack.c.l.b16 %v4758
    %v4940 = vunpack.c.h.b16 %v4758
    %v4941 = vunpack.c.l.b16 %v4759
    %v4942 = vunpack.c.h.b16 %v4759
    %v4943 = vunpack.c.l.b16 %v4760
    %v4944 = vunpack.c.h.b16 %v4760
    %v4945 = vunpack.c.l.b16 %v4761
    %v4946 = vunpack.c.h.b16 %v4761
    %v4947 = vunpack.c.l.b16 %v4762
    %v4948 = vunpack.c.h.b16 %v4762
    %v4949 = vunpack.c.l.b16 %v4763
    %v4950 = vunpack.c.h.b16 %v4763
    %v4951 = vunpack.c.l.b16 %v4764
    %v4952 = vunpack.c.h.b16 %v4764
    %v4953 = vunpack.c.l.b16 %v4765
    %v4954 = vunpack.c.h.b16 %v4765
    %v4955 = vunpack.c.l.b16 %v4766
    %v4956 = vunpack.c.h.b16 %v4766
    %v4957 = vunpack.c.l.b16 %v4767
    %v4958 = vunpack.c.h.b16 %v4767
    %v4959 = vunpack.c.l.b16 %v4768
    %v4960 = vunpack.c.h.b16 %v4768
    %v4961 = vunpack.c.l.b16 %v4769
    %v4962 = vunpack.c.h.b16 %v4769
    %v4963 = vunpack.c.l.b16 %v4770
    %v4964 = vunpack.c.h.b16 %v4770
    %v4965 = vunpack.c.l.b16 %v4771
    %v4966 = vunpack.c.h.b16 %v4771
    %v4967 = vunpack.c.l.b16 %v4772
    %v4968 = vunpack.c.h.b16 %v4772
    %v4969 = vunpack.c.l.b16 %v4773
    %v4970 = vunpack.c.h.b16 %v4773
    %v4971 = vunpack.c.l.b16 %v4774
    %v4972 = vunpack.c.h.b16 %v4774
    %v4973 = vunpack.c.l.b16 %v4775
    %v4974 = vunpack.c.h.b16 %v4775
    %v4975 = vunpack.c.l.b16 %v4776
    %v4976 = vunpack.c.h.b16 %v4776
    %v4977 = vunpack.c.l.b16 %v4777
    %v4978 = vunpack.c.h.b16 %v4777
    %v4979 = vunpack.c.l.b16 %v4778
    %v4980 = vunpack.c.h.b16 %v4778
    %v4981 = vunpack.c.l.b16 %v4779
    %v4982 = vunpack.c.h.b16 %v4779
    %v4983 = vunpack.c.l.b16 %v4780
    %v4984 = vunpack.c.h.b16 %v4780
    %v4985 = vpack.c.b16 %v4859, %v4857
    %v4986 = vpack.c.b16 %v4860, %v4858
    %v4987 = vpack.c.b16 %v4863, %v4861
    %v4988 = vpack.c.b16 %v4864, %v4862
    %v4989 = vpack.c.b16 %v4867, %v4865
    %v4990 = vpack.c.b16 %v4868, %v4866
    %v4991 = vpack.c.b16 %v4871, %v4869
    %v4992 = vpack.c.b16 %v4872, %v4870
    %v4993 = vpack.c.b16 %v4875, %v4873
    %v4994 = vpack.c.b16 %v4876, %v4874
    %v4995 = vpack.c.b16 %v4879, %v4877
    %v4996 = vpack.c.b16 %v4880, %v4878
    %v4997 = vpack.c.b16 %v4883, %v4881
    %v4998 = vpack.c.b16 %v4884, %v4882
    %v4999 = vpack.c.b16 %v4887, %v4885
    %v5000 = vpack.c.b16 %v4888, %v4886
    %v5001 = vpack.c.b16 %v4891, %v4889
    %v5002 = vpack.c.b16 %v4892, %v4890
    %v5003 = vpack.c.b16 %v4895, %v4893
    %v5004 = vpack.c.b16 %v4896, %v4894
    %v5005 = vpack.c.b16 %v4899, %v4897
    %v5006 = vpack.c.b16 %v4900, %v4898
    %v5007 = vpack.c.b16 %v4903, %v4901
    %v5008 = vpack.c.b16 %v4904, %v4902
    %v5009 = vpack.c.b16 %v4907, %v4905
    %v5010 = vpack.c.b16 %v4908, %v4906
    %v5011 = vpack.c.b16 %v4911, %v4909
    %v5012 = vpack.c.b16 %v4912, %v4910
    %v5013 = vpack.c.b16 %v4915, %v4913
    %v5014 = vpack.c.b16 %v4916, %v4914
    %v5015 = vpack.c.b16 %v4919, %v4917
    %v5016 = vpack.c.b16 %v4920, %v4918
    %v5017 = vpack.c.b16 %v4923, %v4921
    %v5018 = vpack.c.b16 %v4924, %v4922
    %v5019 = vpack.c.b16 %v4927, %v4925
    %v5020 = vpack.c.b16 %v4928, %v4926
    %v5021 = vpack.c.b16 %v4931, %v4929
    %v5022 = vpack.c.b16 %v4932, %v4930
    %v5023 = vpack.c.b16 %v4935, %v4933
    %v5024 = vpack.c.b16 %v4936, %v4934
    %v5025 = vpack.c.b16 %v4939, %v4937
    %v5026 = vpack.c.b16 %v4940, %v4938
    %v5027 = vpack.c.b16 %v4943, %v4941
    %v5028 = vpack.c.b16 %v4944, %v4942
    %v5029 = vpack.c.b16 %v4947, %v4945
    %v5030 = vpack.c.b16 %v4948, %v4946
    %v5031 = vpack.c.b16 %v4951, %v4949
    %v5032 = vpack.c.b16 %v4952, %v4950
    %v5033 = vpack.c.b16 %v4955, %v4953
    %v5034 = vpack.c.b16 %v4956, %v4954
    %v5035 = vpack.c.b16 %v4959, %v4957
    %v5036 = vpack.c.b16 %v4960, %v4958
    %v5037 = vpack.c.b16 %v4963, %v4961
    %v5038 = vpack.c.b16 %v4964, %v4962
    %v5039 = vpack.c.b16 %v4967, %v4965
    %v5040 = vpack.c.b16 %v4968, %v4966
    %v5041 = vpack.c.b16 %v4971, %v4969
    %v5042 = vpack.c.b16 %v4972, %v4970
    %v5043 = vpack.c.b16 %v4975, %v4973
    %v5044 = vpack.c.b16 %v4976, %v4974
    %v5045 = vpack.c.b16 %v4979, %v4977
    %v5046 = vpack.c.b16 %v4980, %v4978
    %v5047 = vpack.c.b16 %v4983, %v4981
    %v5048 = vpack.c.b16 %v4984, %v4982
    %5113 = vmatprep.subr.bf16.mxu0 %v4986
    %5114 = vmatpush1.bf16.msra.mxu0 %v4985
    %5115 = vmatprep.subr.bf16.mxu0 %v4988
    %5116 = vmatpush1.bf16.msra.mxu0 %v4987
    %5117 = vmatprep.subr.bf16.mxu0 %v4990
    %5118 = vmatpush1.bf16.msra.mxu0 %v4989
    %5119 = vmatprep.subr.bf16.mxu0 %v4992
    %5120 = vmatpush1.bf16.msra.mxu0 %v4991
    %5121 = vmatprep.subr.bf16.mxu0 %v4994
    %5122 = vmatpush1.bf16.msra.mxu0 %v4993
    %5123 = vmatprep.subr.bf16.mxu0 %v4996
    %5124 = vmatpush1.bf16.msra.mxu0 %v4995
    %5125 = vmatprep.subr.bf16.mxu0 %v4998
    %5126 = vmatpush1.bf16.msra.mxu0 %v4997
    %5127 = vmatprep.subr.bf16.mxu0 %v5000
    %5128 = vmatpush1.bf16.msra.mxu0 %v4999
    %5129 = vmatprep.subr.bf16.mxu0 %v5002
    %5130 = vmatpush1.bf16.msra.mxu0 %v5001
    %5131 = vmatprep.subr.bf16.mxu0 %v5004
    %5132 = vmatpush1.bf16.msra.mxu0 %v5003
    %5133 = vmatprep.subr.bf16.mxu0 %v5006
    %5134 = vmatpush1.bf16.msra.mxu0 %v5005
    %5135 = vmatprep.subr.bf16.mxu0 %v5008
    %5136 = vmatpush1.bf16.msra.mxu0 %v5007
    %5137 = vmatprep.subr.bf16.mxu0 %v5010
    %5138 = vmatpush1.bf16.msra.mxu0 %v5009
    %5139 = vmatprep.subr.bf16.mxu0 %v5012
    %5140 = vmatpush1.bf16.msra.mxu0 %v5011
    %5141 = vmatprep.subr.bf16.mxu0 %v5014
    %5142 = vmatpush1.bf16.msra.mxu0 %v5013
    %5143 = vmatprep.subr.bf16.mxu0 %v5016
    %5144 = vmatpush1.bf16.msra.mxu0 %v5015
    %5145 = vmatprep.mubr.bf16.mxu0 %v4714
    %5146 = vmatmul.mubr.bf16.gmra.mrb[0].mxu0 %v4713
    %v5147 = vpop.f32.mrb[0].mxu0
    %v5148 = vadd.f32 %v4786, %v5147
    %v5149 = vpop.f32.mrb[0].mxu0
    %v5150 = vadd.f32 %v4790, %v5149
    %v5151 = vpop.f32.mrb[0].mxu0
    %v5152 = vadd.f32 %v4786, %v5151
    %v5153 = vpop.f32.mrb[0].mxu0
    %v5154 = vadd.f32 %v4790, %v5153
    %5155 = vdwg.mxu0
    %5156 = vmatprep.subr.bf16.mxu0 %v5018
    %5157 = vmatpush1.bf16.msra.mxu0 %v5017
    %5158 = vmatprep.subr.bf16.mxu0 %v5020
    %5159 = vmatpush1.bf16.msra.mxu0 %v5019
    %5160 = vmatprep.subr.bf16.mxu0 %v5022
    %5161 = vmatpush1.bf16.msra.mxu0 %v5021
    %5162 = vmatprep.subr.bf16.mxu0 %v5024
    %5163 = vmatpush1.bf16.msra.mxu0 %v5023
    %5164 = vmatprep.subr.bf16.mxu0 %v5026
    %5165 = vmatpush1.bf16.msra.mxu0 %v5025
    %5166 = vmatprep.subr.bf16.mxu0 %v5028
    %5167 = vmatpush1.bf16.msra.mxu0 %v5027
    %5168 = vmatprep.subr.bf16.mxu0 %v5030
    %5169 = vmatpush1.bf16.msra.mxu0 %v5029
    %5170 = vmatprep.subr.bf16.mxu0 %v5032
    %5171 = vmatpush1.bf16.msra.mxu0 %v5031
    %5172 = vmatprep.subr.bf16.mxu0 %v5034
    %5173 = vmatpush1.bf16.msra.mxu0 %v5033
    %5174 = vmatprep.subr.bf16.mxu0 %v5036
    %5175 = vmatpush1.bf16.msra.mxu0 %v5035
    %5176 = vmatprep.subr.bf16.mxu0 %v5038
    %5177 = vmatpush1.bf16.msra.mxu0 %v5037
    %5178 = vmatprep.subr.bf16.mxu0 %v5040
    %5179 = vmatpush1.bf16.msra.mxu0 %v5039
    %5180 = vmatprep.subr.bf16.mxu0 %v5042
    %5181 = vmatpush1.bf16.msra.mxu0 %v5041
    %5182 = vmatprep.subr.bf16.mxu0 %v5044
    %5183 = vmatpush1.bf16.msra.mxu0 %v5043
    %5184 = vmatprep.subr.bf16.mxu0 %v5046
    %5185 = vmatpush1.bf16.msra.mxu0 %v5045
    %5186 = vmatprep.subr.bf16.mxu0 %v5048
    %5187 = vmatpush1.bf16.msra.mxu0 %v5047
    %5188 = vmatprep.mubr.bf16.mxu0 %v4716
    %5189 = vmatmul.mubr.bf16.gmra.mrb[0].mxu0 %v4715
    %v5190 = vpop.f32.mrb[0].mxu0
    %v5191 = vadd.f32 %v5148, %v5190
    %v5192 = vpop.f32.mrb[0].mxu0
    %v5193 = vadd.f32 %v5150, %v5192
    %v5194 = vpop.f32.mrb[0].mxu0
    %v5195 = vadd.f32 %v5152, %v5194
    %v5196 = vpop.f32.mrb[0].mxu0
    %v5197 = vadd.f32 %v5154, %v5196
    %5198 = vdwg.mxu0
    %v5199 = vxor.u32 %v5191, 2147483648
    %v5200 = vxor.u32 %v5193, 2147483648
    %v5201 = vxor.u32 %v5195, 2147483648
    %v5202 = vxor.u32 %v5197, 2147483648
    %v5203 = vmul.f32 %v5199, 1.442695
    %v5204 = vpow.pop %v5203
    %v5205 = vmul.f32 %v5200, 1.442695
    %v5206 = vpow.pop %v5205
    %v5207 = vmul.f32 %v5201, 1.442695
    %v5208 = vpow.pop %v5207
    %v5209 = vmul.f32 %v5202, 1.442695
    %v5210 = vpow.pop %v5209
    %v5211 = vadd.f32 %v5204, 1.0
    %v5212 = vadd.f32 %v5206, 1.0
    %v5213 = vadd.f32 %v5208, 1.0
    %v5214 = vadd.f32 %v5210, 1.0
    %v5215 = vrcp.pop %v5211
    %v5216 = vmul.f32 1.0, %v5215
    %v5217 = vrcp.pop %v5212
    %v5218 = vmul.f32 1.0, %v5217
    %v5219 = vrcp.pop %v5213
    %v5220 = vmul.f32 1.0, %v5219
    %v5221 = vrcp.pop %v5214
    %v5222 = vmul.f32 1.0, %v5221
    %v5223 = vrot.slane %v5216, 4
    %v5224 = vadd.f32 %v5216, %v5223
    %v5225 = vrot.slane %v5224, 2
    %v5226 = vadd.f32 %v5224, %v5225
    %v5227 = vrot.slane %v5226, 1
    %v5228 = vadd.f32 %v5226, %v5227
    %v5229 = vrot.slane %v5218, 4
    %v5230 = vadd.f32 %v5218, %v5229
    %v5231 = vrot.slane %v5230, 2
    %v5232 = vadd.f32 %v5230, %v5231
    %v5233 = vrot.slane %v5232, 1
    %v5234 = vadd.f32 %v5232, %v5233
    %v5235 = vrot.slane %v5220, 4
    %v5236 = vadd.f32 %v5220, %v5235
    %v5237 = vrot.slane %v5236, 2
    %v5238 = vadd.f32 %v5236, %v5237
    %v5239 = vrot.slane %v5238, 1
    %v5240 = vadd.f32 %v5238, %v5239
    %v5241 = vrot.slane %v5222, 4
    %v5242 = vadd.f32 %v5222, %v5241
    %v5243 = vrot.slane %v5242, 2
    %v5244 = vadd.f32 %v5242, %v5243
    %v5245 = vrot.slane %v5244, 1
    %v5246 = vadd.f32 %v5244, %v5245
    %v5247 = vrcp.pop 8.0
    %v5248 = vmul.f32 %v5228, %v5247
    %v5249 = vmul.f32 %v5234, %v5247
    %v5250 = vmul.f32 %v5240, %v5247
    %v5251 = vmul.f32 %v5246, %v5247
    %v5256 = vcombine.low %v5248, %v5249
    %v5258 = vunpack.c.l.s4 1983009808
    %v5259 = vunpack.c.0.s8 %v5258
    %v5260 = vlaneseq
    %v5261 = vshrl.u32 %v5260, 7
    %v5262 = vsub.s32 %v5259, %v5261
    %v5263 = vrot.slane %v5256, %v5262
    %v5264 = vcombine.low %v5250, %v5251
    %v5266 = vunpack.c.l.s4 1983009808
    %v5267 = vunpack.c.0.s8 %v5266
    %v5268 = vlaneseq
    %v5269 = vshrl.u32 %v5268, 7
    %v5270 = vsub.s32 %v5267, %v5269
    %v5271 = vrot.slane %v5264, %v5270
    %vm5272 = vcmask 1044484
    %v5273 = vsel %vm5272, %v5263, %v5263
    %vm5274 = vcmask 1046534
    %v5275 = vsel %vm5274, %v5263, %v5273
    %v5276 = vrot.slane %v5271, 7
    %vm5277 = vcmask 1041409
    %v5278 = vsel %vm5277, %v5276, %v5275
    %vm5279 = vcmask 1043459
    %v5280 = vsel %vm5279, %v5276, %v5278
    %vm5281 = vcmask 1045509
    %v5282 = vsel %vm5281, %v5276, %v5280
    %vm5283 = vcmask 1047559
    %v5284 = vsel %vm5283, %v5276, %v5282
    %5286 = vst [vmem:[%s24] sm:$0xf] %v5284
    // Predicated region
    $region197: #{forward.1} parent=1 // pred_check
      _
    $region198: #{forward.1} parent=1 // pred_check_branch
      %5288 = sbr.rel (0) target = $region200
    $region199: #{forward.1} parent=1 // pred_region
      _
    $region200: #{forward.1} parent=1 // pred_fallthru
      _
    // Predicated region
    $region201: #{forward.1} parent=1 // pred_check
      _
    $region202: #{forward.1} parent=1 // pred_check_branch
      %5290 = sbr.rel (0) target = $region204
    $region203: #{forward.1} parent=1 // pred_region
      _
    $region204: #{forward.1} parent=1 // pred_fallthru
      _
    %5291 = vsyncpa [#allocation3], 1
    %5292 = vsyncpa [#allocation5], 1
    %5293 = vsyncpa [#allocation8], 1
    %5294 = vsyncpa [#allocation11], 1
    %5295 = vsyncpa [#allocation14], 1
    %5296 = vsyncpa [#allocation17], 1
    %5297 = vsyncpa [#allocation20], 1
    %5298 = vsyncpa [#allocation23], 1
    %5299 = vsyncpa [#allocation26], 1
    %5300 = vsyncpa [#allocation29], 1
    %5301 = vsyncpa [#allocation32], 1
    %5302 = vsyncpa [#allocation35], 1

</llo_original>
